<compile_context>
chip_gen: v7x
topology: tpu7x:2x2x1
jax: 0.10.0
libtpu: 0.0.40
codegen_flags: <defaults>
</compile_context>

<pallas_src>
import jax
import jax.numpy as jnp
from jax.experimental import pallas as pl
from jax.experimental.pallas import tpu as pltpu


# ----------------------------------------------------------------------------
# Pallas kernel
# ----------------------------------------------------------------------------
def _ctfb_kernel(xr_ref, xf_ref, mask_ref, awqkv_ref, awrep_ref, ab_ref,
                 fw_ref, fb_ref, ln_ref, out_ref):
    """One grid step == one batch tile.

    xr_ref, xf_ref : [Bt, S, C]   f32 activation tiles
    mask_ref       : [C, C]       bf16 block-diagonal head mask (1 iff same head)
    awqkv_ref      : [2, C, 3C]   bf16 fused q|k|v weights, [in, out]
    awrep_ref      : [2, C, C]    bf16 reprojection weights, [in, out]
    ab_ref         : [2, 4, C]    f32 attention biases (q, k(unused), v, reproj)
    fw_ref         : [2, C, C]    bf16 FFN weights (w1, w2), [in, out]
    fb_ref         : [2, C]       f32 FFN biases
    ln_ref         : [2, C]       f32 LayerNorm (gamma, beta)
    out_ref        : [Bt, S, C]   f32
    """
    Bt, S, C = out_ref.shape
    BS = Bt * S

    mask_bf = mask_ref[...]                                  # bf16 [C, C]

    def mm(x_f32, w_bf16):
        # bf16 MXU matmul with f32 accumulation.
        return jnp.dot(x_f32.astype(jnp.bfloat16), w_bf16,
                       preferred_element_type=jnp.float32)

    def eff_attn(x3, m):
        # x3: [Bt, S, C] f32, m: modality index (0 = rgb, 1 = flow)
        x2 = x3.reshape(BS, C)                               # fold batch into M

        # Fused q/k/v projection: one [BS, C] x [C, 3C] MXU pass.
        qkv = mm(x2, awqkv_ref[m])                           # [BS, 3C]
        q = qkv[:, :C] + ab_ref[m, 0][None, :]
        k = qkv[:, C:2 * C]          # key bias cancels in the spatial softmax
        v = qkv[:, 2 * C:] + ab_ref[m, 2][None, :]

        # --- key: softmax over spatial positions (per batch element, per channel)
        k3 = k.reshape(Bt, S, C)
        k3 = k3 - jnp.max(k3, axis=1, keepdims=True)
        ek = jnp.exp(k3)
        key = ek * pl.reciprocal(jnp.sum(ek, axis=1, keepdims=True), approx=True)

        # --- query: softmax over the channels of each head.
        # A row-global max shift is valid (it cancels inside each head's
        # softmax); the per-head denominators come from a single bf16 masked
        # segment-sum matmul against the block-diagonal head mask.
        q = q - jnp.max(q, axis=1, keepdims=True)
        eq = jnp.exp(q)                                      # [BS, C] f32
        seg = jnp.dot(eq.astype(jnp.bfloat16), mask_bf,
                      preferred_element_type=jnp.float32)    # per-head sums, broadcast
        query = eq * pl.reciprocal(seg, approx=True)

        # --- context / attended as full-C matmuls masked to the head
        # block-diagonal (replaces 2*n_heads tiny per-head matmuls).
        # NOTE: the 'bsk,bsv->bkv' contraction is over the sublane axis of key;
        # any transpose Mosaic inserts lands in the XLU slot and hides under
        # the MXU work here.
        v3 = v.reshape(Bt, S, C)
        ctx = jnp.einsum('bsk,bsv->bkv',
                         key.astype(jnp.bfloat16), v3.astype(jnp.bfloat16),
                         preferred_element_type=jnp.float32)  # [Bt, C, C]
        ctx_bf = ctx.astype(jnp.bfloat16) * mask_bf[None]     # 0/1 mask, exact in bf16
        q3 = query.reshape(Bt, S, C).astype(jnp.bfloat16)
        att = jnp.einsum('bsk,bkv->bsv', q3, ctx_bf,
                         preferred_element_type=jnp.float32)  # [Bt, S, C]

        rep = mm(att.reshape(BS, C), awrep_ref[m]) + ab_ref[m, 3][None, :]
        return rep + x2                                       # residual in f32

    add_attn = eff_attn(xr_ref[...], 0) + eff_attn(xf_ref[...], 1)  # [BS, C] f32

    # FeedForwardNet: conv1x1 -> ReLU -> conv1x1 -> residual -> LayerNorm(C)
    h = jnp.maximum(mm(add_attn, fw_ref[0]) + fb_ref[0][None, :], 0.0)
    o = mm(h, fw_ref[1]) + fb_ref[1][None, :] + add_attn

    mean = jnp.mean(o, axis=-1, keepdims=True)
    var = jnp.mean((o - mean) ** 2, axis=-1, keepdims=True)
    o = (o - mean) * jax.lax.rsqrt(var + 1e-5) * ln_ref[0][None, :] + ln_ref[1][None, :]

    out_ref[...] = o.reshape(Bt, S, C)


# ----------------------------------------------------------------------------
# Wrappers
# ----------------------------------------------------------------------------
def ctfb_forward_tokens(xr, xf, params, *, n_heads, block_batch=None):
    """Token-major entry point. xr, xf: [N, S, C] f32. Returns [N, S, C] f32."""
    attn_w, attn_b, ffn_w, ffn_b, ln_p = params      # PyTorch-style [out, in] weights
    N, S, C = xr.shape
    assert C % n_heads == 0, (C, n_heads)

    if block_batch is None:
        # Prefer >= 4 grid steps (so each v7x TC gets >= 2 steps and the
        # single-TC v5e/v6e pipeline can hide per-step DMA); within that, take
        # the largest divisor of N so rows-per-step stays large.
        want_steps = min(4, N)
        bt = 1
        for cand in range(N, 0, -1):
            if N % cand == 0 and N // cand >= want_steps:
                bt = cand
                break
        block_batch = bt
    Bt = block_batch
    assert N % Bt == 0, (N, Bt)

    # Pre-transpose weights to [in, out], fuse q/k/v along the output axis and
    # cast to bf16 for the MXU (one-time wrapper cost, no in-kernel .T).
    aw_t = jnp.swapaxes(attn_w, -1, -2)                                   # [2, 4, C, C]
    aw_qkv = jnp.concatenate([aw_t[:, 0], aw_t[:, 1], aw_t[:, 2]],
                             axis=-1).astype(jnp.bfloat16)                # [2, C, 3C]
    aw_rep = aw_t[:, 3].astype(jnp.bfloat16)                              # [2, C, C]
    fw = jnp.swapaxes(ffn_w, -1, -2).astype(jnp.bfloat16)                 # [2, C, C]
    ab = attn_b.astype(jnp.float32)
    fb = ffn_b.astype(jnp.float32)
    ln = ln_p.astype(jnp.float32)

    # Block-diagonal head mask, built once on the host side (bf16 for the MXU).
    dk = C // n_heads
    head_id = jnp.arange(C) // dk
    head_mask = (head_id[:, None] == head_id[None, :]).astype(jnp.bfloat16)  # [C, C]

    # VMEM budget from the actual working set (double-buffered activations +
    # weights + f32 intermediates), clamped to stay well under v7x's 64 MiB.
    act_block_bytes = Bt * S * C * 4
    weight_bytes = (aw_qkv.size + aw_rep.size + fw.size + head_mask.size) * 2 \
        + (ab.size + fb.size + ln.size) * 4
    vmem_limit = int(min(48 << 20, max(16 << 20,
                                       24 * act_block_bytes + 4 * weight_bytes)))

    out = pl.pallas_call(
        _ctfb_kernel,
        out_shape=jax.ShapeDtypeStruct((N, S, C), jnp.float32),
        grid=(N // Bt,),
        in_specs=[
            pl.BlockSpec((Bt, S, C), lambda b: (b, 0, 0)),
            pl.BlockSpec((Bt, S, C), lambda b: (b, 0, 0)),
            pl.BlockSpec((C, C), lambda b: (0, 0)),
            pl.BlockSpec((2, C, 3 * C), lambda b: (0, 0, 0)),
            pl.BlockSpec((2, C, C), lambda b: (0, 0, 0)),
            pl.BlockSpec((2, 4, C), lambda b: (0, 0, 0)),
            pl.BlockSpec((2, C, C), lambda b: (0, 0, 0)),
            pl.BlockSpec((2, C), lambda b: (0, 0)),
            pl.BlockSpec((2, C), lambda b: (0, 0)),
        ],
        out_specs=pl.BlockSpec((Bt, S, C), lambda b: (b, 0, 0)),
        compiler_params=pltpu.CompilerParams(
            dimension_semantics=("parallel",),
            vmem_limit_bytes=vmem_limit),
    )(xr.astype(jnp.float32), xf.astype(jnp.float32), head_mask,
      aw_qkv, aw_rep, ab, fw, fb, ln)
    return out


def ctfb_forward(x_rgb, x_flow, params, *, n_heads, block_batch=None):
    """NCHW entry point matching the PyTorch module.

    NOTE: in production the surrounding network should keep the fusion-block IO
    token-major [N, S, C] (call ctfb_forward_tokens directly) to avoid these two
    extra HBM passes per tensor.
    """
    N, C, H, W = x_rgb.shape
    S = H * W
    xr = jnp.transpose(x_rgb.reshape(N, C, S), (0, 2, 1))
    xf = jnp.transpose(x_flow.reshape(N, C, S), (0, 2, 1))
    out = ctfb_forward_tokens(xr, xf, params, n_heads=n_heads, block_batch=block_batch)
    return jnp.transpose(out, (0, 2, 1)).reshape(N, C, H, W)


# ----------------------------------------------------------------------------
# Pure-JAX reference (per-head formulation, faithful to the PyTorch module,
# same bf16 matmul precision for the projections)
# ----------------------------------------------------------------------------
def _bf16_mm(a, w_t):
    return jnp.dot(a.astype(jnp.bfloat16), w_t.astype(jnp.bfloat16),
                   preferred_element_type=jnp.float32)


def _ref_eff_attn(x, w_q, b_q, w_k, b_k, w_v, b_v, w_r, b_r, n_heads):
    S, C = x.shape
    dk = C // n_heads
    q = _bf16_mm(x, w_q.T) + b_q
    k = _bf16_mm(x, w_k.T) + b_k
    v = _bf16_mm(x, w_v.T) + b_v
    heads = []
    for h in range(n_heads):
        ks, qs, vs = (k[:, h*dk:(h+1)*dk], q[:, h*dk:(h+1)*dk], v[:, h*dk:(h+1)*dk])
        key = jax.nn.softmax(ks, axis=0)       # torch softmax(dim=2): over spatial
        query = jax.nn.softmax(qs, axis=1)     # torch softmax(dim=1): over head channels
        context = _bf16_mm(key.T, vs)          # [dk, dv]
        heads.append(_bf16_mm(query, context)) # [S, dv]
    agg = jnp.concatenate(heads, axis=1)
    return _bf16_mm(agg, w_r.T) + b_r + x


def ctfb_reference(x_rgb, x_flow, params, *, n_heads):
    attn_w, attn_b, ffn_w, ffn_b, ln_p = params
    N, C, H, W = x_rgb.shape
    S = H * W
    xr = jnp.transpose(x_rgb.reshape(N, C, S), (0, 2, 1))
    xf = jnp.transpose(x_flow.reshape(N, C, S), (0, 2, 1))
    outs = []
    for b in range(N):
        r = _ref_eff_attn(xr[b], attn_w[0, 0], attn_b[0, 0], attn_w[0, 1], attn_b[0, 1],
                          attn_w[0, 2], attn_b[0, 2], attn_w[0, 3], attn_b[0, 3], n_heads)
        f = _ref_eff_attn(xf[b], attn_w[1, 0], attn_b[1, 0], attn_w[1, 1], attn_b[1, 1],
                          attn_w[1, 2], attn_b[1, 2], attn_w[1, 3], attn_b[1, 3], n_heads)
        a = r + f
        h = jnp.maximum(_bf16_mm(a, ffn_w[0].T) + ffn_b[0], 0.0)
        o = _bf16_mm(h, ffn_w[1].T) + ffn_b[1] + a
        mean = jnp.mean(o, axis=-1, keepdims=True)
        var = jnp.mean((o - mean) ** 2, axis=-1, keepdims=True)
        o = (o - mean) * jax.lax.rsqrt(var + 1e-5) * ln_p[0] + ln_p[1]
        outs.append(o)
    out = jnp.stack(outs, axis=0)
    return jnp.transpose(out, (0, 2, 1)).reshape(N, C, H, W)


# ----------------------------------------------------------------------------
# Deterministic parameter init + demo
# ----------------------------------------------------------------------------
def init_params(key, channels):
    C = channels
    k1, k2, k3, k4 = jax.random.split(key, 4)
    scale = 1.0 / jnp.sqrt(C)
    attn_w = jax.random.normal(k1, (2, 4, C, C), jnp.float32) * scale   # [out, in]
    attn_b = jax.random.normal(k2, (2, 4, C), jnp.float32) * 0.01
    ffn_w = jax.random.normal(k3, (2, C, C), jnp.float32) * scale       # [out, in]
    ffn_b = jax.random.normal(k4, (2, C), jnp.float32) * 0.01
    ln_p = jnp.stack([jnp.ones((C,), jnp.float32),        # gamma
                      jnp.zeros((C,), jnp.float32)])      # beta
    return attn_w, attn_b, ffn_w, ffn_b, ln_p


if __name__ == "__main__":
    # Lane-dense channel count (C = 128) and S = 16*16 spatial tokens.
    N, C, H, W = 4, 128, 16, 16
    n_heads = 4

    key = jax.random.PRNGKey(0)
    kx, kf, kp = jax.random.split(key, 3)
    x_rgb = jax.random.normal(kx, (N, C, H, W), jnp.float32)
    x_flow = jax.random.normal(kf, (N, C, H, W), jnp.float32)
    params = init_params(kp, C)

    out = jax.block_until_ready(ctfb_forward(x_rgb, x_flow, params, n_heads=n_heads))
    ref = jax.block_until_ready(ctfb_reference(x_rgb, x_flow, params, n_heads=n_heads))

    assert out.shape == (N, C, H, W), out.shape
    err = float(jnp.max(jnp.abs(out - ref)))
    # Tolerance covers the bf16 segment-sum softmax denominators, approx
    # reciprocals and bf16 accumulation-order differences; both paths use bf16
    # MXU matmuls and the output is LayerNorm'd to O(1).
    assert err < 5e-2, err
    print("KERNEL_OK")
</pallas_src>

<mosaic_0001>
module attributes {stable_mosaic.version = 11 : i64} {
  func.func @_ctfb_kernel(%arg0: i32, %arg1: memref<1x256x128xf32, #tpu.memory_space<vmem>>, %arg2: memref<1x256x128xf32, #tpu.memory_space<vmem>>, %arg3: memref<128x128xbf16, #tpu.memory_space<vmem>>, %arg4: memref<2x128x384xbf16, #tpu.memory_space<vmem>>, %arg5: memref<2x128x128xbf16, #tpu.memory_space<vmem>>, %arg6: memref<2x4x128xf32, #tpu.memory_space<vmem>>, %arg7: memref<2x128x128xbf16, #tpu.memory_space<vmem>>, %arg8: memref<2x128xf32, #tpu.memory_space<vmem>>, %arg9: memref<2x128xf32, #tpu.memory_space<vmem>>, %arg10: memref<1x256x128xf32, #tpu.memory_space<vmem>>) attributes {dimension_semantics = [#tpu.dimension_semantics<parallel>], iteration_bounds = array<i64: 4>, scalar_prefetch = 0 : i64, scratch_operands = 0 : i64, tpu.core_type = #tpu.core_type<tc>, window_params = [{transform_indices = @transform_0, window_bounds = array<i64: 1, 256, 128>}, {transform_indices = @transform_1, window_bounds = array<i64: 1, 256, 128>}, {pipeline_mode = #tpu.pipeline_mode<synchronous>, transform_indices = @transform_2, window_bounds = array<i64: 128, 128>}, {pipeline_mode = #tpu.pipeline_mode<synchronous>, transform_indices = @transform_3, window_bounds = array<i64: 2, 128, 384>}, {pipeline_mode = #tpu.pipeline_mode<synchronous>, transform_indices = @transform_4, window_bounds = array<i64: 2, 128, 128>}, {pipeline_mode = #tpu.pipeline_mode<synchronous>, transform_indices = @transform_5, window_bounds = array<i64: 2, 4, 128>}, {pipeline_mode = #tpu.pipeline_mode<synchronous>, transform_indices = @transform_6, window_bounds = array<i64: 2, 128, 128>}, {pipeline_mode = #tpu.pipeline_mode<synchronous>, transform_indices = @transform_7, window_bounds = array<i64: 2, 128>}, {pipeline_mode = #tpu.pipeline_mode<synchronous>, transform_indices = @transform_8, window_bounds = array<i64: 2, 128>}, {transform_indices = @transform_9, window_bounds = array<i64: 1, 256, 128>}]} {
    %c0 = arith.constant 0 : index
    %c0_0 = arith.constant 0 : index
    %0 = vector.load %arg3[%c0, %c0_0] : memref<128x128xbf16, #tpu.memory_space<vmem>>, vector<128x128xbf16>
    %c0_1 = arith.constant 0 : index
    %c0_2 = arith.constant 0 : index
    %c0_3 = arith.constant 0 : index
    %1 = vector.load %arg1[%c0_1, %c0_2, %c0_3] : memref<1x256x128xf32, #tpu.memory_space<vmem>>, vector<1x256x128xf32>
    %2 = vector.shape_cast %1 : vector<1x256x128xf32> to vector<256x128xf32>
    %c0_4 = arith.constant 0 : index
    %c0_5 = arith.constant 0 : index
    %c0_6 = arith.constant 0 : index
    %3 = vector.load %arg4[%c0_4, %c0_5, %c0_6] : memref<2x128x384xbf16, #tpu.memory_space<vmem>>, vector<1x128x384xbf16>
    %4 = vector.shape_cast %3 : vector<1x128x384xbf16> to vector<128x384xbf16>
    %5 = arith.truncf %2 : vector<256x128xf32> to vector<256x128xbf16>
    %cst = arith.constant dense<0.000000e+00> : vector<256x384xf32>
    %6 = tpu.matmul %5, %4, %cst {dimension_numbers = #tpu.dot_dimension_numbers<[1], [0], [0], [1], [0, 0, 1, 1], [], []>} : vector<256x128xbf16>, vector<128x384xbf16>, vector<256x384xf32> -> vector<256x384xf32>
    %7 = vector.extract_strided_slice %6 {offsets = [0, 0], sizes = [256, 128], strides = [1, 1]} : vector<256x384xf32> to vector<256x128xf32>
    %c0_7 = arith.constant 0 : index
    %c0_8 = arith.constant 0 : index
    %c0_9 = arith.constant 0 : index
    %8 = vector.load %arg6[%c0_7, %c0_8, %c0_9] : memref<2x4x128xf32, #tpu.memory_space<vmem>>, vector<1x1x128xf32>
    %9 = vector.shape_cast %8 : vector<1x1x128xf32> to vector<128xf32>
    %10 = vector.shape_cast %9 : vector<128xf32> to vector<1x128xf32>
    %11 = vector.broadcast %10 : vector<1x128xf32> to vector<256x128xf32>
    %12 = arith.addf %7, %11 : vector<256x128xf32>
    %13 = vector.extract_strided_slice %6 {offsets = [0, 128], sizes = [256, 128], strides = [1, 1]} : vector<256x384xf32> to vector<256x128xf32>
    %14 = vector.extract_strided_slice %6 {offsets = [0, 256], sizes = [256, 128], strides = [1, 1]} : vector<256x384xf32> to vector<256x128xf32>
    %c0_10 = arith.constant 0 : index
    %c2 = arith.constant 2 : index
    %c0_11 = arith.constant 0 : index
    %15 = vector.load %arg6[%c0_10, %c2, %c0_11] : memref<2x4x128xf32, #tpu.memory_space<vmem>>, vector<1x1x128xf32>
    %16 = vector.shape_cast %15 : vector<1x1x128xf32> to vector<128xf32>
    %17 = vector.shape_cast %16 : vector<128xf32> to vector<1x128xf32>
    %18 = vector.broadcast %17 : vector<1x128xf32> to vector<256x128xf32>
    %19 = arith.addf %14, %18 : vector<256x128xf32>
    %20 = vector.shape_cast %13 : vector<256x128xf32> to vector<1x256x128xf32>
    %cst_12 = arith.constant dense<0xFF800000> : vector<1x128xf32>
    %21 = vector.multi_reduction <maximumf>, %20, %cst_12 [1] : vector<1x256x128xf32> to vector<1x128xf32>
    %22 = vector.shape_cast %21 : vector<1x128xf32> to vector<1x1x128xf32>
    %23 = vector.broadcast %22 : vector<1x1x128xf32> to vector<1x256x128xf32>
    %24 = arith.subf %20, %23 : vector<1x256x128xf32>
    %25 = math.exp %24 : vector<1x256x128xf32>
    %cst_13 = arith.constant dense<0.000000e+00> : vector<1x128xf32>
    %26 = vector.multi_reduction <add>, %25, %cst_13 [1] : vector<1x256x128xf32> to vector<1x128xf32>
    %27 = vector.shape_cast %26 : vector<1x128xf32> to vector<1x1x128xf32>
    %28 = tpu.reciprocal %27 {approx = true} : vector<1x1x128xf32> -> vector<1x1x128xf32>
    %29 = vector.broadcast %28 : vector<1x1x128xf32> to vector<1x256x128xf32>
    %30 = arith.mulf %25, %29 : vector<1x256x128xf32>
    %cst_14 = arith.constant dense<0xFF800000> : vector<256xf32>
    %31 = vector.multi_reduction <maximumf>, %12, %cst_14 [1] : vector<256x128xf32> to vector<256xf32>
    %32 = vector.shape_cast %31 : vector<256xf32> to vector<256x1xf32>
    %33 = vector.broadcast %32 : vector<256x1xf32> to vector<256x128xf32>
    %34 = arith.subf %12, %33 : vector<256x128xf32>
    %35 = math.exp %34 : vector<256x128xf32>
    %36 = arith.truncf %35 : vector<256x128xf32> to vector<256x128xbf16>
    %cst_15 = arith.constant dense<0.000000e+00> : vector<256x128xf32>
    %37 = tpu.matmul %36, %0, %cst_15 {dimension_numbers = #tpu.dot_dimension_numbers<[1], [0], [0], [1], [0, 0, 1, 1], [], []>} : vector<256x128xbf16>, vector<128x128xbf16>, vector<256x128xf32> -> vector<256x128xf32>
    %38 = tpu.reciprocal %37 {approx = true} : vector<256x128xf32> -> vector<256x128xf32>
    %39 = arith.mulf %35, %38 : vector<256x128xf32>
    %40 = vector.shape_cast %19 : vector<256x128xf32> to vector<1x256x128xf32>
    %41 = arith.truncf %30 : vector<1x256x128xf32> to vector<1x256x128xbf16>
    %42 = arith.truncf %40 : vector<1x256x128xf32> to vector<1x256x128xbf16>
    "tpu.trace_start"() <{level = 10 : i32, message = "bsk,bsv->bkv"}> : () -> ()
    %cst_16 = arith.constant dense<0.000000e+00> : vector<1x128x128xf32>
    %43 = tpu.matmul %41, %42, %cst_16 {dimension_numbers = #tpu.dot_dimension_numbers<[1], [1], [2], [2], [0, 0, 0, 2, 1, 2], [0], [0]>} : vector<1x256x128xbf16>, vector<1x256x128xbf16>, vector<1x128x128xf32> -> vector<1x128x128xf32>
    "tpu.trace_stop"() : () -> ()
    %44 = arith.truncf %43 : vector<1x128x128xf32> to vector<1x128x128xbf16>
    %45 = vector.shape_cast %0 : vector<128x128xbf16> to vector<1x128x128xbf16>
    %46 = arith.mulf %44, %45 : vector<1x128x128xbf16>
    %47 = vector.shape_cast %39 : vector<256x128xf32> to vector<1x256x128xf32>
    %48 = arith.truncf %47 : vector<1x256x128xf32> to vector<1x256x128xbf16>
    "tpu.trace_start"() <{level = 10 : i32, message = "bsk,bkv->bsv"}> : () -> ()
    %cst_17 = arith.constant dense<0.000000e+00> : vector<1x256x128xf32>
    %49 = tpu.matmul %48, %46, %cst_17 {dimension_numbers = #tpu.dot_dimension_numbers<[2], [1], [1], [2], [0, 0, 0, 1, 1, 2], [0], [0]>} : vector<1x256x128xbf16>, vector<1x128x128xbf16>, vector<1x256x128xf32> -> vector<1x256x128xf32>
    "tpu.trace_stop"() : () -> ()
    %50 = vector.shape_cast %49 : vector<1x256x128xf32> to vector<256x128xf32>
    %c0_18 = arith.constant 0 : index
    %c0_19 = arith.constant 0 : index
    %c0_20 = arith.constant 0 : index
    %51 = vector.load %arg5[%c0_18, %c0_19, %c0_20] : memref<2x128x128xbf16, #tpu.memory_space<vmem>>, vector<1x128x128xbf16>
    %52 = vector.shape_cast %51 : vector<1x128x128xbf16> to vector<128x128xbf16>
    %53 = arith.truncf %50 : vector<256x128xf32> to vector<256x128xbf16>
    %cst_21 = arith.constant dense<0.000000e+00> : vector<256x128xf32>
    %54 = tpu.matmul %53, %52, %cst_21 {dimension_numbers = #tpu.dot_dimension_numbers<[1], [0], [0], [1], [0, 0, 1, 1], [], []>} : vector<256x128xbf16>, vector<128x128xbf16>, vector<256x128xf32> -> vector<256x128xf32>
    %c0_22 = arith.constant 0 : index
    %c3 = arith.constant 3 : index
    %c0_23 = arith.constant 0 : index
    %55 = vector.load %arg6[%c0_22, %c3, %c0_23] : memref<2x4x128xf32, #tpu.memory_space<vmem>>, vector<1x1x128xf32>
    %56 = vector.shape_cast %55 : vector<1x1x128xf32> to vector<128xf32>
    %57 = vector.shape_cast %56 : vector<128xf32> to vector<1x128xf32>
    %58 = vector.broadcast %57 : vector<1x128xf32> to vector<256x128xf32>
    %59 = arith.addf %54, %58 : vector<256x128xf32>
    %60 = arith.addf %59, %2 : vector<256x128xf32>
    %c0_24 = arith.constant 0 : index
    %c0_25 = arith.constant 0 : index
    %c0_26 = arith.constant 0 : index
    %61 = vector.load %arg2[%c0_24, %c0_25, %c0_26] : memref<1x256x128xf32, #tpu.memory_space<vmem>>, vector<1x256x128xf32>
    %62 = vector.shape_cast %61 : vector<1x256x128xf32> to vector<256x128xf32>
    %c1 = arith.constant 1 : index
    %c0_27 = arith.constant 0 : index
    %c0_28 = arith.constant 0 : index
    %63 = vector.load %arg4[%c1, %c0_27, %c0_28] : memref<2x128x384xbf16, #tpu.memory_space<vmem>>, vector<1x128x384xbf16>
    %64 = vector.shape_cast %63 : vector<1x128x384xbf16> to vector<128x384xbf16>
    %65 = arith.truncf %62 : vector<256x128xf32> to vector<256x128xbf16>
    %cst_29 = arith.constant dense<0.000000e+00> : vector<256x384xf32>
    %66 = tpu.matmul %65, %64, %cst_29 {dimension_numbers = #tpu.dot_dimension_numbers<[1], [0], [0], [1], [0, 0, 1, 1], [], []>} : vector<256x128xbf16>, vector<128x384xbf16>, vector<256x384xf32> -> vector<256x384xf32>
    %67 = vector.extract_strided_slice %66 {offsets = [0, 0], sizes = [256, 128], strides = [1, 1]} : vector<256x384xf32> to vector<256x128xf32>
    %c1_30 = arith.constant 1 : index
    %c0_31 = arith.constant 0 : index
    %c0_32 = arith.constant 0 : index
    %68 = vector.load %arg6[%c1_30, %c0_31, %c0_32] : memref<2x4x128xf32, #tpu.memory_space<vmem>>, vector<1x1x128xf32>
    %69 = vector.shape_cast %68 : vector<1x1x128xf32> to vector<128xf32>
    %70 = vector.shape_cast %69 : vector<128xf32> to vector<1x128xf32>
    %71 = vector.broadcast %70 : vector<1x128xf32> to vector<256x128xf32>
    %72 = arith.addf %67, %71 : vector<256x128xf32>
    %73 = vector.extract_strided_slice %66 {offsets = [0, 128], sizes = [256, 128], strides = [1, 1]} : vector<256x384xf32> to vector<256x128xf32>
    %74 = vector.extract_strided_slice %66 {offsets = [0, 256], sizes = [256, 128], strides = [1, 1]} : vector<256x384xf32> to vector<256x128xf32>
    %c1_33 = arith.constant 1 : index
    %c2_34 = arith.constant 2 : index
    %c0_35 = arith.constant 0 : index
    %75 = vector.load %arg6[%c1_33, %c2_34, %c0_35] : memref<2x4x128xf32, #tpu.memory_space<vmem>>, vector<1x1x128xf32>
    %76 = vector.shape_cast %75 : vector<1x1x128xf32> to vector<128xf32>
    %77 = vector.shape_cast %76 : vector<128xf32> to vector<1x128xf32>
    %78 = vector.broadcast %77 : vector<1x128xf32> to vector<256x128xf32>
    %79 = arith.addf %74, %78 : vector<256x128xf32>
    %80 = vector.shape_cast %73 : vector<256x128xf32> to vector<1x256x128xf32>
    %cst_36 = arith.constant dense<0xFF800000> : vector<1x128xf32>
    %81 = vector.multi_reduction <maximumf>, %80, %cst_36 [1] : vector<1x256x128xf32> to vector<1x128xf32>
    %82 = vector.shape_cast %81 : vector<1x128xf32> to vector<1x1x128xf32>
    %83 = vector.broadcast %82 : vector<1x1x128xf32> to vector<1x256x128xf32>
    %84 = arith.subf %80, %83 : vector<1x256x128xf32>
    %85 = math.exp %84 : vector<1x256x128xf32>
    %cst_37 = arith.constant dense<0.000000e+00> : vector<1x128xf32>
    %86 = vector.multi_reduction <add>, %85, %cst_37 [1] : vector<1x256x128xf32> to vector<1x128xf32>
    %87 = vector.shape_cast %86 : vector<1x128xf32> to vector<1x1x128xf32>
    %88 = tpu.reciprocal %87 {approx = true} : vector<1x1x128xf32> -> vector<1x1x128xf32>
    %89 = vector.broadcast %88 : vector<1x1x128xf32> to vector<1x256x128xf32>
    %90 = arith.mulf %85, %89 : vector<1x256x128xf32>
    %cst_38 = arith.constant dense<0xFF800000> : vector<256xf32>
    %91 = vector.multi_reduction <maximumf>, %72, %cst_38 [1] : vector<256x128xf32> to vector<256xf32>
    %92 = vector.shape_cast %91 : vector<256xf32> to vector<256x1xf32>
    %93 = vector.broadcast %92 : vector<256x1xf32> to vector<256x128xf32>
    %94 = arith.subf %72, %93 : vector<256x128xf32>
    %95 = math.exp %94 : vector<256x128xf32>
    %96 = arith.truncf %95 : vector<256x128xf32> to vector<256x128xbf16>
    %cst_39 = arith.constant dense<0.000000e+00> : vector<256x128xf32>
    %97 = tpu.matmul %96, %0, %cst_39 {dimension_numbers = #tpu.dot_dimension_numbers<[1], [0], [0], [1], [0, 0, 1, 1], [], []>} : vector<256x128xbf16>, vector<128x128xbf16>, vector<256x128xf32> -> vector<256x128xf32>
    %98 = tpu.reciprocal %97 {approx = true} : vector<256x128xf32> -> vector<256x128xf32>
    %99 = arith.mulf %95, %98 : vector<256x128xf32>
    %100 = vector.shape_cast %79 : vector<256x128xf32> to vector<1x256x128xf32>
    %101 = arith.truncf %90 : vector<1x256x128xf32> to vector<1x256x128xbf16>
    %102 = arith.truncf %100 : vector<1x256x128xf32> to vector<1x256x128xbf16>
    "tpu.trace_start"() <{level = 10 : i32, message = "bsk,bsv->bkv"}> : () -> ()
    %cst_40 = arith.constant dense<0.000000e+00> : vector<1x128x128xf32>
    %103 = tpu.matmul %101, %102, %cst_40 {dimension_numbers = #tpu.dot_dimension_numbers<[1], [1], [2], [2], [0, 0, 0, 2, 1, 2], [0], [0]>} : vector<1x256x128xbf16>, vector<1x256x128xbf16>, vector<1x128x128xf32> -> vector<1x128x128xf32>
    "tpu.trace_stop"() : () -> ()
    %104 = arith.truncf %103 : vector<1x128x128xf32> to vector<1x128x128xbf16>
    %105 = vector.shape_cast %0 : vector<128x128xbf16> to vector<1x128x128xbf16>
    %106 = arith.mulf %104, %105 : vector<1x128x128xbf16>
    %107 = vector.shape_cast %99 : vector<256x128xf32> to vector<1x256x128xf32>
    %108 = arith.truncf %107 : vector<1x256x128xf32> to vector<1x256x128xbf16>
    "tpu.trace_start"() <{level = 10 : i32, message = "bsk,bkv->bsv"}> : () -> ()
    %cst_41 = arith.constant dense<0.000000e+00> : vector<1x256x128xf32>
    %109 = tpu.matmul %108, %106, %cst_41 {dimension_numbers = #tpu.dot_dimension_numbers<[2], [1], [1], [2], [0, 0, 0, 1, 1, 2], [0], [0]>} : vector<1x256x128xbf16>, vector<1x128x128xbf16>, vector<1x256x128xf32> -> vector<1x256x128xf32>
    "tpu.trace_stop"() : () -> ()
    %110 = vector.shape_cast %109 : vector<1x256x128xf32> to vector<256x128xf32>
    %c1_42 = arith.constant 1 : index
    %c0_43 = arith.constant 0 : index
    %c0_44 = arith.constant 0 : index
    %111 = vector.load %arg5[%c1_42, %c0_43, %c0_44] : memref<2x128x128xbf16, #tpu.memory_space<vmem>>, vector<1x128x128xbf16>
    %112 = vector.shape_cast %111 : vector<1x128x128xbf16> to vector<128x128xbf16>
    %113 = arith.truncf %110 : vector<256x128xf32> to vector<256x128xbf16>
    %cst_45 = arith.constant dense<0.000000e+00> : vector<256x128xf32>
    %114 = tpu.matmul %113, %112, %cst_45 {dimension_numbers = #tpu.dot_dimension_numbers<[1], [0], [0], [1], [0, 0, 1, 1], [], []>} : vector<256x128xbf16>, vector<128x128xbf16>, vector<256x128xf32> -> vector<256x128xf32>
    %c1_46 = arith.constant 1 : index
    %c3_47 = arith.constant 3 : index
    %c0_48 = arith.constant 0 : index
    %115 = vector.load %arg6[%c1_46, %c3_47, %c0_48] : memref<2x4x128xf32, #tpu.memory_space<vmem>>, vector<1x1x128xf32>
    %116 = vector.shape_cast %115 : vector<1x1x128xf32> to vector<128xf32>
    %117 = vector.shape_cast %116 : vector<128xf32> to vector<1x128xf32>
    %118 = vector.broadcast %117 : vector<1x128xf32> to vector<256x128xf32>
    %119 = arith.addf %114, %118 : vector<256x128xf32>
    %120 = arith.addf %119, %62 : vector<256x128xf32>
    %121 = arith.addf %60, %120 : vector<256x128xf32>
    %c0_49 = arith.constant 0 : index
    %c0_50 = arith.constant 0 : index
    %c0_51 = arith.constant 0 : index
    %122 = vector.load %arg7[%c0_49, %c0_50, %c0_51] : memref<2x128x128xbf16, #tpu.memory_space<vmem>>, vector<1x128x128xbf16>
    %123 = vector.shape_cast %122 : vector<1x128x128xbf16> to vector<128x128xbf16>
    %124 = arith.truncf %121 : vector<256x128xf32> to vector<256x128xbf16>
    %cst_52 = arith.constant dense<0.000000e+00> : vector<256x128xf32>
    %125 = tpu.matmul %124, %123, %cst_52 {dimension_numbers = #tpu.dot_dimension_numbers<[1], [0], [0], [1], [0, 0, 1, 1], [], []>} : vector<256x128xbf16>, vector<128x128xbf16>, vector<256x128xf32> -> vector<256x128xf32>
    %c0_53 = arith.constant 0 : index
    %c0_54 = arith.constant 0 : index
    %126 = vector.load %arg8[%c0_53, %c0_54] : memref<2x128xf32, #tpu.memory_space<vmem>>, vector<1x128xf32>
    %127 = vector.shape_cast %126 : vector<1x128xf32> to vector<128xf32>
    %128 = vector.shape_cast %127 : vector<128xf32> to vector<1x128xf32>
    %129 = vector.broadcast %128 : vector<1x128xf32> to vector<256x128xf32>
    %130 = arith.addf %125, %129 : vector<256x128xf32>
    %cst_55 = arith.constant 0.000000e+00 : f32
    %131 = vector.broadcast %cst_55 : f32 to vector<256x128xf32>
    %132 = arith.maximumf %130, %131 : vector<256x128xf32>
    %c1_56 = arith.constant 1 : index
    %c0_57 = arith.constant 0 : index
    %c0_58 = arith.constant 0 : index
    %133 = vector.load %arg7[%c1_56, %c0_57, %c0_58] : memref<2x128x128xbf16, #tpu.memory_space<vmem>>, vector<1x128x128xbf16>
    %134 = vector.shape_cast %133 : vector<1x128x128xbf16> to vector<128x128xbf16>
    %135 = arith.truncf %132 : vector<256x128xf32> to vector<256x128xbf16>
    %cst_59 = arith.constant dense<0.000000e+00> : vector<256x128xf32>
    %136 = tpu.matmul %135, %134, %cst_59 {dimension_numbers = #tpu.dot_dimension_numbers<[1], [0], [0], [1], [0, 0, 1, 1], [], []>} : vector<256x128xbf16>, vector<128x128xbf16>, vector<256x128xf32> -> vector<256x128xf32>
    %c1_60 = arith.constant 1 : index
    %c0_61 = arith.constant 0 : index
    %137 = vector.load %arg8[%c1_60, %c0_61] : memref<2x128xf32, #tpu.memory_space<vmem>>, vector<1x128xf32>
    %138 = vector.shape_cast %137 : vector<1x128xf32> to vector<128xf32>
    %139 = vector.shape_cast %138 : vector<128xf32> to vector<1x128xf32>
    %140 = vector.broadcast %139 : vector<1x128xf32> to vector<256x128xf32>
    %141 = arith.addf %136, %140 : vector<256x128xf32>
    %142 = arith.addf %141, %121 : vector<256x128xf32>
    %cst_62 = arith.constant dense<0.000000e+00> : vector<256xf32>
    %143 = vector.multi_reduction <add>, %142, %cst_62 [1] : vector<256x128xf32> to vector<256xf32>
    %144 = vector.shape_cast %143 : vector<256xf32> to vector<256x1xf32>
    %cst_63 = arith.constant 1.280000e+02 : f32
    %145 = vector.broadcast %cst_63 : f32 to vector<256x1xf32>
    %146 = arith.divf %144, %145 : vector<256x1xf32>
    %147 = vector.broadcast %146 : vector<256x1xf32> to vector<256x128xf32>
    %148 = arith.subf %142, %147 : vector<256x128xf32>
    %149 = arith.mulf %148, %148 : vector<256x128xf32>
    %cst_64 = arith.constant dense<0.000000e+00> : vector<256xf32>
    %150 = vector.multi_reduction <add>, %149, %cst_64 [1] : vector<256x128xf32> to vector<256xf32>
    %151 = vector.shape_cast %150 : vector<256xf32> to vector<256x1xf32>
    %cst_65 = arith.constant 1.280000e+02 : f32
    %152 = vector.broadcast %cst_65 : f32 to vector<256x1xf32>
    %153 = arith.divf %151, %152 : vector<256x1xf32>
    %154 = vector.broadcast %146 : vector<256x1xf32> to vector<256x128xf32>
    %155 = arith.subf %142, %154 : vector<256x128xf32>
    %cst_66 = arith.constant 9.99999974E-6 : f32
    %156 = vector.broadcast %cst_66 : f32 to vector<256x1xf32>
    %157 = arith.addf %153, %156 : vector<256x1xf32>
    %158 = math.rsqrt %157 : vector<256x1xf32>
    %159 = vector.broadcast %158 : vector<256x1xf32> to vector<256x128xf32>
    %160 = arith.mulf %155, %159 : vector<256x128xf32>
    %c0_67 = arith.constant 0 : index
    %c0_68 = arith.constant 0 : index
    %161 = vector.load %arg9[%c0_67, %c0_68] : memref<2x128xf32, #tpu.memory_space<vmem>>, vector<1x128xf32>
    %162 = vector.shape_cast %161 : vector<1x128xf32> to vector<128xf32>
    %163 = vector.shape_cast %162 : vector<128xf32> to vector<1x128xf32>
    %164 = vector.broadcast %163 : vector<1x128xf32> to vector<256x128xf32>
    %165 = arith.mulf %160, %164 : vector<256x128xf32>
    %c1_69 = arith.constant 1 : index
    %c0_70 = arith.constant 0 : index
    %166 = vector.load %arg9[%c1_69, %c0_70] : memref<2x128xf32, #tpu.memory_space<vmem>>, vector<1x128xf32>
    %167 = vector.shape_cast %166 : vector<1x128xf32> to vector<128xf32>
    %168 = vector.shape_cast %167 : vector<128xf32> to vector<1x128xf32>
    %169 = vector.broadcast %168 : vector<1x128xf32> to vector<256x128xf32>
    %170 = arith.addf %165, %169 : vector<256x128xf32>
    %171 = vector.shape_cast %170 : vector<256x128xf32> to vector<1x256x128xf32>
    %c0_71 = arith.constant 0 : index
    %c0_72 = arith.constant 0 : index
    %c0_73 = arith.constant 0 : index
    %172 = vector.load %arg10[%c0_71, %c0_72, %c0_73] : memref<1x256x128xf32, #tpu.memory_space<vmem>>, vector<1x256x128xf32>
    tpu.vector_store %arg10[%c0_71, %c0_72, %c0_73], %171 {strides = array<i32>} : memref<1x256x128xf32, #tpu.memory_space<vmem>>, vector<1x256x128xf32>,
    return
  }
  func.func @transform_0(%arg0: i32) -> (i32, i32, i32) {
    %c0_i32 = arith.constant 0 : i32
    %c0_i32_0 = arith.constant 0 : i32
    %c0_i32_1 = arith.constant 0 : i32
    return %arg0, %c0_i32, %c0_i32_0 : i32, i32, i32
  }
  func.func @transform_1(%arg0: i32) -> (i32, i32, i32) {
    %c0_i32 = arith.constant 0 : i32
    %c0_i32_0 = arith.constant 0 : i32
    %c0_i32_1 = arith.constant 0 : i32
    return %arg0, %c0_i32, %c0_i32_0 : i32, i32, i32
  }
  func.func @transform_2(%arg0: i32) -> (i32, i32) {
    %c0_i32 = arith.constant 0 : i32
    %c0_i32_0 = arith.constant 0 : i32
    %c0_i32_1 = arith.constant 0 : i32
    return %c0_i32, %c0_i32_0 : i32, i32
  }
  func.func @transform_3(%arg0: i32) -> (i32, i32, i32) {
    %c0_i32 = arith.constant 0 : i32
    %c0_i32_0 = arith.constant 0 : i32
    %c0_i32_1 = arith.constant 0 : i32
    %c0_i32_2 = arith.constant 0 : i32
    return %c0_i32, %c0_i32_0, %c0_i32_1 : i32, i32, i32
  }
  func.func @transform_4(%arg0: i32) -> (i32, i32, i32) {
    %c0_i32 = arith.constant 0 : i32
    %c0_i32_0 = arith.constant 0 : i32
    %c0_i32_1 = arith.constant 0 : i32
    %c0_i32_2 = arith.constant 0 : i32
    return %c0_i32, %c0_i32_0, %c0_i32_1 : i32, i32, i32
  }
  func.func @transform_5(%arg0: i32) -> (i32, i32, i32) {
    %c0_i32 = arith.constant 0 : i32
    %c0_i32_0 = arith.constant 0 : i32
    %c0_i32_1 = arith.constant 0 : i32
    %c0_i32_2 = arith.constant 0 : i32
    return %c0_i32, %c0_i32_0, %c0_i32_1 : i32, i32, i32
  }
  func.func @transform_6(%arg0: i32) -> (i32, i32, i32) {
    %c0_i32 = arith.constant 0 : i32
    %c0_i32_0 = arith.constant 0 : i32
    %c0_i32_1 = arith.constant 0 : i32
    %c0_i32_2 = arith.constant 0 : i32
    return %c0_i32, %c0_i32_0, %c0_i32_1 : i32, i32, i32
  }
  func.func @transform_7(%arg0: i32) -> (i32, i32) {
    %c0_i32 = arith.constant 0 : i32
    %c0_i32_0 = arith.constant 0 : i32
    %c0_i32_1 = arith.constant 0 : i32
    return %c0_i32, %c0_i32_0 : i32, i32
  }
  func.func @transform_8(%arg0: i32) -> (i32, i32) {
    %c0_i32 = arith.constant 0 : i32
    %c0_i32_0 = arith.constant 0 : i32
    %c0_i32_1 = arith.constant 0 : i32
    return %c0_i32, %c0_i32_0 : i32, i32
  }
  func.func @transform_9(%arg0: i32) -> (i32, i32, i32) {
    %c0_i32 = arith.constant 0 : i32
    %c0_i32_0 = arith.constant 0 : i32
    %c0_i32_1 = arith.constant 0 : i32
    return %arg0, %c0_i32, %c0_i32_0 : i32, i32, i32
  }
}

</mosaic_0001>

<llo_original>
// kernel: tpu_custom_call.1
$region0: #{tpu_custom_call.1}
  #allocation0 [shape = 'u32[]', space=smem, size = 0x4, offset = 0x4, fixed_abs, tag = 'smem constant byte address 0x4 - core index']
  #allocation1 [shape = 'u32[144,128]{1,0:T(1,128)}', space=vmem, size = 0x12000, scoped, tag = 'internal scratch']
  %s0 = inlined_call_operand.hbm [shape: f32[4,256,128], index: 0, kind: input, shape index: {}]
  %s1 = inlined_call_operand.hbm [shape: f32[4,256,128], index: 1, kind: input, shape index: {}]
  %s2 = inlined_call_operand.hbm [shape: bf16[128,128], index: 2, kind: input, shape index: {}]
  %s3 = inlined_call_operand.hbm [shape: bf16[2,128,384], index: 3, kind: input, shape index: {}]
  %s4 = inlined_call_operand.hbm [shape: bf16[2,128,128], index: 4, kind: input, shape index: {}]
  %s5 = inlined_call_operand.vmem [shape: f32[2,4,128], index: 5, kind: input, shape index: {}]
  %s6 = inlined_call_operand.hbm [shape: bf16[2,128,128], index: 6, kind: input, shape index: {}]
  %s7 = inlined_call_operand.vmem [shape: f32[2,128], index: 7, kind: input, shape index: {}]
  %s8 = inlined_call_operand.vmem [shape: f32[2,128], index: 8, kind: input, shape index: {}]
  %s9 = inlined_call_operand.hbm [shape: f32[4,256,128], index: 9, kind: output, shape index: {}]
  %s10 = sld [smem:[#allocation0]]
  $region93: #{tpu_custom_call.1} parent=0
    _
  %s12 = ssub.s32 1, %s10
  %s13 = scalar_select 0, %s12, %s10
  $region1: #{tpu_custom_call.1} parent=0
    #allocation2 [shape = 'u8[262144]{0}', space=vmem, size = 0x40000, scoped, tag = 'input window, operand 0']
    #allocation3 [shape = 's32[2]{0}', space=sflag, size = 0x8, scoped, tag = 'scoped memory for tpu_custom_call.1']
    #allocation4 [shape = 's32[2]{0}', space=sflag, size = 0x8, scoped, tag = 'scoped memory for tpu_custom_call.1']
    #allocation5 [shape = 'u8[262144]{0}', space=vmem, size = 0x40000, scoped, tag = 'input window, operand 1']
    #allocation6 [shape = 's32[2]{0}', space=sflag, size = 0x8, scoped, tag = 'scoped memory for tpu_custom_call.1']
    #allocation7 [shape = 'u8[32768]{0}', space=vmem, size = 0x8000, scoped, tag = 'input window, operand 2, single buffered']
    #allocation8 [shape = 'u8[196608]{0}', space=vmem, size = 0x30000, scoped, tag = 'input window, operand 3, single buffered']
    #allocation9 [shape = 's32[1]{0}', space=sflag, size = 0x4, scoped, tag = 'scoped memory for tpu_custom_call.1']
    #allocation10 [shape = 'u8[65536]{0}', space=vmem, size = 0x10000, scoped, tag = 'input window, operand 4, single buffered']
    #allocation11 [shape = 'u8[65536]{0}', space=vmem, size = 0x10000, scoped, tag = 'input window, operand 6, single buffered']
    #allocation12 [shape = 's32[1]{0}', space=sflag, size = 0x4, scoped, tag = 'scoped memory for tpu_custom_call.1']
    #allocation13 [shape = 'u8[262144]{0}', space=vmem, size = 0x40000, scoped, tag = 'output window, operand 0']
    %14 = vsyncpa [#allocation3], 0
    %s15 = scalar_lea.sflag [#allocation3], 1
    %16 = vsyncpa %s15, 0
    %17 = vsyncpa [#allocation6], 0
    %s18 = scalar_lea.sflag [#allocation6], 1
    %19 = vsyncpa %s18, 0
    %20 = vsyncpa [#allocation9], 0
    %21 = vsyncpa [#allocation12], 0
    %22 = vsyncpa [#allocation4], 0
    %s23 = scalar_lea.sflag [#allocation4], 1
    %24 = vsyncpa %s23, 0
    loop: start=0, step=1, limit=6
    $region2: #{tpu_custom_call.1} parent=1 // loop_pre_header
      _
    $region3: #{tpu_custom_call.1} parent=1 // loop_header
      %s26 = sphi 0, %s30
      %p27 = scmp.ge.s32.totalorder %s26, 6
      %s36 = sphi 0, %s38
      %s39 = sphi 0, %s36
      %s40 = sphi 0, %s39
      %s56 = sphi 0, %s40
      %s62 = sphi 0, %s64
      %s65 = sphi 0, %s62
      %s66 = sphi 0, %s65
      %s82 = sphi 0, %s66
      %s86 = sphi 0, %s86
      %s88 = sphi 0, %s86
      %s89 = sphi 0, %s88
      %s103 = sphi 0, %s89
      %s107 = sphi 0, %s107
      %s109 = sphi 0, %s107
      %s110 = sphi 0, %s109
      %s124 = sphi 0, %s110
      %s128 = sphi 0, %s128
      %s130 = sphi 0, %s128
      %s131 = sphi 0, %s130
      %s145 = sphi 0, %s131
      %s149 = sphi 0, %s149
      %s151 = sphi 0, %s149
      %s152 = sphi 0, %s151
      %s166 = sphi 0, %s152
      %s170 = sphi 0, %s170
      %s172 = sphi 0, %s170
      %s173 = sphi 0, %s172
      %s187 = sphi 0, %s173
      %s191 = sphi 0, %s191
      %s193 = sphi 0, %s191
      %s194 = sphi 0, %s193
      %s208 = sphi 0, %s194
      %s212 = sphi 0, %s212
      %s214 = sphi 0, %s212
      %s215 = sphi 0, %s214
      %s229 = sphi 0, %s215
      %s235 = sphi 0, %s237
      %s238 = sphi 0, %s235
      %s239 = sphi 0, %s238
      %s255 = sphi 0, %s239
    $region4: #{tpu_custom_call.1} parent=1 // loop_header_branch
      %29 = sbr.rel (%p27) target = $region8
    $region5: #{tpu_custom_call.1} parent=1 // loop_body
      %s31 = ssub.s32 %s26, 1
      %s32 = ssub.s32 %s26, 2
      %s33 = sadd.s32 %s26, 1
      %s34 = ssub.s32 %s26, %s33
      %p35 = scmp.eq.s32.totalorder %s34, 0
      %s37 = sadd.s32 %s36, 1
      %s38 = scalar_select %p35, %s36, %s37
      %p41 = pneg %p35
      %p42 = scmp.eq.s32.totalorder %s26, 3
      %p43 = por %p41, %p42
      %p44 = scmp.ne.s32.totalorder %s36, %s39
      %p45 = scmp.eq.s32.totalorder %s26, 0
      %p46 = por %p44, %p45
      %p47 = scmp.ne.s32.totalorder %s36, %s39
      %p48 = scmp.eq.s32.totalorder %s31, 3
      %p49 = por %p47, %p48
      %p50 = scmp.ne.s32.totalorder %s39, %s40
      %p51 = scmp.eq.s32.totalorder %s31, 0
      %p52 = por %p50, %p51
      %p53 = scmp.ne.s32.totalorder %s39, %s40
      %p54 = scmp.eq.s32.totalorder %s32, 3
      %p55 = por %p53, %p54
      %p57 = scmp.ne.s32.totalorder %s40, %s56
      %p58 = scmp.eq.s32.totalorder %s32, 0
      %p59 = por %p57, %p58
      %s60 = ssub.s32 %s26, %s33
      %p61 = scmp.eq.s32.totalorder %s60, 0
      %s63 = sadd.s32 %s62, 1
      %s64 = scalar_select %p61, %s62, %s63
      %p67 = pneg %p61
      %p68 = scmp.eq.s32.totalorder %s26, 3
      %p69 = por %p67, %p68
      %p70 = scmp.ne.s32.totalorder %s62, %s65
      %p71 = scmp.eq.s32.totalorder %s26, 0
      %p72 = por %p70, %p71
      %p73 = scmp.ne.s32.totalorder %s62, %s65
      %p74 = scmp.eq.s32.totalorder %s31, 3
      %p75 = por %p73, %p74
      %p76 = scmp.ne.s32.totalorder %s65, %s66
      %p77 = scmp.eq.s32.totalorder %s31, 0
      %p78 = por %p76, %p77
      %p79 = scmp.ne.s32.totalorder %s65, %s66
      %p80 = scmp.eq.s32.totalorder %s32, 3
      %p81 = por %p79, %p80
      %p83 = scmp.ne.s32.totalorder %s66, %s82
      %p84 = scmp.eq.s32.totalorder %s32, 0
      %p85 = por %p83, %p84
      %s87 = sadd.s32 %s86, 1
      %p90 = scmp.eq.s32.totalorder %s26, 3
      %p91 = scmp.ne.s32.totalorder %s86, %s88
      %p92 = scmp.eq.s32.totalorder %s26, 0
      %p93 = por %p91, %p92
      %p94 = scmp.ne.s32.totalorder %s86, %s88
      %p95 = scmp.eq.s32.totalorder %s31, 3
      %p96 = por %p94, %p95
      %p97 = scmp.ne.s32.totalorder %s88, %s89
      %p98 = scmp.eq.s32.totalorder %s31, 0
      %p99 = por %p97, %p98
      %p100 = scmp.ne.s32.totalorder %s88, %s89
      %p101 = scmp.eq.s32.totalorder %s32, 3
      %p102 = por %p100, %p101
      %p104 = scmp.ne.s32.totalorder %s89, %s103
      %p105 = scmp.eq.s32.totalorder %s32, 0
      %p106 = por %p104, %p105
      %s108 = sadd.s32 %s107, 1
      %p111 = scmp.eq.s32.totalorder %s26, 3
      %p112 = scmp.ne.s32.totalorder %s107, %s109
      %p113 = scmp.eq.s32.totalorder %s26, 0
      %p114 = por %p112, %p113
      %p115 = scmp.ne.s32.totalorder %s107, %s109
      %p116 = scmp.eq.s32.totalorder %s31, 3
      %p117 = por %p115, %p116
      %p118 = scmp.ne.s32.totalorder %s109, %s110
      %p119 = scmp.eq.s32.totalorder %s31, 0
      %p120 = por %p118, %p119
      %p121 = scmp.ne.s32.totalorder %s109, %s110
      %p122 = scmp.eq.s32.totalorder %s32, 3
      %p123 = por %p121, %p122
      %p125 = scmp.ne.s32.totalorder %s110, %s124
      %p126 = scmp.eq.s32.totalorder %s32, 0
      %p127 = por %p125, %p126
      %s129 = sadd.s32 %s128, 1
      %p132 = scmp.eq.s32.totalorder %s26, 3
      %p133 = scmp.ne.s32.totalorder %s128, %s130
      %p134 = scmp.eq.s32.totalorder %s26, 0
      %p135 = por %p133, %p134
      %p136 = scmp.ne.s32.totalorder %s128, %s130
      %p137 = scmp.eq.s32.totalorder %s31, 3
      %p138 = por %p136, %p137
      %p139 = scmp.ne.s32.totalorder %s130, %s131
      %p140 = scmp.eq.s32.totalorder %s31, 0
      %p141 = por %p139, %p140
      %p142 = scmp.ne.s32.totalorder %s130, %s131
      %p143 = scmp.eq.s32.totalorder %s32, 3
      %p144 = por %p142, %p143
      %p146 = scmp.ne.s32.totalorder %s131, %s145
      %p147 = scmp.eq.s32.totalorder %s32, 0
      %p148 = por %p146, %p147
      %s150 = sadd.s32 %s149, 1
      %p153 = scmp.eq.s32.totalorder %s26, 3
      %p154 = scmp.ne.s32.totalorder %s149, %s151
      %p155 = scmp.eq.s32.totalorder %s26, 0
      %p156 = por %p154, %p155
      %p157 = scmp.ne.s32.totalorder %s149, %s151
      %p158 = scmp.eq.s32.totalorder %s31, 3
      %p159 = por %p157, %p158
      %p160 = scmp.ne.s32.totalorder %s151, %s152
      %p161 = scmp.eq.s32.totalorder %s31, 0
      %p162 = por %p160, %p161
      %p163 = scmp.ne.s32.totalorder %s151, %s152
      %p164 = scmp.eq.s32.totalorder %s32, 3
      %p165 = por %p163, %p164
      %p167 = scmp.ne.s32.totalorder %s152, %s166
      %p168 = scmp.eq.s32.totalorder %s32, 0
      %p169 = por %p167, %p168
      %s171 = sadd.s32 %s170, 1
      %p174 = scmp.eq.s32.totalorder %s26, 3
      %p175 = scmp.ne.s32.totalorder %s170, %s172
      %p176 = scmp.eq.s32.totalorder %s26, 0
      %p177 = por %p175, %p176
      %p178 = scmp.ne.s32.totalorder %s170, %s172
      %p179 = scmp.eq.s32.totalorder %s31, 3
      %p180 = por %p178, %p179
      %p181 = scmp.ne.s32.totalorder %s172, %s173
      %p182 = scmp.eq.s32.totalorder %s31, 0
      %p183 = por %p181, %p182
      %p184 = scmp.ne.s32.totalorder %s172, %s173
      %p185 = scmp.eq.s32.totalorder %s32, 3
      %p186 = por %p184, %p185
      %p188 = scmp.ne.s32.totalorder %s173, %s187
      %p189 = scmp.eq.s32.totalorder %s32, 0
      %p190 = por %p188, %p189
      %s192 = sadd.s32 %s191, 1
      %p195 = scmp.eq.s32.totalorder %s26, 3
      %p196 = scmp.ne.s32.totalorder %s191, %s193
      %p197 = scmp.eq.s32.totalorder %s26, 0
      %p198 = por %p196, %p197
      %p199 = scmp.ne.s32.totalorder %s191, %s193
      %p200 = scmp.eq.s32.totalorder %s31, 3
      %p201 = por %p199, %p200
      %p202 = scmp.ne.s32.totalorder %s193, %s194
      %p203 = scmp.eq.s32.totalorder %s31, 0
      %p204 = por %p202, %p203
      %p205 = scmp.ne.s32.totalorder %s193, %s194
      %p206 = scmp.eq.s32.totalorder %s32, 3
      %p207 = por %p205, %p206
      %p209 = scmp.ne.s32.totalorder %s194, %s208
      %p210 = scmp.eq.s32.totalorder %s32, 0
      %p211 = por %p209, %p210
      %s213 = sadd.s32 %s212, 1
      %p216 = scmp.eq.s32.totalorder %s26, 3
      %p217 = scmp.ne.s32.totalorder %s212, %s214
      %p218 = scmp.eq.s32.totalorder %s26, 0
      %p219 = por %p217, %p218
      %p220 = scmp.ne.s32.totalorder %s212, %s214
      %p221 = scmp.eq.s32.totalorder %s31, 3
      %p222 = por %p220, %p221
      %p223 = scmp.ne.s32.totalorder %s214, %s215
      %p224 = scmp.eq.s32.totalorder %s31, 0
      %p225 = por %p223, %p224
      %p226 = scmp.ne.s32.totalorder %s214, %s215
      %p227 = scmp.eq.s32.totalorder %s32, 3
      %p228 = por %p226, %p227
      %p230 = scmp.ne.s32.totalorder %s215, %s229
      %p231 = scmp.eq.s32.totalorder %s32, 0
      %p232 = por %p230, %p231
      %s233 = ssub.s32 %s26, %s33
      %p234 = scmp.eq.s32.totalorder %s233, 0
      %s236 = sadd.s32 %s235, 1
      %s237 = scalar_select %p234, %s235, %s236
      %p240 = pneg %p234
      %p241 = scmp.eq.s32.totalorder %s26, 3
      %p242 = por %p240, %p241
      %p243 = scmp.ne.s32.totalorder %s235, %s238
      %p244 = scmp.eq.s32.totalorder %s26, 0
      %p245 = por %p243, %p244
      %p246 = scmp.ne.s32.totalorder %s235, %s238
      %p247 = scmp.eq.s32.totalorder %s31, 3
      %p248 = por %p246, %p247
      %p249 = scmp.ne.s32.totalorder %s238, %s239
      %p250 = scmp.eq.s32.totalorder %s31, 0
      %p251 = por %p249, %p250
      %p252 = scmp.ne.s32.totalorder %s238, %s239
      %p253 = scmp.eq.s32.totalorder %s32, 3
      %p254 = por %p252, %p253
      %p256 = scmp.ne.s32.totalorder %s239, %s255
      %p257 = scmp.eq.s32.totalorder %s32, 0
      %p258 = por %p256, %p257
      %p259 = scmp.le.s32.totalorder 1, %s26
      %p260 = scmp.lt.s32.totalorder %s26, 5
      %p261 = pnand %p259, %p260
      %p262 = pneg %p261
      // Predicated region
      $region9: #{tpu_custom_call.1} parent=5 // pred_check
        _
      $region10: #{tpu_custom_call.1} parent=5 // pred_check_branch
        %264 = sbr.rel (%p261) target = $region12
      $region11: #{tpu_custom_call.1} parent=5 // pred_region
        %s265 = ssub.s32 %s26, 1
        // Predicated region
        $region13: #{tpu_custom_call.1} parent=11 // pred_check
          %p266 = pneg %p99
        $region14: #{tpu_custom_call.1} parent=11 // pred_check_branch
          %268 = sbr.rel (%p266) target = $region16
        $region15: #{tpu_custom_call.1} parent=11 // pred_region
          %s270 = ssub.s32 1024, 1024
          %271 = vsyncadd [#allocation6], %s270
          %s272 = sshll.u32 [#allocation7], 4
          %s273 = int_to_ptr.vmem [resolvable:$true] %s272
          %278 = dma.hbm_to_vmem [thread:$0]  %s2, 1024, %s273, [#allocation6], 64, 64, 4
        $region16: #{tpu_custom_call.1} parent=11 // pred_fallthru
          _
        // Predicated region
        $region17: #{tpu_custom_call.1} parent=11 // pred_check
          %p279 = pneg %p120
        $region18: #{tpu_custom_call.1} parent=11 // pred_check_branch
          %281 = sbr.rel (%p279) target = $region20
        $region19: #{tpu_custom_call.1} parent=11 // pred_region
          %s283 = ssub.s32 6144, 6144
          %284 = vsyncadd [#allocation9], %s283
          %s285 = sshll.u32 [#allocation8], 4
          %s286 = int_to_ptr.vmem [resolvable:$true] %s285
          %291 = dma.hbm_to_vmem [thread:$0]  %s3, 6144, %s286, [#allocation9], 192, 192, 12
        $region20: #{tpu_custom_call.1} parent=11 // pred_fallthru
          _
        // Predicated region
        $region21: #{tpu_custom_call.1} parent=11 // pred_check
          %p292 = pneg %p141
        $region22: #{tpu_custom_call.1} parent=11 // pred_check_branch
          %294 = sbr.rel (%p292) target = $region24
        $region23: #{tpu_custom_call.1} parent=11 // pred_region
          %s296 = ssub.s32 2048, 2048
          %297 = vsyncadd [#allocation9], %s296
          %s298 = sshll.u32 [#allocation10], 4
          %s299 = int_to_ptr.vmem [resolvable:$true] %s298
          %304 = dma.hbm_to_vmem [thread:$0]  %s4, 2048, %s299, [#allocation9], 64, 64, 4
        $region24: #{tpu_custom_call.1} parent=11 // pred_fallthru
          _
        // Predicated region
        $region25: #{tpu_custom_call.1} parent=11 // pred_check
          %p305 = pneg %p162
        $region26: #{tpu_custom_call.1} parent=11 // pred_check_branch
          %307 = sbr.rel (%p305) target = $region28
        $region27: #{tpu_custom_call.1} parent=11 // pred_region
          _
        $region28: #{tpu_custom_call.1} parent=11 // pred_fallthru
          _
        // Predicated region
        $region29: #{tpu_custom_call.1} parent=11 // pred_check
          %p308 = pneg %p183
        $region30: #{tpu_custom_call.1} parent=11 // pred_check_branch
          %310 = sbr.rel (%p308) target = $region32
        $region31: #{tpu_custom_call.1} parent=11 // pred_region
          %s312 = ssub.s32 2048, 2048
          %313 = vsyncadd [#allocation12], %s312
          %s314 = sshll.u32 [#allocation11], 4
          %s315 = int_to_ptr.vmem [resolvable:$true] %s314
          %320 = dma.hbm_to_vmem [thread:$0]  %s6, 2048, %s315, [#allocation12], 64, 64, 4
        $region32: #{tpu_custom_call.1} parent=11 // pred_fallthru
          _
        // Predicated region
        $region33: #{tpu_custom_call.1} parent=11 // pred_check
          %p321 = pneg %p204
        $region34: #{tpu_custom_call.1} parent=11 // pred_check_branch
          %323 = sbr.rel (%p321) target = $region36
        $region35: #{tpu_custom_call.1} parent=11 // pred_region
          _
        $region36: #{tpu_custom_call.1} parent=11 // pred_fallthru
          _
        // Predicated region
        $region37: #{tpu_custom_call.1} parent=11 // pred_check
          %p324 = pneg %p225
        $region38: #{tpu_custom_call.1} parent=11 // pred_check_branch
          %326 = sbr.rel (%p324) target = $region40
        $region39: #{tpu_custom_call.1} parent=11 // pred_region
          _
        $region40: #{tpu_custom_call.1} parent=11 // pred_fallthru
          _
      $region12: #{tpu_custom_call.1} parent=5 // pred_fallthru
        _
      %p327 = scmp.lt.s32.totalorder %s26, 4
      // Predicated region
      $region41: #{tpu_custom_call.1} parent=5 // pred_check
        %p328 = pneg %p327
      $region42: #{tpu_custom_call.1} parent=5 // pred_check_branch
        %330 = sbr.rel (%p328) target = $region44
      $region43: #{tpu_custom_call.1} parent=5 // pred_region
        // Predicated region
        $region45: #{tpu_custom_call.1} parent=43 // pred_check
          %p331 = pneg %p46
        $region46: #{tpu_custom_call.1} parent=43 // pred_check_branch
          %333 = sbr.rel (%p331) target = $region48
        $region47: #{tpu_custom_call.1} parent=43 // pred_region
          %s334 = sand.u32 %s36, 1
          %s335 = scalar_lea.sflag [#allocation3], %s334
          %s336 = sand.u32 %s36, 1
          %s337 = smul.addr %s336, 256
          %s338 = scalar_lea.vmem [#allocation2], %s337
          %s340 = ssub.s32 4096, 4096
          %341 = vsyncadd %s335, %s340
          %s342 = smul.addr %s26, 32
          %s343 = smul.addr %s342, 128
          %s344 = scalar_lea.hbm %s0, %s343
          %s345 = sshll.u32 %s338, 4
          %s346 = int_to_ptr.vmem [resolvable:$true] %s345
          %351 = dma.hbm_to_vmem [thread:$0]  %s344, 4096, %s346, %s335, 128, 128, 8
        $region48: #{tpu_custom_call.1} parent=43 // pred_fallthru
          _
        // Predicated region
        $region49: #{tpu_custom_call.1} parent=43 // pred_check
          %p352 = pneg %p72
        $region50: #{tpu_custom_call.1} parent=43 // pred_check_branch
          %354 = sbr.rel (%p352) target = $region52
        $region51: #{tpu_custom_call.1} parent=43 // pred_region
          %s355 = sand.u32 %s26, 1
          %s356 = scalar_lea.sflag [#allocation6], %s355
          %s357 = sand.u32 %s62, 1
          %s358 = smul.addr %s357, 256
          %s359 = scalar_lea.vmem [#allocation5], %s358
          %s361 = ssub.s32 4096, 4096
          %362 = vsyncadd %s356, %s361
          %s363 = smul.addr %s26, 32
          %s364 = smul.addr %s363, 128
          %s365 = scalar_lea.hbm %s1, %s364
          %s366 = sshll.u32 %s359, 4
          %s367 = int_to_ptr.vmem [resolvable:$true] %s366
          %372 = dma.hbm_to_vmem [thread:$0]  %s365, 4096, %s367, %s356, 128, 128, 8
        $region52: #{tpu_custom_call.1} parent=43 // pred_fallthru
          _
      $region44: #{tpu_custom_call.1} parent=5 // pred_fallthru
        _
      %p373 = scmp.le.s32.totalorder 1, %s26
      %p374 = scmp.lt.s32.totalorder %s26, 5
      %p375 = pnand %p373, %p374
      %p376 = pneg %p375
      // Predicated region
      $region53: #{tpu_custom_call.1} parent=5 // pred_check
        _
      $region54: #{tpu_custom_call.1} parent=5 // pred_check_branch
        %378 = sbr.rel (%p375) target = $region56
      $region55: #{tpu_custom_call.1} parent=5 // pred_region
        %s379 = ssub.s32 %s26, 1
        %s380 = sand.u32 %s39, 1
        %s381 = scalar_lea.sflag [#allocation3], %s380
        %s382 = sand.u32 %s39, 1
        %s383 = smul.addr %s382, 256
        %s384 = scalar_lea.vmem [#allocation2], %s383
        // Predicated region
        $region57: #{tpu_custom_call.1} parent=55 // pred_check
          %p385 = pneg %p52
        $region58: #{tpu_custom_call.1} parent=55 // pred_check_branch
          %387 = sbr.rel (%p385) target = $region60
        $region59: #{tpu_custom_call.1} parent=55 // pred_region
          %388 = dma.done %s381, 4096
        $region60: #{tpu_custom_call.1} parent=55 // pred_fallthru
          _
        %s389 = sand.u32 %s31, 1
        %s390 = scalar_lea.sflag [#allocation6], %s389
        %s391 = sand.u32 %s65, 1
        %s392 = smul.addr %s391, 256
        %s393 = scalar_lea.vmem [#allocation5], %s392
        // Predicated region
        $region61: #{tpu_custom_call.1} parent=55 // pred_check
          %p394 = pneg %p78
        $region62: #{tpu_custom_call.1} parent=55 // pred_check_branch
          %396 = sbr.rel (%p394) target = $region64
        $region63: #{tpu_custom_call.1} parent=55 // pred_region
          %397 = dma.done %s390, 4096
        $region64: #{tpu_custom_call.1} parent=55 // pred_fallthru
          _
        // Predicated region
        $region65: #{tpu_custom_call.1} parent=55 // pred_check
          %p398 = pneg %p99
        $region66: #{tpu_custom_call.1} parent=55 // pred_check_branch
          %400 = sbr.rel (%p398) target = $region68
        $region67: #{tpu_custom_call.1} parent=55 // pred_region
          %401 = dma.done [#allocation6], 1024
        $region68: #{tpu_custom_call.1} parent=55 // pred_fallthru
          _
        // Predicated region
        $region69: #{tpu_custom_call.1} parent=55 // pred_check
          %p402 = pneg %p120
        $region70: #{tpu_custom_call.1} parent=55 // pred_check_branch
          %404 = sbr.rel (%p402) target = $region72
        $region71: #{tpu_custom_call.1} parent=55 // pred_region
          %405 = dma.done [#allocation9], 6144
        $region72: #{tpu_custom_call.1} parent=55 // pred_fallthru
          _
        // Predicated region
        $region73: #{tpu_custom_call.1} parent=55 // pred_check
          %p406 = pneg %p141
        $region74: #{tpu_custom_call.1} parent=55 // pred_check_branch
          %408 = sbr.rel (%p406) target = $region76
        $region75: #{tpu_custom_call.1} parent=55 // pred_region
          %409 = dma.done [#allocation9], 2048
        $region76: #{tpu_custom_call.1} parent=55 // pred_fallthru
          _
        // Predicated region
        $region77: #{tpu_custom_call.1} parent=55 // pred_check
          %p410 = pneg %p183
        $region78: #{tpu_custom_call.1} parent=55 // pred_check_branch
          %412 = sbr.rel (%p410) target = $region80
        $region79: #{tpu_custom_call.1} parent=55 // pred_region
          %413 = dma.done [#allocation12], 2048
        $region80: #{tpu_custom_call.1} parent=55 // pred_fallthru
          _
        %s414 = sand.u32 %s39, 1
        %s415 = scalar_lea.sflag [#allocation3], %s414
        %s416 = sand.u32 %s39, 1
        %s417 = smul.addr %s416, 256
        %s418 = scalar_lea.vmem [#allocation2], %s417
        %p419 = pneg %p52
        %p420 = pneg %p49
        %s421 = sand.u32 %s31, 1
        %s422 = scalar_lea.sflag [#allocation6], %s421
        %s423 = sand.u32 %s65, 1
        %s424 = smul.addr %s423, 256
        %s425 = scalar_lea.vmem [#allocation5], %s424
        %p426 = pneg %p78
        %p427 = pneg %p75
        %p428 = pneg %p99
        %p429 = pneg %p96
        %p430 = pneg %p120
        %p431 = pneg %p117
        %p432 = pneg %p141
        %p433 = pneg %p138
        %p434 = pneg %p162
        %p435 = pneg %p159
        %p436 = pneg %p183
        %p437 = pneg %p180
        %p438 = pneg %p204
        %p439 = pneg %p201
        %p440 = pneg %p225
        %p441 = pneg %p222
        %p442 = pneg %p251
        %p443 = pneg %p248
        %s444 = sand.u32 %s238, 1
        %s445 = scalar_lea.sflag [#allocation4], %s444
        %s446 = sand.u32 %s238, 1
        %s447 = smul.addr %s446, 256
        %s448 = scalar_lea.vmem [#allocation13], %s447
        %v450 = vld [vmem:[#allocation7] sm:$0xf]
        %v451 = vld [vmem:[#allocation7 + $0x4] sm:$0xf]
        %v452 = vld [vmem:[#allocation7 + $0x8] sm:$0xf]
        %v453 = vld [vmem:[#allocation7 + $0xc] sm:$0xf]
        %v454 = vld [vmem:[#allocation7 + $0x10] sm:$0xf]
        %v455 = vld [vmem:[#allocation7 + $0x14] sm:$0xf]
        %v456 = vld [vmem:[#allocation7 + $0x18] sm:$0xf]
        %v457 = vld [vmem:[#allocation7 + $0x1c] sm:$0xf]
        %v458 = vld [vmem:[#allocation7 + $0x20] sm:$0xf]
        %v459 = vld [vmem:[#allocation7 + $0x24] sm:$0xf]
        %v460 = vld [vmem:[#allocation7 + $0x28] sm:$0xf]
        %v461 = vld [vmem:[#allocation7 + $0x2c] sm:$0xf]
        %v462 = vld [vmem:[#allocation7 + $0x30] sm:$0xf]
        %v463 = vld [vmem:[#allocation7 + $0x34] sm:$0xf]
        %v464 = vld [vmem:[#allocation7 + $0x38] sm:$0xf]
        %v465 = vld [vmem:[#allocation7 + $0x3c] sm:$0xf]
        %v466 = vld [vmem:[%s384] sm:$0xff]
        %v467 = vld [vmem:[%s384 + $0x8] sm:$0xff]
        %v468 = vld [vmem:[%s384 + $0x10] sm:$0xff]
        %v469 = vld [vmem:[%s384 + $0x18] sm:$0xff]
        %v470 = vld [vmem:[%s384 + $0x20] sm:$0xff]
        %v471 = vld [vmem:[%s384 + $0x28] sm:$0xff]
        %v472 = vld [vmem:[%s384 + $0x30] sm:$0xff]
        %v473 = vld [vmem:[%s384 + $0x38] sm:$0xff]
        %v474 = vld [vmem:[%s384 + $0x40] sm:$0xff]
        %v475 = vld [vmem:[%s384 + $0x48] sm:$0xff]
        %v476 = vld [vmem:[%s384 + $0x50] sm:$0xff]
        %v477 = vld [vmem:[%s384 + $0x58] sm:$0xff]
        %v478 = vld [vmem:[%s384 + $0x60] sm:$0xff]
        %v479 = vld [vmem:[%s384 + $0x68] sm:$0xff]
        %v480 = vld [vmem:[%s384 + $0x70] sm:$0xff]
        %v481 = vld [vmem:[%s384 + $0x78] sm:$0xff]
        %v482 = vld [vmem:[%s384 + $0x80] sm:$0xff]
        %v483 = vld [vmem:[%s384 + $0x88] sm:$0xff]
        %v484 = vld [vmem:[%s384 + $0x90] sm:$0xff]
        %v485 = vld [vmem:[%s384 + $0x98] sm:$0xff]
        %v486 = vld [vmem:[%s384 + $0xa0] sm:$0xff]
        %v487 = vld [vmem:[%s384 + $0xa8] sm:$0xff]
        %v488 = vld [vmem:[%s384 + $0xb0] sm:$0xff]
        %v489 = vld [vmem:[%s384 + $0xb8] sm:$0xff]
        %v490 = vld [vmem:[%s384 + $0xc0] sm:$0xff]
        %v491 = vld [vmem:[%s384 + $0xc8] sm:$0xff]
        %v492 = vld [vmem:[%s384 + $0xd0] sm:$0xff]
        %v493 = vld [vmem:[%s384 + $0xd8] sm:$0xff]
        %v494 = vld [vmem:[%s384 + $0xe0] sm:$0xff]
        %v495 = vld [vmem:[%s384 + $0xe8] sm:$0xff]
        %v496 = vld [vmem:[%s384 + $0xf0] sm:$0xff]
        %v497 = vld [vmem:[%s384 + $0xf8] sm:$0xff]
        %v498 = vld [vmem:[#allocation8] sm:$0xff]
        %v499 = vld [vmem:[#allocation8 + $0x8] sm:$0xf]
        %v500 = vld [vmem:[#allocation8 + $0xc] sm:$0xff]
        %v501 = vld [vmem:[#allocation8 + $0x14] sm:$0xf]
        %v502 = vld [vmem:[#allocation8 + $0x18] sm:$0xff]
        %v503 = vld [vmem:[#allocation8 + $0x20] sm:$0xf]
        %v504 = vld [vmem:[#allocation8 + $0x24] sm:$0xff]
        %v505 = vld [vmem:[#allocation8 + $0x2c] sm:$0xf]
        %v506 = vld [vmem:[#allocation8 + $0x30] sm:$0xff]
        %v507 = vld [vmem:[#allocation8 + $0x38] sm:$0xf]
        %v508 = vld [vmem:[#allocation8 + $0x3c] sm:$0xff]
        %v509 = vld [vmem:[#allocation8 + $0x44] sm:$0xf]
        %v510 = vld [vmem:[#allocation8 + $0x48] sm:$0xff]
        %v511 = vld [vmem:[#allocation8 + $0x50] sm:$0xf]
        %v512 = vld [vmem:[#allocation8 + $0x54] sm:$0xff]
        %v513 = vld [vmem:[#allocation8 + $0x5c] sm:$0xf]
        %v514 = vld [vmem:[#allocation8 + $0x60] sm:$0xff]
        %v515 = vld [vmem:[#allocation8 + $0x68] sm:$0xf]
        %v516 = vld [vmem:[#allocation8 + $0x6c] sm:$0xff]
        %v517 = vld [vmem:[#allocation8 + $0x74] sm:$0xf]
        %v518 = vld [vmem:[#allocation8 + $0x78] sm:$0xff]
        %v519 = vld [vmem:[#allocation8 + $0x80] sm:$0xf]
        %v520 = vld [vmem:[#allocation8 + $0x84] sm:$0xff]
        %v521 = vld [vmem:[#allocation8 + $0x8c] sm:$0xf]
        %v522 = vld [vmem:[#allocation8 + $0x90] sm:$0xff]
        %v523 = vld [vmem:[#allocation8 + $0x98] sm:$0xf]
        %v524 = vld [vmem:[#allocation8 + $0x9c] sm:$0xff]
        %v525 = vld [vmem:[#allocation8 + $0xa4] sm:$0xf]
        %v526 = vld [vmem:[#allocation8 + $0xa8] sm:$0xff]
        %v527 = vld [vmem:[#allocation8 + $0xb0] sm:$0xf]
        %v528 = vld [vmem:[#allocation8 + $0xb4] sm:$0xff]
        %v529 = vld [vmem:[#allocation8 + $0xbc] sm:$0xf]
        %v530 = vpack.c.bf16 %v467, %v466
        %v531 = vpack.c.bf16 %v469, %v468
        %v532 = vpack.c.bf16 %v471, %v470
        %v533 = vpack.c.bf16 %v473, %v472
        %v534 = vpack.c.bf16 %v475, %v474
        %v535 = vpack.c.bf16 %v477, %v476
        %v536 = vpack.c.bf16 %v479, %v478
        %v537 = vpack.c.bf16 %v481, %v480
        %v538 = vpack.c.bf16 %v483, %v482
        %v539 = vpack.c.bf16 %v485, %v484
        %v540 = vpack.c.bf16 %v487, %v486
        %v541 = vpack.c.bf16 %v489, %v488
        %v542 = vpack.c.bf16 %v491, %v490
        %v543 = vpack.c.bf16 %v493, %v492
        %v544 = vpack.c.bf16 %v495, %v494
        %v545 = vpack.c.bf16 %v497, %v496
        %v578 = vunpack.c.l.b16 %v498
        %v579 = vunpack.c.h.b16 %v498
        %v580 = vunpack.c.l.b16 %v499
        %v581 = vunpack.c.l.b16 %v500
        %v582 = vunpack.c.h.b16 %v500
        %v583 = vunpack.c.l.b16 %v501
        %v584 = vunpack.c.l.b16 %v502
        %v585 = vunpack.c.h.b16 %v502
        %v586 = vunpack.c.l.b16 %v503
        %v587 = vunpack.c.l.b16 %v504
        %v588 = vunpack.c.h.b16 %v504
        %v589 = vunpack.c.l.b16 %v505
        %v590 = vunpack.c.l.b16 %v506
        %v591 = vunpack.c.h.b16 %v506
        %v592 = vunpack.c.l.b16 %v507
        %v593 = vunpack.c.l.b16 %v508
        %v594 = vunpack.c.h.b16 %v508
        %v595 = vunpack.c.l.b16 %v509
        %v596 = vunpack.c.l.b16 %v510
        %v597 = vunpack.c.h.b16 %v510
        %v598 = vunpack.c.l.b16 %v511
        %v599 = vunpack.c.l.b16 %v512
        %v600 = vunpack.c.h.b16 %v512
        %v601 = vunpack.c.l.b16 %v513
        %v602 = vunpack.c.l.b16 %v514
        %v603 = vunpack.c.h.b16 %v514
        %v604 = vunpack.c.l.b16 %v515
        %v605 = vunpack.c.l.b16 %v516
        %v606 = vunpack.c.h.b16 %v516
        %v607 = vunpack.c.l.b16 %v517
        %v608 = vunpack.c.l.b16 %v518
        %v609 = vunpack.c.h.b16 %v518
        %v610 = vunpack.c.l.b16 %v519
        %v611 = vunpack.c.l.b16 %v520
        %v612 = vunpack.c.h.b16 %v520
        %v613 = vunpack.c.l.b16 %v521
        %v614 = vunpack.c.l.b16 %v522
        %v615 = vunpack.c.h.b16 %v522
        %v616 = vunpack.c.l.b16 %v523
        %v617 = vunpack.c.l.b16 %v524
        %v618 = vunpack.c.h.b16 %v524
        %v619 = vunpack.c.l.b16 %v525
        %v620 = vunpack.c.l.b16 %v526
        %v621 = vunpack.c.h.b16 %v526
        %v622 = vunpack.c.l.b16 %v527
        %v623 = vunpack.c.l.b16 %v528
        %v624 = vunpack.c.h.b16 %v528
        %v625 = vunpack.c.l.b16 %v529
        %v626 = vpack.c.b16 %v581, %v578
        %v627 = vpack.c.b16 %v582, %v579
        %v628 = vpack.c.b16 %v583, %v580
        %v629 = vpack.c.b16 %v587, %v584
        %v630 = vpack.c.b16 %v588, %v585
        %v631 = vpack.c.b16 %v589, %v586
        %v632 = vpack.c.b16 %v593, %v590
        %v633 = vpack.c.b16 %v594, %v591
        %v634 = vpack.c.b16 %v595, %v592
        %v635 = vpack.c.b16 %v599, %v596
        %v636 = vpack.c.b16 %v600, %v597
        %v637 = vpack.c.b16 %v601, %v598
        %v638 = vpack.c.b16 %v605, %v602
        %v639 = vpack.c.b16 %v606, %v603
        %v640 = vpack.c.b16 %v607, %v604
        %v641 = vpack.c.b16 %v611, %v608
        %v642 = vpack.c.b16 %v612, %v609
        %v643 = vpack.c.b16 %v613, %v610
        %v644 = vpack.c.b16 %v617, %v614
        %v645 = vpack.c.b16 %v618, %v615
        %v646 = vpack.c.b16 %v619, %v616
        %v647 = vpack.c.b16 %v623, %v620
        %v648 = vpack.c.b16 %v624, %v621
        %v649 = vpack.c.b16 %v625, %v622
        %674 = vmatprep.subr.bf16.mxu0 %v627
        %675 = vmatpush1.bf16.msra.mxu0 %v626
        %676 = vmatprep.subr.bf16.mxu0 %v630
        %677 = vmatpush1.bf16.msra.mxu0 %v629
        %678 = vmatprep.subr.bf16.mxu0 %v633
        %679 = vmatpush1.bf16.msra.mxu0 %v632
        %680 = vmatprep.subr.bf16.mxu0 %v636
        %681 = vmatpush1.bf16.msra.mxu0 %v635
        %682 = vmatprep.subr.bf16.mxu0 %v639
        %683 = vmatpush1.bf16.msra.mxu0 %v638
        %684 = vmatprep.subr.bf16.mxu0 %v642
        %685 = vmatpush1.bf16.msra.mxu0 %v641
        %686 = vmatprep.subr.bf16.mxu0 %v645
        %687 = vmatpush1.bf16.msra.mxu0 %v644
        %688 = vmatprep.subr.bf16.mxu0 %v648
        %689 = vmatpush1.bf16.msra.mxu0 %v647
        %690 = vmatprep.subr.bf16.mxu0 0
        %691 = vmatpush1.bf16.msra.mxu0 0
        %692 = vmatprep.subr.bf16.mxu0 0
        %693 = vmatpush1.bf16.msra.mxu0 0
        %694 = vmatprep.subr.bf16.mxu0 0
        %695 = vmatpush1.bf16.msra.mxu0 0
        %696 = vmatprep.subr.bf16.mxu0 0
        %697 = vmatpush1.bf16.msra.mxu0 0
        %698 = vmatprep.subr.bf16.mxu0 0
        %699 = vmatpush1.bf16.msra.mxu0 0
        %700 = vmatprep.subr.bf16.mxu0 0
        %701 = vmatpush1.bf16.msra.mxu0 0
        %702 = vmatprep.subr.bf16.mxu0 0
        %703 = vmatpush1.bf16.msra.mxu0 0
        %704 = vmatprep.subr.bf16.mxu0 0
        %705 = vmatpush1.bf16.msra.mxu0 0
        %706 = vmatprep.mubr.bf16.mxu0 0
        %707 = vmatmul.mubr.bf16.gmra.mrb[0].mxu0 %v530
        %v708 = vpop.f32.mrb[0].mxu0
        %v709 = vadd.f32 0.0, %v708
        %v710 = vpop.f32.mrb[0].mxu0
        %v711 = vadd.f32 0.0, %v710
        %v712 = vpop.f32.mrb[0].mxu0
        %v713 = vadd.f32 0.0, %v712
        %v714 = vpop.f32.mrb[0].mxu0
        %v715 = vadd.f32 0.0, %v714
        %716 = vmatprep.mubr.bf16.mxu0 0
        %717 = vmatmul.mubr.bf16.gmra.mrb[0].mxu0 %v531
        %v718 = vpop.f32.mrb[0].mxu0
        %v719 = vadd.f32 0.0, %v718
        %v720 = vpop.f32.mrb[0].mxu0
        %v721 = vadd.f32 0.0, %v720
        %v722 = vpop.f32.mrb[0].mxu0
        %v723 = vadd.f32 0.0, %v722
        %v724 = vpop.f32.mrb[0].mxu0
        %v725 = vadd.f32 0.0, %v724
        %726 = vmatprep.mubr.bf16.mxu0 0
        %727 = vmatmul.mubr.bf16.gmra.mrb[0].mxu0 %v532
        %v728 = vpop.f32.mrb[0].mxu0
        %v729 = vadd.f32 0.0, %v728
        %v730 = vpop.f32.mrb[0].mxu0
        %v731 = vadd.f32 0.0, %v730
        %v732 = vpop.f32.mrb[0].mxu0
        %v733 = vadd.f32 0.0, %v732
        %v734 = vpop.f32.mrb[0].mxu0
        %v735 = vadd.f32 0.0, %v734
        %736 = vmatprep.mubr.bf16.mxu0 0
        %737 = vmatmul.mubr.bf16.gmra.mrb[0].mxu0 %v533
        %v738 = vpop.f32.mrb[0].mxu0
        %v739 = vadd.f32 0.0, %v738
        %v740 = vpop.f32.mrb[0].mxu0
        %v741 = vadd.f32 0.0, %v740
        %v742 = vpop.f32.mrb[0].mxu0
        %v743 = vadd.f32 0.0, %v742
        %v744 = vpop.f32.mrb[0].mxu0
        %v745 = vadd.f32 0.0, %v744
        %746 = vmatprep.mubr.bf16.mxu0 0
        %747 = vmatmul.mubr.bf16.gmra.mrb[0].mxu0 %v534
        %v748 = vpop.f32.mrb[0].mxu0
        %v749 = vadd.f32 0.0, %v748
        %v750 = vpop.f32.mrb[0].mxu0
        %v751 = vadd.f32 0.0, %v750
        %v752 = vpop.f32.mrb[0].mxu0
        %v753 = vadd.f32 0.0, %v752
        %v754 = vpop.f32.mrb[0].mxu0
        %v755 = vadd.f32 0.0, %v754
        %756 = vmatprep.mubr.bf16.mxu0 0
        %757 = vmatmul.mubr.bf16.gmra.mrb[0].mxu0 %v535
        %v758 = vpop.f32.mrb[0].mxu0
        %v759 = vadd.f32 0.0, %v758
        %v760 = vpop.f32.mrb[0].mxu0
        %v761 = vadd.f32 0.0, %v760
        %v762 = vpop.f32.mrb[0].mxu0
        %v763 = vadd.f32 0.0, %v762
        %v764 = vpop.f32.mrb[0].mxu0
        %v765 = vadd.f32 0.0, %v764
        %766 = vmatprep.mubr.bf16.mxu0 0
        %767 = vmatmul.mubr.bf16.gmra.mrb[0].mxu0 %v536
        %v768 = vpop.f32.mrb[0].mxu0
        %v769 = vadd.f32 0.0, %v768
        %v770 = vpop.f32.mrb[0].mxu0
        %v771 = vadd.f32 0.0, %v770
        %v772 = vpop.f32.mrb[0].mxu0
        %v773 = vadd.f32 0.0, %v772
        %v774 = vpop.f32.mrb[0].mxu0
        %v775 = vadd.f32 0.0, %v774
        %776 = vmatprep.mubr.bf16.mxu0 0
        %777 = vmatmul.mubr.bf16.gmra.mrb[0].mxu0 %v537
        %v778 = vpop.f32.mrb[0].mxu0
        %v779 = vadd.f32 0.0, %v778
        %v780 = vpop.f32.mrb[0].mxu0
        %v781 = vadd.f32 0.0, %v780
        %v782 = vpop.f32.mrb[0].mxu0
        %v783 = vadd.f32 0.0, %v782
        %v784 = vpop.f32.mrb[0].mxu0
        %v785 = vadd.f32 0.0, %v784
        %786 = vmatprep.mubr.bf16.mxu0 0
        %787 = vmatmul.mubr.bf16.gmra.mrb[0].mxu0 %v538
        %v788 = vpop.f32.mrb[0].mxu0
        %v789 = vadd.f32 0.0, %v788
        %v790 = vpop.f32.mrb[0].mxu0
        %v791 = vadd.f32 0.0, %v790
        %v792 = vpop.f32.mrb[0].mxu0
        %v793 = vadd.f32 0.0, %v792
        %v794 = vpop.f32.mrb[0].mxu0
        %v795 = vadd.f32 0.0, %v794
        %796 = vmatprep.mubr.bf16.mxu0 0
        %797 = vmatmul.mubr.bf16.gmra.mrb[0].mxu0 %v539
        %v798 = vpop.f32.mrb[0].mxu0
        %v799 = vadd.f32 0.0, %v798
        %v800 = vpop.f32.mrb[0].mxu0
        %v801 = vadd.f32 0.0, %v800
        %v802 = vpop.f32.mrb[0].mxu0
        %v803 = vadd.f32 0.0, %v802
        %v804 = vpop.f32.mrb[0].mxu0
        %v805 = vadd.f32 0.0, %v804
        %806 = vmatprep.mubr.bf16.mxu0 0
        %807 = vmatmul.mubr.bf16.gmra.mrb[0].mxu0 %v540
        %v808 = vpop.f32.mrb[0].mxu0
        %v809 = vadd.f32 0.0, %v808
        %v810 = vpop.f32.mrb[0].mxu0
        %v811 = vadd.f32 0.0, %v810
        %v812 = vpop.f32.mrb[0].mxu0
        %v813 = vadd.f32 0.0, %v812
        %v814 = vpop.f32.mrb[0].mxu0
        %v815 = vadd.f32 0.0, %v814
        %816 = vmatprep.mubr.bf16.mxu0 0
        %817 = vmatmul.mubr.bf16.gmra.mrb[0].mxu0 %v541
        %v818 = vpop.f32.mrb[0].mxu0
        %v819 = vadd.f32 0.0, %v818
        %v820 = vpop.f32.mrb[0].mxu0
        %v821 = vadd.f32 0.0, %v820
        %v822 = vpop.f32.mrb[0].mxu0
        %v823 = vadd.f32 0.0, %v822
        %v824 = vpop.f32.mrb[0].mxu0
        %v825 = vadd.f32 0.0, %v824
        %826 = vmatprep.mubr.bf16.mxu0 0
        %827 = vmatmul.mubr.bf16.gmra.mrb[0].mxu0 %v542
        %v828 = vpop.f32.mrb[0].mxu0
        %v829 = vadd.f32 0.0, %v828
        %v830 = vpop.f32.mrb[0].mxu0
        %v831 = vadd.f32 0.0, %v830
        %v832 = vpop.f32.mrb[0].mxu0
        %v833 = vadd.f32 0.0, %v832
        %v834 = vpop.f32.mrb[0].mxu0
        %v835 = vadd.f32 0.0, %v834
        %836 = vmatprep.mubr.bf16.mxu0 0
        %837 = vmatmul.mubr.bf16.gmra.mrb[0].mxu0 %v543
        %v838 = vpop.f32.mrb[0].mxu0
        %v839 = vadd.f32 0.0, %v838
        %v840 = vpop.f32.mrb[0].mxu0
        %v841 = vadd.f32 0.0, %v840
        %v842 = vpop.f32.mrb[0].mxu0
        %v843 = vadd.f32 0.0, %v842
        %v844 = vpop.f32.mrb[0].mxu0
        %v845 = vadd.f32 0.0, %v844
        %846 = vmatprep.mubr.bf16.mxu0 0
        %847 = vmatmul.mubr.bf16.gmra.mrb[0].mxu0 %v544
        %v848 = vpop.f32.mrb[0].mxu0
        %v849 = vadd.f32 0.0, %v848
        %v850 = vpop.f32.mrb[0].mxu0
        %v851 = vadd.f32 0.0, %v850
        %v852 = vpop.f32.mrb[0].mxu0
        %v853 = vadd.f32 0.0, %v852
        %v854 = vpop.f32.mrb[0].mxu0
        %v855 = vadd.f32 0.0, %v854
        %856 = vmatprep.mubr.bf16.mxu0 0
        %857 = vmatmul.mubr.bf16.gmra.mrb[0].mxu0 %v545
        %v858 = vpop.f32.mrb[0].mxu0
        %v859 = vadd.f32 0.0, %v858
        %v860 = vpop.f32.mrb[0].mxu0
        %v861 = vadd.f32 0.0, %v860
        %v862 = vpop.f32.mrb[0].mxu0
        %v863 = vadd.f32 0.0, %v862
        %v864 = vpop.f32.mrb[0].mxu0
        %v865 = vadd.f32 0.0, %v864
        %866 = vdwg.mxu0
        %867 = vmatprep.subr.bf16.mxu0 0
        %868 = vmatpush1.bf16.msra.mxu0 %v628
        %869 = vmatprep.subr.bf16.mxu0 0
        %870 = vmatpush1.bf16.msra.mxu0 %v631
        %871 = vmatprep.subr.bf16.mxu0 0
        %872 = vmatpush1.bf16.msra.mxu0 %v634
        %873 = vmatprep.subr.bf16.mxu0 0
        %874 = vmatpush1.bf16.msra.mxu0 %v637
        %875 = vmatprep.subr.bf16.mxu0 0
        %876 = vmatpush1.bf16.msra.mxu0 %v640
        %877 = vmatprep.subr.bf16.mxu0 0
        %878 = vmatpush1.bf16.msra.mxu0 %v643
        %879 = vmatprep.subr.bf16.mxu0 0
        %880 = vmatpush1.bf16.msra.mxu0 %v646
        %881 = vmatprep.subr.bf16.mxu0 0
        %882 = vmatpush1.bf16.msra.mxu0 %v649
        %883 = vmatprep.subr.bf16.mxu0 0
        %884 = vmatpush1.bf16.msra.mxu0 0
        %885 = vmatprep.subr.bf16.mxu0 0
        %886 = vmatpush1.bf16.msra.mxu0 0
        %887 = vmatprep.subr.bf16.mxu0 0
        %888 = vmatpush1.bf16.msra.mxu0 0
        %889 = vmatprep.subr.bf16.mxu0 0
        %890 = vmatpush1.bf16.msra.mxu0 0
        %891 = vmatprep.subr.bf16.mxu0 0
        %892 = vmatpush1.bf16.msra.mxu0 0
        %893 = vmatprep.subr.bf16.mxu0 0
        %894 = vmatpush1.bf16.msra.mxu0 0
        %895 = vmatprep.subr.bf16.mxu0 0
        %896 = vmatpush1.bf16.msra.mxu0 0
        %897 = vmatprep.subr.bf16.mxu0 0
        %898 = vmatpush1.bf16.msra.mxu0 0
        %899 = vmatprep.mubr.bf16.mxu0 0
        %900 = vmatmul.mubr.bf16.gmra.mrb[0].mxu0 %v530
        %v901 = vpop.f32.mrb[0].mxu0
        %v902 = vadd.f32 0.0, %v901
        %v903 = vpop.f32.mrb[0].mxu0
        %v904 = vpop.f32.mrb[0].mxu0
        %v905 = vadd.f32 0.0, %v904
        %v906 = vpop.f32.mrb[0].mxu0
        %907 = vmatprep.mubr.bf16.mxu0 0
        %908 = vmatmul.mubr.bf16.gmra.mrb[0].mxu0 %v531
        %v909 = vpop.f32.mrb[0].mxu0
        %v910 = vadd.f32 0.0, %v909
        %v911 = vpop.f32.mrb[0].mxu0
        %v912 = vpop.f32.mrb[0].mxu0
        %v913 = vadd.f32 0.0, %v912
        %v914 = vpop.f32.mrb[0].mxu0
        %915 = vmatprep.mubr.bf16.mxu0 0
        %916 = vmatmul.mubr.bf16.gmra.mrb[0].mxu0 %v532
        %v917 = vpop.f32.mrb[0].mxu0
        %v918 = vadd.f32 0.0, %v917
        %v919 = vpop.f32.mrb[0].mxu0
        %v920 = vpop.f32.mrb[0].mxu0
        %v921 = vadd.f32 0.0, %v920
        %v922 = vpop.f32.mrb[0].mxu0
        %923 = vmatprep.mubr.bf16.mxu0 0
        %924 = vmatmul.mubr.bf16.gmra.mrb[0].mxu0 %v533
        %v925 = vpop.f32.mrb[0].mxu0
        %v926 = vadd.f32 0.0, %v925
        %v927 = vpop.f32.mrb[0].mxu0
        %v928 = vpop.f32.mrb[0].mxu0
        %v929 = vadd.f32 0.0, %v928
        %v930 = vpop.f32.mrb[0].mxu0
        %931 = vmatprep.mubr.bf16.mxu0 0
        %932 = vmatmul.mubr.bf16.gmra.mrb[0].mxu0 %v534
        %v933 = vpop.f32.mrb[0].mxu0
        %v934 = vadd.f32 0.0, %v933
        %v935 = vpop.f32.mrb[0].mxu0
        %v936 = vpop.f32.mrb[0].mxu0
        %v937 = vadd.f32 0.0, %v936
        %v938 = vpop.f32.mrb[0].mxu0
        %939 = vmatprep.mubr.bf16.mxu0 0
        %940 = vmatmul.mubr.bf16.gmra.mrb[0].mxu0 %v535
        %v941 = vpop.f32.mrb[0].mxu0
        %v942 = vadd.f32 0.0, %v941
        %v943 = vpop.f32.mrb[0].mxu0
        %v944 = vpop.f32.mrb[0].mxu0
        %v945 = vadd.f32 0.0, %v944
        %v946 = vpop.f32.mrb[0].mxu0
        %947 = vmatprep.mubr.bf16.mxu0 0
        %948 = vmatmul.mubr.bf16.gmra.mrb[0].mxu0 %v536
        %v949 = vpop.f32.mrb[0].mxu0
        %v950 = vadd.f32 0.0, %v949
        %v951 = vpop.f32.mrb[0].mxu0
        %v952 = vpop.f32.mrb[0].mxu0
        %v953 = vadd.f32 0.0, %v952
        %v954 = vpop.f32.mrb[0].mxu0
        %955 = vmatprep.mubr.bf16.mxu0 0
        %956 = vmatmul.mubr.bf16.gmra.mrb[0].mxu0 %v537
        %v957 = vpop.f32.mrb[0].mxu0
        %v958 = vadd.f32 0.0, %v957
        %v959 = vpop.f32.mrb[0].mxu0
        %v960 = vpop.f32.mrb[0].mxu0
        %v961 = vadd.f32 0.0, %v960
        %v962 = vpop.f32.mrb[0].mxu0
        %963 = vmatprep.mubr.bf16.mxu0 0
        %964 = vmatmul.mubr.bf16.gmra.mrb[0].mxu0 %v538
        %v965 = vpop.f32.mrb[0].mxu0
        %v966 = vadd.f32 0.0, %v965
        %v967 = vpop.f32.mrb[0].mxu0
        %v968 = vpop.f32.mrb[0].mxu0
        %v969 = vadd.f32 0.0, %v968
        %v970 = vpop.f32.mrb[0].mxu0
        %971 = vmatprep.mubr.bf16.mxu0 0
        %972 = vmatmul.mubr.bf16.gmra.mrb[0].mxu0 %v539
        %v973 = vpop.f32.mrb[0].mxu0
        %v974 = vadd.f32 0.0, %v973
        %v975 = vpop.f32.mrb[0].mxu0
        %v976 = vpop.f32.mrb[0].mxu0
        %v977 = vadd.f32 0.0, %v976
        %v978 = vpop.f32.mrb[0].mxu0
        %979 = vmatprep.mubr.bf16.mxu0 0
        %980 = vmatmul.mubr.bf16.gmra.mrb[0].mxu0 %v540
        %v981 = vpop.f32.mrb[0].mxu0
        %v982 = vadd.f32 0.0, %v981
        %v983 = vpop.f32.mrb[0].mxu0
        %v984 = vpop.f32.mrb[0].mxu0
        %v985 = vadd.f32 0.0, %v984
        %v986 = vpop.f32.mrb[0].mxu0
        %987 = vmatprep.mubr.bf16.mxu0 0
        %988 = vmatmul.mubr.bf16.gmra.mrb[0].mxu0 %v541
        %v989 = vpop.f32.mrb[0].mxu0
        %v990 = vadd.f32 0.0, %v989
        %v991 = vpop.f32.mrb[0].mxu0
        %v992 = vpop.f32.mrb[0].mxu0
        %v993 = vadd.f32 0.0, %v992
        %v994 = vpop.f32.mrb[0].mxu0
        %995 = vmatprep.mubr.bf16.mxu0 0
        %996 = vmatmul.mubr.bf16.gmra.mrb[0].mxu0 %v542
        %v997 = vpop.f32.mrb[0].mxu0
        %v998 = vadd.f32 0.0, %v997
        %v999 = vpop.f32.mrb[0].mxu0
        %v1000 = vpop.f32.mrb[0].mxu0
        %v1001 = vadd.f32 0.0, %v1000
        %v1002 = vpop.f32.mrb[0].mxu0
        %1003 = vmatprep.mubr.bf16.mxu0 0
        %1004 = vmatmul.mubr.bf16.gmra.mrb[0].mxu0 %v543
        %v1005 = vpop.f32.mrb[0].mxu0
        %v1006 = vadd.f32 0.0, %v1005
        %v1007 = vpop.f32.mrb[0].mxu0
        %v1008 = vpop.f32.mrb[0].mxu0
        %v1009 = vadd.f32 0.0, %v1008
        %v1010 = vpop.f32.mrb[0].mxu0
        %1011 = vmatprep.mubr.bf16.mxu0 0
        %1012 = vmatmul.mubr.bf16.gmra.mrb[0].mxu0 %v544
        %v1013 = vpop.f32.mrb[0].mxu0
        %v1014 = vadd.f32 0.0, %v1013
        %v1015 = vpop.f32.mrb[0].mxu0
        %v1016 = vpop.f32.mrb[0].mxu0
        %v1017 = vadd.f32 0.0, %v1016
        %v1018 = vpop.f32.mrb[0].mxu0
        %1019 = vmatprep.mubr.bf16.mxu0 0
        %1020 = vmatmul.mubr.bf16.gmra.mrb[0].mxu0 %v545
        %v1021 = vpop.f32.mrb[0].mxu0
        %v1022 = vadd.f32 0.0, %v1021
        %v1023 = vpop.f32.mrb[0].mxu0
        %v1024 = vpop.f32.mrb[0].mxu0
        %v1025 = vadd.f32 0.0, %v1024
        %v1026 = vpop.f32.mrb[0].mxu0
        %1027 = vdwg.mxu0
        %v1028 = vld [vmem:[%s5] sm:$0x1]
        %v1029 = vlaneseq
        %v1030 = vshrl.u32 %v1029, 7
        %v1031 = vsub.s32 0, %v1030
        %v1032 = vrot.slane %v1028, %v1031
        %v1033 = vadd.f32 %v709, %v1032
        %v1034 = vadd.f32 %v713, %v1032
        %v1035 = vadd.f32 %v719, %v1032
        %v1036 = vadd.f32 %v723, %v1032
        %v1037 = vadd.f32 %v729, %v1032
        %v1038 = vadd.f32 %v733, %v1032
        %v1039 = vadd.f32 %v739, %v1032
        %v1040 = vadd.f32 %v743, %v1032
        %v1041 = vadd.f32 %v749, %v1032
        %v1042 = vadd.f32 %v753, %v1032
        %v1043 = vadd.f32 %v759, %v1032
        %v1044 = vadd.f32 %v763, %v1032
        %v1045 = vadd.f32 %v769, %v1032
        %v1046 = vadd.f32 %v773, %v1032
        %v1047 = vadd.f32 %v779, %v1032
        %v1048 = vadd.f32 %v783, %v1032
        %v1049 = vadd.f32 %v789, %v1032
        %v1050 = vadd.f32 %v793, %v1032
        %v1051 = vadd.f32 %v799, %v1032
        %v1052 = vadd.f32 %v803, %v1032
        %v1053 = vadd.f32 %v809, %v1032
        %v1054 = vadd.f32 %v813, %v1032
        %v1055 = vadd.f32 %v819, %v1032
        %v1056 = vadd.f32 %v823, %v1032
        %v1057 = vadd.f32 %v829, %v1032
        %v1058 = vadd.f32 %v833, %v1032
        %v1059 = vadd.f32 %v839, %v1032
        %v1060 = vadd.f32 %v843, %v1032
        %v1061 = vadd.f32 %v849, %v1032
        %v1062 = vadd.f32 %v853, %v1032
        %v1063 = vadd.f32 %v859, %v1032
        %v1064 = vadd.f32 %v863, %v1032
        %v1065 = vld [vmem:[%s5 + $0x2] sm:$0x1]
        %v1066 = vlaneseq
        %v1067 = vshrl.u32 %v1066, 7
        %v1068 = vsub.s32 0, %v1067
        %v1069 = vrot.slane %v1065, %v1068
        %v1070 = vadd.f32 %v902, %v1069
        %v1071 = vadd.f32 %v905, %v1069
        %v1072 = vadd.f32 %v910, %v1069
        %v1073 = vadd.f32 %v913, %v1069
        %v1074 = vadd.f32 %v918, %v1069
        %v1075 = vadd.f32 %v921, %v1069
        %v1076 = vadd.f32 %v926, %v1069
        %v1077 = vadd.f32 %v929, %v1069
        %v1078 = vadd.f32 %v934, %v1069
        %v1079 = vadd.f32 %v937, %v1069
        %v1080 = vadd.f32 %v942, %v1069
        %v1081 = vadd.f32 %v945, %v1069
        %v1082 = vadd.f32 %v950, %v1069
        %v1083 = vadd.f32 %v953, %v1069
        %v1084 = vadd.f32 %v958, %v1069
        %v1085 = vadd.f32 %v961, %v1069
        %v1086 = vadd.f32 %v966, %v1069
        %v1087 = vadd.f32 %v969, %v1069
        %v1088 = vadd.f32 %v974, %v1069
        %v1089 = vadd.f32 %v977, %v1069
        %v1090 = vadd.f32 %v982, %v1069
        %v1091 = vadd.f32 %v985, %v1069
        %v1092 = vadd.f32 %v990, %v1069
        %v1093 = vadd.f32 %v993, %v1069
        %v1094 = vadd.f32 %v998, %v1069
        %v1095 = vadd.f32 %v1001, %v1069
        %v1096 = vadd.f32 %v1006, %v1069
        %v1097 = vadd.f32 %v1009, %v1069
        %v1098 = vadd.f32 %v1014, %v1069
        %v1099 = vadd.f32 %v1017, %v1069
        %v1100 = vadd.f32 %v1022, %v1069
        %v1101 = vadd.f32 %v1025, %v1069
        %v1102 = vmax.f32 %v711, %v731
        %v1103 = vmax.f32 %v715, %v735
        %v1104 = vmax.f32 %v721, %v741
        %v1105 = vmax.f32 %v725, %v745
        %v1106 = vmax.f32 %v1102, %v751
        %v1107 = vmax.f32 %v1103, %v755
        %v1108 = vmax.f32 %v1104, %v761
        %v1109 = vmax.f32 %v1105, %v765
        %v1110 = vmax.f32 %v1106, %v771
        %v1111 = vmax.f32 %v1107, %v775
        %v1112 = vmax.f32 %v1108, %v781
        %v1113 = vmax.f32 %v1109, %v785
        %v1114 = vmax.f32 %v1110, %v791
        %v1115 = vmax.f32 %v1111, %v795
        %v1116 = vmax.f32 %v1112, %v801
        %v1117 = vmax.f32 %v1113, %v805
        %v1118 = vmax.f32 %v1114, %v811
        %v1119 = vmax.f32 %v1115, %v815
        %v1120 = vmax.f32 %v1116, %v821
        %v1121 = vmax.f32 %v1117, %v825
        %v1122 = vmax.f32 %v1118, %v831
        %v1123 = vmax.f32 %v1119, %v835
        %v1124 = vmax.f32 %v1120, %v841
        %v1125 = vmax.f32 %v1121, %v845
        %v1126 = vmax.f32 %v1122, %v851
        %v1127 = vmax.f32 %v1123, %v855
        %v1128 = vmax.f32 %v1124, %v861
        %v1129 = vmax.f32 %v1125, %v865
        %v1130 = vmax.f32 %v1126, %v1127
        %v1131 = vmax.f32 %v1128, %v1129
        %v1132 = vmax.f32 %v1130, %v1131
        %v1133 = vrot.slane %v1132, 4
        %v1134 = vmax.f32 %v1132, %v1133
        %v1135 = vrot.slane %v1134, 2
        %v1136 = vmax.f32 %v1134, %v1135
        %v1137 = vrot.slane %v1136, 1
        %v1138 = vmax.f32 %v1136, %v1137
        %v1139 = vsub.f32 %v711, %v1138
        %v1140 = vsub.f32 %v715, %v1138
        %v1141 = vsub.f32 %v721, %v1138
        %v1142 = vsub.f32 %v725, %v1138
        %v1143 = vsub.f32 %v731, %v1138
        %v1144 = vsub.f32 %v735, %v1138
        %v1145 = vsub.f32 %v741, %v1138
        %v1146 = vsub.f32 %v745, %v1138
        %v1147 = vsub.f32 %v751, %v1138
        %v1148 = vsub.f32 %v755, %v1138
        %v1149 = vsub.f32 %v761, %v1138
        %v1150 = vsub.f32 %v765, %v1138
        %v1151 = vsub.f32 %v771, %v1138
        %v1152 = vsub.f32 %v775, %v1138
        %v1153 = vsub.f32 %v781, %v1138
        %v1154 = vsub.f32 %v785, %v1138
        %v1155 = vsub.f32 %v791, %v1138
        %v1156 = vsub.f32 %v795, %v1138
        %v1157 = vsub.f32 %v801, %v1138
        %v1158 = vsub.f32 %v805, %v1138
        %v1159 = vsub.f32 %v811, %v1138
        %v1160 = vsub.f32 %v815, %v1138
        %v1161 = vsub.f32 %v821, %v1138
        %v1162 = vsub.f32 %v825, %v1138
        %v1163 = vsub.f32 %v831, %v1138
        %v1164 = vsub.f32 %v835, %v1138
        %v1165 = vsub.f32 %v841, %v1138
        %v1166 = vsub.f32 %v845, %v1138
        %v1167 = vsub.f32 %v851, %v1138
        %v1168 = vsub.f32 %v855, %v1138
        %v1169 = vsub.f32 %v861, %v1138
        %v1170 = vsub.f32 %v865, %v1138
        %v1171 = vmul.f32 %v1139, 1.442695
        %v1172 = vpow.pop %v1171
        %v1173 = vmul.f32 %v1140, 1.442695
        %v1174 = vpow.pop %v1173
        %v1175 = vmul.f32 %v1141, 1.442695
        %v1176 = vpow.pop %v1175
        %v1177 = vmul.f32 %v1142, 1.442695
        %v1178 = vpow.pop %v1177
        %v1179 = vmul.f32 %v1143, 1.442695
        %v1180 = vpow.pop %v1179
        %v1181 = vmul.f32 %v1144, 1.442695
        %v1182 = vpow.pop %v1181
        %v1183 = vmul.f32 %v1145, 1.442695
        %v1184 = vpow.pop %v1183
        %v1185 = vmul.f32 %v1146, 1.442695
        %v1186 = vpow.pop %v1185
        %v1187 = vmul.f32 %v1147, 1.442695
        %v1188 = vpow.pop %v1187
        %v1189 = vmul.f32 %v1148, 1.442695
        %v1190 = vpow.pop %v1189
        %v1191 = vmul.f32 %v1149, 1.442695
        %v1192 = vpow.pop %v1191
        %v1193 = vmul.f32 %v1150, 1.442695
        %v1194 = vpow.pop %v1193
        %v1195 = vmul.f32 %v1151, 1.442695
        %v1196 = vpow.pop %v1195
        %v1197 = vmul.f32 %v1152, 1.442695
        %v1198 = vpow.pop %v1197
        %v1199 = vmul.f32 %v1153, 1.442695
        %v1200 = vpow.pop %v1199
        %v1201 = vmul.f32 %v1154, 1.442695
        %v1202 = vpow.pop %v1201
        %v1203 = vmul.f32 %v1155, 1.442695
        %v1204 = vpow.pop %v1203
        %v1205 = vmul.f32 %v1156, 1.442695
        %v1206 = vpow.pop %v1205
        %v1207 = vmul.f32 %v1157, 1.442695
        %v1208 = vpow.pop %v1207
        %v1209 = vmul.f32 %v1158, 1.442695
        %v1210 = vpow.pop %v1209
        %v1211 = vmul.f32 %v1159, 1.442695
        %v1212 = vpow.pop %v1211
        %v1213 = vmul.f32 %v1160, 1.442695
        %v1214 = vpow.pop %v1213
        %v1215 = vmul.f32 %v1161, 1.442695
        %v1216 = vpow.pop %v1215
        %v1217 = vmul.f32 %v1162, 1.442695
        %v1218 = vpow.pop %v1217
        %v1219 = vmul.f32 %v1163, 1.442695
        %v1220 = vpow.pop %v1219
        %v1221 = vmul.f32 %v1164, 1.442695
        %v1222 = vpow.pop %v1221
        %v1223 = vmul.f32 %v1165, 1.442695
        %v1224 = vpow.pop %v1223
        %v1225 = vmul.f32 %v1166, 1.442695
        %v1226 = vpow.pop %v1225
        %v1227 = vmul.f32 %v1167, 1.442695
        %v1228 = vpow.pop %v1227
        %v1229 = vmul.f32 %v1168, 1.442695
        %v1230 = vpow.pop %v1229
        %v1231 = vmul.f32 %v1169, 1.442695
        %v1232 = vpow.pop %v1231
        %v1233 = vmul.f32 %v1170, 1.442695
        %v1234 = vpow.pop %v1233
        %v1235 = vadd.f32 %v1172, %v1174
        %v1236 = vadd.f32 %v1235, %v1176
        %v1237 = vadd.f32 %v1236, %v1178
        %v1238 = vadd.f32 %v1237, %v1180
        %v1239 = vadd.f32 %v1238, %v1182
        %v1240 = vadd.f32 %v1239, %v1184
        %v1241 = vadd.f32 %v1240, %v1186
        %v1242 = vadd.f32 %v1241, %v1188
        %v1243 = vadd.f32 %v1242, %v1190
        %v1244 = vadd.f32 %v1243, %v1192
        %v1245 = vadd.f32 %v1244, %v1194
        %v1246 = vadd.f32 %v1245, %v1196
        %v1247 = vadd.f32 %v1246, %v1198
        %v1248 = vadd.f32 %v1247, %v1200
        %v1249 = vadd.f32 %v1248, %v1202
        %v1250 = vadd.f32 %v1249, %v1204
        %v1251 = vadd.f32 %v1250, %v1206
        %v1252 = vadd.f32 %v1251, %v1208
        %v1253 = vadd.f32 %v1252, %v1210
        %v1254 = vadd.f32 %v1253, %v1212
        %v1255 = vadd.f32 %v1254, %v1214
        %v1256 = vadd.f32 %v1255, %v1216
        %v1257 = vadd.f32 %v1256, %v1218
        %v1258 = vadd.f32 %v1257, %v1220
        %v1259 = vadd.f32 %v1258, %v1222
        %v1260 = vadd.f32 %v1259, %v1224
        %v1261 = vadd.f32 %v1260, %v1226
        %v1262 = vadd.f32 %v1261, %v1228
        %v1263 = vadd.f32 %v1262, %v1230
        %v1264 = vadd.f32 %v1263, %v1232
        %v1265 = vadd.f32 %v1264, %v1234
        %v1266 = vrot.slane %v1265, 4
        %v1267 = vadd.f32 %v1265, %v1266
        %v1268 = vrot.slane %v1267, 2
        %v1269 = vadd.f32 %v1267, %v1268
        %v1270 = vrot.slane %v1269, 1
        %v1271 = vadd.f32 %v1269, %v1270
        %v1272 = vrcp.pop %v1271
        %v1273 = vmul.f32 %v1172, %v1272
        %v1274 = vmul.f32 %v1174, %v1272
        %v1275 = vmul.f32 %v1176, %v1272
        %v1276 = vmul.f32 %v1178, %v1272
        %v1277 = vmul.f32 %v1180, %v1272
        %v1278 = vmul.f32 %v1182, %v1272
        %v1279 = vmul.f32 %v1184, %v1272
        %v1280 = vmul.f32 %v1186, %v1272
        %v1281 = vmul.f32 %v1188, %v1272
        %v1282 = vmul.f32 %v1190, %v1272
        %v1283 = vmul.f32 %v1192, %v1272
        %v1284 = vmul.f32 %v1194, %v1272
        %v1285 = vmul.f32 %v1196, %v1272
        %v1286 = vmul.f32 %v1198, %v1272
        %v1287 = vmul.f32 %v1200, %v1272
        %v1288 = vmul.f32 %v1202, %v1272
        %v1289 = vmul.f32 %v1204, %v1272
        %v1290 = vmul.f32 %v1206, %v1272
        %v1291 = vmul.f32 %v1208, %v1272
        %v1292 = vmul.f32 %v1210, %v1272
        %v1293 = vmul.f32 %v1212, %v1272
        %v1294 = vmul.f32 %v1214, %v1272
        %v1295 = vmul.f32 %v1216, %v1272
        %v1296 = vmul.f32 %v1218, %v1272
        %v1297 = vmul.f32 %v1220, %v1272
        %v1298 = vmul.f32 %v1222, %v1272
        %v1299 = vmul.f32 %v1224, %v1272
        %v1300 = vmul.f32 %v1226, %v1272
        %v1301 = vmul.f32 %v1228, %v1272
        %v1302 = vmul.f32 %v1230, %v1272
        %v1303 = vmul.f32 %v1232, %v1272
        %v1304 = vmul.f32 %v1234, %v1272
        %1305 = vmax.xlane.f32.xlu0 %v1033
        %v1306 = vpop.xlane.xlu0 %1305
        %1307 = vmax.xlane.f32.xlu0 %v1034
        %v1308 = vpop.xlane.xlu0 %1307
        %1309 = vmax.xlane.f32.xlu0 %v1035
        %v1310 = vpop.xlane.xlu0 %1309
        %1311 = vmax.xlane.f32.xlu0 %v1036
        %v1312 = vpop.xlane.xlu0 %1311
        %1313 = vmax.xlane.f32.xlu0 %v1037
        %v1314 = vpop.xlane.xlu0 %1313
        %1315 = vmax.xlane.f32.xlu0 %v1038
        %v1316 = vpop.xlane.xlu0 %1315
        %1317 = vmax.xlane.f32.xlu0 %v1039
        %v1318 = vpop.xlane.xlu0 %1317
        %1319 = vmax.xlane.f32.xlu0 %v1040
        %v1320 = vpop.xlane.xlu0 %1319
        %1321 = vmax.xlane.f32.xlu0 %v1041
        %v1322 = vpop.xlane.xlu0 %1321
        %1323 = vmax.xlane.f32.xlu0 %v1042
        %v1324 = vpop.xlane.xlu0 %1323
        %1325 = vmax.xlane.f32.xlu0 %v1043
        %v1326 = vpop.xlane.xlu0 %1325
        %1327 = vmax.xlane.f32.xlu0 %v1044
        %v1328 = vpop.xlane.xlu0 %1327
        %1329 = vmax.xlane.f32.xlu0 %v1045
        %v1330 = vpop.xlane.xlu0 %1329
        %1331 = vmax.xlane.f32.xlu0 %v1046
        %v1332 = vpop.xlane.xlu0 %1331
        %1333 = vmax.xlane.f32.xlu0 %v1047
        %v1334 = vpop.xlane.xlu0 %1333
        %1335 = vmax.xlane.f32.xlu0 %v1048
        %v1336 = vpop.xlane.xlu0 %1335
        %1337 = vmax.xlane.f32.xlu0 %v1049
        %v1338 = vpop.xlane.xlu0 %1337
        %1339 = vmax.xlane.f32.xlu0 %v1050
        %v1340 = vpop.xlane.xlu0 %1339
        %1341 = vmax.xlane.f32.xlu0 %v1051
        %v1342 = vpop.xlane.xlu0 %1341
        %1343 = vmax.xlane.f32.xlu0 %v1052
        %v1344 = vpop.xlane.xlu0 %1343
        %1345 = vmax.xlane.f32.xlu0 %v1053
        %v1346 = vpop.xlane.xlu0 %1345
        %1347 = vmax.xlane.f32.xlu0 %v1054
        %v1348 = vpop.xlane.xlu0 %1347
        %1349 = vmax.xlane.f32.xlu0 %v1055
        %v1350 = vpop.xlane.xlu0 %1349
        %1351 = vmax.xlane.f32.xlu0 %v1056
        %v1352 = vpop.xlane.xlu0 %1351
        %1353 = vmax.xlane.f32.xlu0 %v1057
        %v1354 = vpop.xlane.xlu0 %1353
        %1355 = vmax.xlane.f32.xlu0 %v1058
        %v1356 = vpop.xlane.xlu0 %1355
        %1357 = vmax.xlane.f32.xlu0 %v1059
        %v1358 = vpop.xlane.xlu0 %1357
        %1359 = vmax.xlane.f32.xlu0 %v1060
        %v1360 = vpop.xlane.xlu0 %1359
        %1361 = vmax.xlane.f32.xlu0 %v1061
        %v1362 = vpop.xlane.xlu0 %1361
        %1363 = vmax.xlane.f32.xlu0 %v1062
        %v1364 = vpop.xlane.xlu0 %1363
        %1365 = vmax.xlane.f32.xlu0 %v1063
        %v1366 = vpop.xlane.xlu0 %1365
        %1367 = vmax.xlane.f32.xlu0 %v1064
        %v1368 = vpop.xlane.xlu0 %1367
        %v1369 = vsub.f32 %v1033, %v1306
        %v1370 = vsub.f32 %v1034, %v1308
        %v1371 = vsub.f32 %v1035, %v1310
        %v1372 = vsub.f32 %v1036, %v1312
        %v1373 = vsub.f32 %v1037, %v1314
        %v1374 = vsub.f32 %v1038, %v1316
        %v1375 = vsub.f32 %v1039, %v1318
        %v1376 = vsub.f32 %v1040, %v1320
        %v1377 = vsub.f32 %v1041, %v1322
        %v1378 = vsub.f32 %v1042, %v1324
        %v1379 = vsub.f32 %v1043, %v1326
        %v1380 = vsub.f32 %v1044, %v1328
        %v1381 = vsub.f32 %v1045, %v1330
        %v1382 = vsub.f32 %v1046, %v1332
        %v1383 = vsub.f32 %v1047, %v1334
        %v1384 = vsub.f32 %v1048, %v1336
        %v1385 = vsub.f32 %v1049, %v1338
        %v1386 = vsub.f32 %v1050, %v1340
        %v1387 = vsub.f32 %v1051, %v1342
        %v1388 = vsub.f32 %v1052, %v1344
        %v1389 = vsub.f32 %v1053, %v1346
        %v1390 = vsub.f32 %v1054, %v1348
        %v1391 = vsub.f32 %v1055, %v1350
        %v1392 = vsub.f32 %v1056, %v1352
        %v1393 = vsub.f32 %v1057, %v1354
        %v1394 = vsub.f32 %v1058, %v1356
        %v1395 = vsub.f32 %v1059, %v1358
        %v1396 = vsub.f32 %v1060, %v1360
        %v1397 = vsub.f32 %v1061, %v1362
        %v1398 = vsub.f32 %v1062, %v1364
        %v1399 = vsub.f32 %v1063, %v1366
        %v1400 = vsub.f32 %v1064, %v1368
        %v1401 = vmul.f32 %v1369, 1.442695
        %v1402 = vpow.pop %v1401
        %v1403 = vmul.f32 %v1370, 1.442695
        %v1404 = vpow.pop %v1403
        %v1405 = vmul.f32 %v1371, 1.442695
        %v1406 = vpow.pop %v1405
        %v1407 = vmul.f32 %v1372, 1.442695
        %v1408 = vpow.pop %v1407
        %v1409 = vmul.f32 %v1373, 1.442695
        %v1410 = vpow.pop %v1409
        %v1411 = vmul.f32 %v1374, 1.442695
        %v1412 = vpow.pop %v1411
        %v1413 = vmul.f32 %v1375, 1.442695
        %v1414 = vpow.pop %v1413
        %v1415 = vmul.f32 %v1376, 1.442695
        %v1416 = vpow.pop %v1415
        %v1417 = vmul.f32 %v1377, 1.442695
        %v1418 = vpow.pop %v1417
        %v1419 = vmul.f32 %v1378, 1.442695
        %v1420 = vpow.pop %v1419
        %v1421 = vmul.f32 %v1379, 1.442695
        %v1422 = vpow.pop %v1421
        %v1423 = vmul.f32 %v1380, 1.442695
        %v1424 = vpow.pop %v1423
        %v1425 = vmul.f32 %v1381, 1.442695
        %v1426 = vpow.pop %v1425
        %v1427 = vmul.f32 %v1382, 1.442695
        %v1428 = vpow.pop %v1427
        %v1429 = vmul.f32 %v1383, 1.442695
        %v1430 = vpow.pop %v1429
        %v1431 = vmul.f32 %v1384, 1.442695
        %v1432 = vpow.pop %v1431
        %v1433 = vmul.f32 %v1385, 1.442695
        %v1434 = vpow.pop %v1433
        %v1435 = vmul.f32 %v1386, 1.442695
        %v1436 = vpow.pop %v1435
        %v1437 = vmul.f32 %v1387, 1.442695
        %v1438 = vpow.pop %v1437
        %v1439 = vmul.f32 %v1388, 1.442695
        %v1440 = vpow.pop %v1439
        %v1441 = vmul.f32 %v1389, 1.442695
        %v1442 = vpow.pop %v1441
        %v1443 = vmul.f32 %v1390, 1.442695
        %v1444 = vpow.pop %v1443
        %v1445 = vmul.f32 %v1391, 1.442695
        %v1446 = vpow.pop %v1445
        %v1447 = vmul.f32 %v1392, 1.442695
        %v1448 = vpow.pop %v1447
        %v1449 = vmul.f32 %v1393, 1.442695
        %v1450 = vpow.pop %v1449
        %v1451 = vmul.f32 %v1394, 1.442695
        %v1452 = vpow.pop %v1451
        %v1453 = vmul.f32 %v1395, 1.442695
        %v1454 = vpow.pop %v1453
        %v1455 = vmul.f32 %v1396, 1.442695
        %v1456 = vpow.pop %v1455
        %v1457 = vmul.f32 %v1397, 1.442695
        %v1458 = vpow.pop %v1457
        %v1459 = vmul.f32 %v1398, 1.442695
        %v1460 = vpow.pop %v1459
        %v1461 = vmul.f32 %v1399, 1.442695
        %v1462 = vpow.pop %v1461
        %v1463 = vmul.f32 %v1400, 1.442695
        %v1464 = vpow.pop %v1463
        %v1465 = vpack.c.bf16 %v1404, %v1402
        %v1466 = vpack.c.bf16 %v1408, %v1406
        %v1467 = vpack.c.bf16 %v1412, %v1410
        %v1468 = vpack.c.bf16 %v1416, %v1414
        %v1469 = vpack.c.bf16 %v1420, %v1418
        %v1470 = vpack.c.bf16 %v1424, %v1422
        %v1471 = vpack.c.bf16 %v1428, %v1426
        %v1472 = vpack.c.bf16 %v1432, %v1430
        %v1473 = vpack.c.bf16 %v1436, %v1434
        %v1474 = vpack.c.bf16 %v1440, %v1438
        %v1475 = vpack.c.bf16 %v1444, %v1442
        %v1476 = vpack.c.bf16 %v1448, %v1446
        %v1477 = vpack.c.bf16 %v1452, %v1450
        %v1478 = vpack.c.bf16 %v1456, %v1454
        %v1479 = vpack.c.bf16 %v1460, %v1458
        %v1480 = vpack.c.bf16 %v1464, %v1462
        %v1497 = vunpack.c.l.b16 %v450
        %v1498 = vunpack.c.l.b16 %v451
        %v1499 = vunpack.c.l.b16 %v452
        %v1500 = vunpack.c.l.b16 %v453
        %v1501 = vunpack.c.l.b16 %v454
        %v1502 = vunpack.c.l.b16 %v455
        %v1503 = vunpack.c.l.b16 %v456
        %v1504 = vunpack.c.l.b16 %v457
        %v1505 = vunpack.c.l.b16 %v458
        %v1506 = vunpack.c.l.b16 %v459
        %v1507 = vunpack.c.l.b16 %v460
        %v1508 = vunpack.c.l.b16 %v461
        %v1509 = vunpack.c.l.b16 %v462
        %v1510 = vunpack.c.l.b16 %v463
        %v1511 = vunpack.c.l.b16 %v464
        %v1512 = vunpack.c.l.b16 %v465
        %v1513 = vpack.c.b16 %v1498, %v1497
        %v1514 = vpack.c.b16 %v1500, %v1499
        %v1515 = vpack.c.b16 %v1502, %v1501
        %v1516 = vpack.c.b16 %v1504, %v1503
        %v1517 = vpack.c.b16 %v1506, %v1505
        %v1518 = vpack.c.b16 %v1508, %v1507
        %v1519 = vpack.c.b16 %v1510, %v1509
        %v1520 = vpack.c.b16 %v1512, %v1511
        %1529 = vmatprep.subr.bf16.mxu0 0
        %1530 = vmatpush1.bf16.msra.mxu0 %v1513
        %1531 = vmatprep.subr.bf16.mxu0 0
        %1532 = vmatpush1.bf16.msra.mxu0 %v1514
        %1533 = vmatprep.subr.bf16.mxu0 0
        %1534 = vmatpush1.bf16.msra.mxu0 %v1515
        %1535 = vmatprep.subr.bf16.mxu0 0
        %1536 = vmatpush1.bf16.msra.mxu0 %v1516
        %1537 = vmatprep.subr.bf16.mxu0 0
        %1538 = vmatpush1.bf16.msra.mxu0 %v1517
        %1539 = vmatprep.subr.bf16.mxu0 0
        %1540 = vmatpush1.bf16.msra.mxu0 %v1518
        %1541 = vmatprep.subr.bf16.mxu0 0
        %1542 = vmatpush1.bf16.msra.mxu0 %v1519
        %1543 = vmatprep.subr.bf16.mxu0 0
        %1544 = vmatpush1.bf16.msra.mxu0 %v1520
        %1545 = vmatprep.subr.bf16.mxu0 0
        %1546 = vmatpush1.bf16.msra.mxu0 0
        %1547 = vmatprep.subr.bf16.mxu0 0
        %1548 = vmatpush1.bf16.msra.mxu0 0
        %1549 = vmatprep.subr.bf16.mxu0 0
        %1550 = vmatpush1.bf16.msra.mxu0 0
        %1551 = vmatprep.subr.bf16.mxu0 0
        %1552 = vmatpush1.bf16.msra.mxu0 0
        %1553 = vmatprep.subr.bf16.mxu0 0
        %1554 = vmatpush1.bf16.msra.mxu0 0
        %1555 = vmatprep.subr.bf16.mxu0 0
        %1556 = vmatpush1.bf16.msra.mxu0 0
        %1557 = vmatprep.subr.bf16.mxu0 0
        %1558 = vmatpush1.bf16.msra.mxu0 0
        %1559 = vmatprep.subr.bf16.mxu0 0
        %1560 = vmatpush1.bf16.msra.mxu0 0
        %1561 = vmatprep.mubr.bf16.mxu0 0
        %1562 = vmatmul.mubr.bf16.gmra.mrb[0].mxu0 %v1465
        %v1563 = vpop.f32.mrb[0].mxu0
        %v1564 = vadd.f32 0.0, %v1563
        %v1565 = vpop.f32.mrb[0].mxu0
        %v1566 = vpop.f32.mrb[0].mxu0
        %v1567 = vadd.f32 0.0, %v1566
        %v1568 = vpop.f32.mrb[0].mxu0
        %1569 = vmatprep.mubr.bf16.mxu0 0
        %1570 = vmatmul.mubr.bf16.gmra.mrb[0].mxu0 %v1466
        %v1571 = vpop.f32.mrb[0].mxu0
        %v1572 = vadd.f32 0.0, %v1571
        %v1573 = vpop.f32.mrb[0].mxu0
        %v1574 = vpop.f32.mrb[0].mxu0
        %v1575 = vadd.f32 0.0, %v1574
        %v1576 = vpop.f32.mrb[0].mxu0
        %1577 = vmatprep.mubr.bf16.mxu0 0
        %1578 = vmatmul.mubr.bf16.gmra.mrb[0].mxu0 %v1467
        %v1579 = vpop.f32.mrb[0].mxu0
        %v1580 = vadd.f32 0.0, %v1579
        %v1581 = vpop.f32.mrb[0].mxu0
        %v1582 = vpop.f32.mrb[0].mxu0
        %v1583 = vadd.f32 0.0, %v1582
        %v1584 = vpop.f32.mrb[0].mxu0
        %1585 = vmatprep.mubr.bf16.mxu0 0
        %1586 = vmatmul.mubr.bf16.gmra.mrb[0].mxu0 %v1468
        %v1587 = vpop.f32.mrb[0].mxu0
        %v1588 = vadd.f32 0.0, %v1587
        %v1589 = vpop.f32.mrb[0].mxu0
        %v1590 = vpop.f32.mrb[0].mxu0
        %v1591 = vadd.f32 0.0, %v1590
        %v1592 = vpop.f32.mrb[0].mxu0
        %1593 = vmatprep.mubr.bf16.mxu0 0
        %1594 = vmatmul.mubr.bf16.gmra.mrb[0].mxu0 %v1469
        %v1595 = vpop.f32.mrb[0].mxu0
        %v1596 = vadd.f32 0.0, %v1595
        %v1597 = vpop.f32.mrb[0].mxu0
        %v1598 = vpop.f32.mrb[0].mxu0
        %v1599 = vadd.f32 0.0, %v1598
        %v1600 = vpop.f32.mrb[0].mxu0
        %1601 = vmatprep.mubr.bf16.mxu0 0
        %1602 = vmatmul.mubr.bf16.gmra.mrb[0].mxu0 %v1470
        %v1603 = vpop.f32.mrb[0].mxu0
        %v1604 = vadd.f32 0.0, %v1603
        %v1605 = vpop.f32.mrb[0].mxu0
        %v1606 = vpop.f32.mrb[0].mxu0
        %v1607 = vadd.f32 0.0, %v1606
        %v1608 = vpop.f32.mrb[0].mxu0
        %1609 = vmatprep.mubr.bf16.mxu0 0
        %1610 = vmatmul.mubr.bf16.gmra.mrb[0].mxu0 %v1471
        %v1611 = vpop.f32.mrb[0].mxu0
        %v1612 = vadd.f32 0.0, %v1611
        %v1613 = vpop.f32.mrb[0].mxu0
        %v1614 = vpop.f32.mrb[0].mxu0
        %v1615 = vadd.f32 0.0, %v1614
        %v1616 = vpop.f32.mrb[0].mxu0
        %1617 = vmatprep.mubr.bf16.mxu0 0
        %1618 = vmatmul.mubr.bf16.gmra.mrb[0].mxu0 %v1472
        %v1619 = vpop.f32.mrb[0].mxu0
        %v1620 = vadd.f32 0.0, %v1619
        %v1621 = vpop.f32.mrb[0].mxu0
        %v1622 = vpop.f32.mrb[0].mxu0
        %v1623 = vadd.f32 0.0, %v1622
        %v1624 = vpop.f32.mrb[0].mxu0
        %1625 = vmatprep.mubr.bf16.mxu0 0
        %1626 = vmatmul.mubr.bf16.gmra.mrb[0].mxu0 %v1473
        %v1627 = vpop.f32.mrb[0].mxu0
        %v1628 = vadd.f32 0.0, %v1627
        %v1629 = vpop.f32.mrb[0].mxu0
        %v1630 = vpop.f32.mrb[0].mxu0
        %v1631 = vadd.f32 0.0, %v1630
        %v1632 = vpop.f32.mrb[0].mxu0
        %1633 = vmatprep.mubr.bf16.mxu0 0
        %1634 = vmatmul.mubr.bf16.gmra.mrb[0].mxu0 %v1474
        %v1635 = vpop.f32.mrb[0].mxu0
        %v1636 = vadd.f32 0.0, %v1635
        %v1637 = vpop.f32.mrb[0].mxu0
        %v1638 = vpop.f32.mrb[0].mxu0
        %v1639 = vadd.f32 0.0, %v1638
        %v1640 = vpop.f32.mrb[0].mxu0
        %1641 = vmatprep.mubr.bf16.mxu0 0
        %1642 = vmatmul.mubr.bf16.gmra.mrb[0].mxu0 %v1475
        %v1643 = vpop.f32.mrb[0].mxu0
        %v1644 = vadd.f32 0.0, %v1643
        %v1645 = vpop.f32.mrb[0].mxu0
        %v1646 = vpop.f32.mrb[0].mxu0
        %v1647 = vadd.f32 0.0, %v1646
        %v1648 = vpop.f32.mrb[0].mxu0
        %1649 = vmatprep.mubr.bf16.mxu0 0
        %1650 = vmatmul.mubr.bf16.gmra.mrb[0].mxu0 %v1476
        %v1651 = vpop.f32.mrb[0].mxu0
        %v1652 = vadd.f32 0.0, %v1651
        %v1653 = vpop.f32.mrb[0].mxu0
        %v1654 = vpop.f32.mrb[0].mxu0
        %v1655 = vadd.f32 0.0, %v1654
        %v1656 = vpop.f32.mrb[0].mxu0
        %1657 = vmatprep.mubr.bf16.mxu0 0
        %1658 = vmatmul.mubr.bf16.gmra.mrb[0].mxu0 %v1477
        %v1659 = vpop.f32.mrb[0].mxu0
        %v1660 = vadd.f32 0.0, %v1659
        %v1661 = vpop.f32.mrb[0].mxu0
        %v1662 = vpop.f32.mrb[0].mxu0
        %v1663 = vadd.f32 0.0, %v1662
        %v1664 = vpop.f32.mrb[0].mxu0
        %1665 = vmatprep.mubr.bf16.mxu0 0
        %1666 = vmatmul.mubr.bf16.gmra.mrb[0].mxu0 %v1478
        %v1667 = vpop.f32.mrb[0].mxu0
        %v1668 = vadd.f32 0.0, %v1667
        %v1669 = vpop.f32.mrb[0].mxu0
        %v1670 = vpop.f32.mrb[0].mxu0
        %v1671 = vadd.f32 0.0, %v1670
        %v1672 = vpop.f32.mrb[0].mxu0
        %1673 = vmatprep.mubr.bf16.mxu0 0
        %1674 = vmatmul.mubr.bf16.gmra.mrb[0].mxu0 %v1479
        %v1675 = vpop.f32.mrb[0].mxu0
        %v1676 = vadd.f32 0.0, %v1675
        %v1677 = vpop.f32.mrb[0].mxu0
        %v1678 = vpop.f32.mrb[0].mxu0
        %v1679 = vadd.f32 0.0, %v1678
        %v1680 = vpop.f32.mrb[0].mxu0
        %1681 = vmatprep.mubr.bf16.mxu0 0
        %1682 = vmatmul.mubr.bf16.gmra.mrb[0].mxu0 %v1480
        %v1683 = vpop.f32.mrb[0].mxu0
        %v1684 = vadd.f32 0.0, %v1683
        %v1685 = vpop.f32.mrb[0].mxu0
        %v1686 = vpop.f32.mrb[0].mxu0
        %v1687 = vadd.f32 0.0, %v1686
        %v1688 = vpop.f32.mrb[0].mxu0
        %1689 = vdwg.mxu0
        %v1690 = vrcp.pop %v1564
        %v1691 = vrcp.pop %v1567
        %v1692 = vrcp.pop %v1572
        %v1693 = vrcp.pop %v1575
        %v1694 = vrcp.pop %v1580
        %v1695 = vrcp.pop %v1583
        %v1696 = vrcp.pop %v1588
        %v1697 = vrcp.pop %v1591
        %v1698 = vrcp.pop %v1596
        %v1699 = vrcp.pop %v1599
        %v1700 = vrcp.pop %v1604
        %v1701 = vrcp.pop %v1607
        %v1702 = vrcp.pop %v1612
        %v1703 = vrcp.pop %v1615
        %v1704 = vrcp.pop %v1620
        %v1705 = vrcp.pop %v1623
        %v1706 = vrcp.pop %v1628
        %v1707 = vrcp.pop %v1631
        %v1708 = vrcp.pop %v1636
        %v1709 = vrcp.pop %v1639
        %v1710 = vrcp.pop %v1644
        %v1711 = vrcp.pop %v1647
        %v1712 = vrcp.pop %v1652
        %v1713 = vrcp.pop %v1655
        %v1714 = vrcp.pop %v1660
        %v1715 = vrcp.pop %v1663
        %v1716 = vrcp.pop %v1668
        %v1717 = vrcp.pop %v1671
        %v1718 = vrcp.pop %v1676
        %v1719 = vrcp.pop %v1679
        %v1720 = vrcp.pop %v1684
        %v1721 = vrcp.pop %v1687
        %v1722 = vmul.f32 %v1402, %v1690
        %v1723 = vmul.f32 %v1404, %v1691
        %v1724 = vmul.f32 %v1406, %v1692
        %v1725 = vmul.f32 %v1408, %v1693
        %v1726 = vmul.f32 %v1410, %v1694
        %v1727 = vmul.f32 %v1412, %v1695
        %v1728 = vmul.f32 %v1414, %v1696
        %v1729 = vmul.f32 %v1416, %v1697
        %v1730 = vmul.f32 %v1418, %v1698
        %v1731 = vmul.f32 %v1420, %v1699
        %v1732 = vmul.f32 %v1422, %v1700
        %v1733 = vmul.f32 %v1424, %v1701
        %v1734 = vmul.f32 %v1426, %v1702
        %v1735 = vmul.f32 %v1428, %v1703
        %v1736 = vmul.f32 %v1430, %v1704
        %v1737 = vmul.f32 %v1432, %v1705
        %v1738 = vmul.f32 %v1434, %v1706
        %v1739 = vmul.f32 %v1436, %v1707
        %v1740 = vmul.f32 %v1438, %v1708
        %v1741 = vmul.f32 %v1440, %v1709
        %v1742 = vmul.f32 %v1442, %v1710
        %v1743 = vmul.f32 %v1444, %v1711
        %v1744 = vmul.f32 %v1446, %v1712
        %v1745 = vmul.f32 %v1448, %v1713
        %v1746 = vmul.f32 %v1450, %v1714
        %v1747 = vmul.f32 %v1452, %v1715
        %v1748 = vmul.f32 %v1454, %v1716
        %v1749 = vmul.f32 %v1456, %v1717
        %v1750 = vmul.f32 %v1458, %v1718
        %v1751 = vmul.f32 %v1460, %v1719
        %v1752 = vmul.f32 %v1462, %v1720
        %v1753 = vmul.f32 %v1464, %v1721
        %v1754 = vpack.c.bf16 %v1274, %v1273
        %v1755 = vpack.c.bf16 %v1276, %v1275
        %v1756 = vpack.c.bf16 %v1278, %v1277
        %v1757 = vpack.c.bf16 %v1280, %v1279
        %v1758 = vpack.c.bf16 %v1282, %v1281
        %v1759 = vpack.c.bf16 %v1284, %v1283
        %v1760 = vpack.c.bf16 %v1286, %v1285
        %v1761 = vpack.c.bf16 %v1288, %v1287
        %v1762 = vpack.c.bf16 %v1290, %v1289
        %v1763 = vpack.c.bf16 %v1292, %v1291
        %v1764 = vpack.c.bf16 %v1294, %v1293
        %v1765 = vpack.c.bf16 %v1296, %v1295
        %v1766 = vpack.c.bf16 %v1298, %v1297
        %v1767 = vpack.c.bf16 %v1300, %v1299
        %v1768 = vpack.c.bf16 %v1302, %v1301
        %v1769 = vpack.c.bf16 %v1304, %v1303
        %v1770 = vpack.c.bf16 %v1071, %v1070
        %v1771 = vpack.c.bf16 %v1073, %v1072
        %v1772 = vpack.c.bf16 %v1075, %v1074
        %v1773 = vpack.c.bf16 %v1077, %v1076
        %v1774 = vpack.c.bf16 %v1079, %v1078
        %v1775 = vpack.c.bf16 %v1081, %v1080
        %v1776 = vpack.c.bf16 %v1083, %v1082
        %v1777 = vpack.c.bf16 %v1085, %v1084
        %v1778 = vpack.c.bf16 %v1087, %v1086
        %v1779 = vpack.c.bf16 %v1089, %v1088
        %v1780 = vpack.c.bf16 %v1091, %v1090
        %v1781 = vpack.c.bf16 %v1093, %v1092
        %v1782 = vpack.c.bf16 %v1095, %v1094
        %v1783 = vpack.c.bf16 %v1097, %v1096
        %v1784 = vpack.c.bf16 %v1099, %v1098
        %v1785 = vpack.c.bf16 %v1101, %v1100
        %1786 = vxpose.xlu0.c.b16.start [1/8] %v1754, 128
        %1787 = vxpose.xlu0.c.b16.cont [2/8] %v1755, 128
        %1788 = vxpose.xlu0.c.b16.cont [3/8] %v1756, 128
        %1789 = vxpose.xlu0.c.b16.cont [4/8] %v1757, 128
        %1790 = vxpose.xlu0.c.b16.cont [5/8] %v1758, 128
        %1791 = vxpose.xlu0.c.b16.cont [6/8] %v1759, 128
        %1792 = vxpose.xlu0.c.b16.cont [7/8] %v1760, 128
        %1793 = vxpose.xlu0.c.b16.end [8/8] %v1761, 128
        %v1794 = vpop.trf.xlu0
        %v1795 = vpop.trf.xlu0
        %v1796 = vpop.trf.xlu0
        %v1797 = vpop.trf.xlu0
        %v1798 = vpop.trf.xlu0
        %v1799 = vpop.trf.xlu0
        %v1800 = vpop.trf.xlu0
        %v1801 = vpop.trf.xlu0
        %1802 = vxpose.xlu0.c.b16.start [1/8] %v1762, 128
        %1803 = vxpose.xlu0.c.b16.cont [2/8] %v1763, 128
        %1804 = vxpose.xlu0.c.b16.cont [3/8] %v1764, 128
        %1805 = vxpose.xlu0.c.b16.cont [4/8] %v1765, 128
        %1806 = vxpose.xlu0.c.b16.cont [5/8] %v1766, 128
        %1807 = vxpose.xlu0.c.b16.cont [6/8] %v1767, 128
        %1808 = vxpose.xlu0.c.b16.cont [7/8] %v1768, 128
        %1809 = vxpose.xlu0.c.b16.end [8/8] %v1769, 128
        %v1810 = vpop.trf.xlu0
        %v1811 = vpop.trf.xlu0
        %v1812 = vpop.trf.xlu0
        %v1813 = vpop.trf.xlu0
        %v1814 = vpop.trf.xlu0
        %v1815 = vpop.trf.xlu0
        %v1816 = vpop.trf.xlu0
        %v1817 = vpop.trf.xlu0
        %1818 = vmatprep.subr.bf16.mxu0 0
        %1819 = vmatpush1.bf16.msra.mxu0 %v1770
        %1820 = vmatprep.subr.bf16.mxu0 0
        %1821 = vmatpush1.bf16.msra.mxu0 %v1771
        %1822 = vmatprep.subr.bf16.mxu0 0
        %1823 = vmatpush1.bf16.msra.mxu0 %v1772
        %1824 = vmatprep.subr.bf16.mxu0 0
        %1825 = vmatpush1.bf16.msra.mxu0 %v1773
        %1826 = vmatprep.subr.bf16.mxu0 0
        %1827 = vmatpush1.bf16.msra.mxu0 %v1774
        %1828 = vmatprep.subr.bf16.mxu0 0
        %1829 = vmatpush1.bf16.msra.mxu0 %v1775
        %1830 = vmatprep.subr.bf16.mxu0 0
        %1831 = vmatpush1.bf16.msra.mxu0 %v1776
        %1832 = vmatprep.subr.bf16.mxu0 0
        %1833 = vmatpush1.bf16.msra.mxu0 %v1777
        %1834 = vmatprep.subr.bf16.mxu0 0
        %1835 = vmatpush1.bf16.msra.mxu0 %v1778
        %1836 = vmatprep.subr.bf16.mxu0 0
        %1837 = vmatpush1.bf16.msra.mxu0 %v1779
        %1838 = vmatprep.subr.bf16.mxu0 0
        %1839 = vmatpush1.bf16.msra.mxu0 %v1780
        %1840 = vmatprep.subr.bf16.mxu0 0
        %1841 = vmatpush1.bf16.msra.mxu0 %v1781
        %1842 = vmatprep.subr.bf16.mxu0 0
        %1843 = vmatpush1.bf16.msra.mxu0 %v1782
        %1844 = vmatprep.subr.bf16.mxu0 0
        %1845 = vmatpush1.bf16.msra.mxu0 %v1783
        %1846 = vmatprep.subr.bf16.mxu0 0
        %1847 = vmatpush1.bf16.msra.mxu0 %v1784
        %1848 = vmatprep.subr.bf16.mxu0 0
        %1849 = vmatpush1.bf16.msra.mxu0 %v1785
        %1850 = vmatprep.mubr.bf16.mxu0 %v1810
        %1851 = vmatmul.mubr.bf16.gmra.mrb[0].mxu0 %v1794
        %v1852 = vpop.f32.mrb[0].mxu0
        %v1853 = vadd.f32 0.0, %v1852
        %v1854 = vpop.f32.mrb[0].mxu0
        %v1855 = vpop.f32.mrb[0].mxu0
        %v1856 = vadd.f32 0.0, %v1855
        %v1857 = vpop.f32.mrb[0].mxu0
        %1858 = vmatprep.mubr.bf16.mxu0 %v1811
        %1859 = vmatmul.mubr.bf16.gmra.mrb[0].mxu0 %v1795
        %v1860 = vpop.f32.mrb[0].mxu0
        %v1861 = vadd.f32 0.0, %v1860
        %v1862 = vpop.f32.mrb[0].mxu0
        %v1863 = vpop.f32.mrb[0].mxu0
        %v1864 = vadd.f32 0.0, %v1863
        %v1865 = vpop.f32.mrb[0].mxu0
        %1866 = vmatprep.mubr.bf16.mxu0 %v1812
        %1867 = vmatmul.mubr.bf16.gmra.mrb[0].mxu0 %v1796
        %v1868 = vpop.f32.mrb[0].mxu0
        %v1869 = vadd.f32 0.0, %v1868
        %v1870 = vpop.f32.mrb[0].mxu0
        %v1871 = vpop.f32.mrb[0].mxu0
        %v1872 = vadd.f32 0.0, %v1871
        %v1873 = vpop.f32.mrb[0].mxu0
        %1874 = vmatprep.mubr.bf16.mxu0 %v1813
        %1875 = vmatmul.mubr.bf16.gmra.mrb[0].mxu0 %v1797
        %v1876 = vpop.f32.mrb[0].mxu0
        %v1877 = vadd.f32 0.0, %v1876
        %v1878 = vpop.f32.mrb[0].mxu0
        %v1879 = vpop.f32.mrb[0].mxu0
        %v1880 = vadd.f32 0.0, %v1879
        %v1881 = vpop.f32.mrb[0].mxu0
        %1882 = vmatprep.mubr.bf16.mxu0 %v1814
        %1883 = vmatmul.mubr.bf16.gmra.mrb[0].mxu0 %v1798
        %v1884 = vpop.f32.mrb[0].mxu0
        %v1885 = vadd.f32 0.0, %v1884
        %v1886 = vpop.f32.mrb[0].mxu0
        %v1887 = vpop.f32.mrb[0].mxu0
        %v1888 = vadd.f32 0.0, %v1887
        %v1889 = vpop.f32.mrb[0].mxu0
        %1890 = vmatprep.mubr.bf16.mxu0 %v1815
        %1891 = vmatmul.mubr.bf16.gmra.mrb[0].mxu0 %v1799
        %v1892 = vpop.f32.mrb[0].mxu0
        %v1893 = vadd.f32 0.0, %v1892
        %v1894 = vpop.f32.mrb[0].mxu0
        %v1895 = vpop.f32.mrb[0].mxu0
        %v1896 = vadd.f32 0.0, %v1895
        %v1897 = vpop.f32.mrb[0].mxu0
        %1898 = vmatprep.mubr.bf16.mxu0 %v1816
        %1899 = vmatmul.mubr.bf16.gmra.mrb[0].mxu0 %v1800
        %v1900 = vpop.f32.mrb[0].mxu0
        %v1901 = vadd.f32 0.0, %v1900
        %v1902 = vpop.f32.mrb[0].mxu0
        %v1903 = vpop.f32.mrb[0].mxu0
        %v1904 = vadd.f32 0.0, %v1903
        %v1905 = vpop.f32.mrb[0].mxu0
        %1906 = vmatprep.mubr.bf16.mxu0 %v1817
        %1907 = vmatmul.mubr.bf16.gmra.mrb[0].mxu0 %v1801
        %v1908 = vpop.f32.mrb[0].mxu0
        %v1909 = vadd.f32 0.0, %v1908
        %v1910 = vpop.f32.mrb[0].mxu0
        %v1911 = vpop.f32.mrb[0].mxu0
        %v1912 = vadd.f32 0.0, %v1911
        %v1913 = vpop.f32.mrb[0].mxu0
        %1914 = vdwg.mxu0
        %v1915 = vpack.c.bf16 %v1856, %v1853
        %v1916 = vpack.c.bf16 %v1864, %v1861
        %v1917 = vpack.c.bf16 %v1872, %v1869
        %v1918 = vpack.c.bf16 %v1880, %v1877
        %v1919 = vpack.c.bf16 %v1888, %v1885
        %v1920 = vpack.c.bf16 %v1896, %v1893
        %v1921 = vpack.c.bf16 %v1904, %v1901
        %v1922 = vpack.c.bf16 %v1912, %v1909
        %v1923 = vmul.bf16 %v1915, %v1513
        %v1924 = vmul.bf16 %v1916, %v1514
        %v1925 = vmul.bf16 %v1917, %v1515
        %v1926 = vmul.bf16 %v1918, %v1516
        %v1927 = vmul.bf16 %v1919, %v1517
        %v1928 = vmul.bf16 %v1920, %v1518
        %v1929 = vmul.bf16 %v1921, %v1519
        %v1930 = vmul.bf16 %v1922, %v1520
        %v1931 = vpack.c.bf16 %v1723, %v1722
        %v1932 = vpack.c.bf16 %v1725, %v1724
        %v1933 = vpack.c.bf16 %v1727, %v1726
        %v1934 = vpack.c.bf16 %v1729, %v1728
        %v1935 = vpack.c.bf16 %v1731, %v1730
        %v1936 = vpack.c.bf16 %v1733, %v1732
        %v1937 = vpack.c.bf16 %v1735, %v1734
        %v1938 = vpack.c.bf16 %v1737, %v1736
        %v1939 = vpack.c.bf16 %v1739, %v1738
        %v1940 = vpack.c.bf16 %v1741, %v1740
        %v1941 = vpack.c.bf16 %v1743, %v1742
        %v1942 = vpack.c.bf16 %v1745, %v1744
        %v1943 = vpack.c.bf16 %v1747, %v1746
        %v1944 = vpack.c.bf16 %v1749, %v1748
        %v1945 = vpack.c.bf16 %v1751, %v1750
        %v1946 = vpack.c.bf16 %v1753, %v1752
        %1947 = vmatprep.subr.bf16.mxu0 0
        %1948 = vmatpush1.bf16.msra.mxu0 %v1923
        %1949 = vmatprep.subr.bf16.mxu0 0
        %1950 = vmatpush1.bf16.msra.mxu0 %v1924
        %1951 = vmatprep.subr.bf16.mxu0 0
        %1952 = vmatpush1.bf16.msra.mxu0 %v1925
        %1953 = vmatprep.subr.bf16.mxu0 0
        %1954 = vmatpush1.bf16.msra.mxu0 %v1926
        %1955 = vmatprep.subr.bf16.mxu0 0
        %1956 = vmatpush1.bf16.msra.mxu0 %v1927
        %1957 = vmatprep.subr.bf16.mxu0 0
        %1958 = vmatpush1.bf16.msra.mxu0 %v1928
        %1959 = vmatprep.subr.bf16.mxu0 0
        %1960 = vmatpush1.bf16.msra.mxu0 %v1929
        %1961 = vmatprep.subr.bf16.mxu0 0
        %1962 = vmatpush1.bf16.msra.mxu0 %v1930
        %1963 = vmatprep.subr.bf16.mxu0 0
        %1964 = vmatpush1.bf16.msra.mxu0 0
        %1965 = vmatprep.subr.bf16.mxu0 0
        %1966 = vmatpush1.bf16.msra.mxu0 0
        %1967 = vmatprep.subr.bf16.mxu0 0
        %1968 = vmatpush1.bf16.msra.mxu0 0
        %1969 = vmatprep.subr.bf16.mxu0 0
        %1970 = vmatpush1.bf16.msra.mxu0 0
        %1971 = vmatprep.subr.bf16.mxu0 0
        %1972 = vmatpush1.bf16.msra.mxu0 0
        %1973 = vmatprep.subr.bf16.mxu0 0
        %1974 = vmatpush1.bf16.msra.mxu0 0
        %1975 = vmatprep.subr.bf16.mxu0 0
        %1976 = vmatpush1.bf16.msra.mxu0 0
        %1977 = vmatprep.subr.bf16.mxu0 0
        %1978 = vmatpush1.bf16.msra.mxu0 0
        %1979 = vmatprep.mubr.bf16.mxu0 0
        %1980 = vmatmul.mubr.bf16.gmra.mrb[0].mxu0 %v1931
        %v1981 = vpop.f32.mrb[0].mxu0
        %v1982 = vadd.f32 0.0, %v1981
        %v1983 = vpop.f32.mrb[0].mxu0
        %v1984 = vpop.f32.mrb[0].mxu0
        %v1985 = vadd.f32 0.0, %v1984
        %v1986 = vpop.f32.mrb[0].mxu0
        %1987 = vmatprep.mubr.bf16.mxu0 0
        %1988 = vmatmul.mubr.bf16.gmra.mrb[0].mxu0 %v1932
        %v1989 = vpop.f32.mrb[0].mxu0
        %v1990 = vadd.f32 0.0, %v1989
        %v1991 = vpop.f32.mrb[0].mxu0
        %v1992 = vpop.f32.mrb[0].mxu0
        %v1993 = vadd.f32 0.0, %v1992
        %v1994 = vpop.f32.mrb[0].mxu0
        %1995 = vmatprep.mubr.bf16.mxu0 0
        %1996 = vmatmul.mubr.bf16.gmra.mrb[0].mxu0 %v1933
        %v1997 = vpop.f32.mrb[0].mxu0
        %v1998 = vadd.f32 0.0, %v1997
        %v1999 = vpop.f32.mrb[0].mxu0
        %v2000 = vpop.f32.mrb[0].mxu0
        %v2001 = vadd.f32 0.0, %v2000
        %v2002 = vpop.f32.mrb[0].mxu0
        %2003 = vmatprep.mubr.bf16.mxu0 0
        %2004 = vmatmul.mubr.bf16.gmra.mrb[0].mxu0 %v1934
        %v2005 = vpop.f32.mrb[0].mxu0
        %v2006 = vadd.f32 0.0, %v2005
        %v2007 = vpop.f32.mrb[0].mxu0
        %v2008 = vpop.f32.mrb[0].mxu0
        %v2009 = vadd.f32 0.0, %v2008
        %v2010 = vpop.f32.mrb[0].mxu0
        %2011 = vmatprep.mubr.bf16.mxu0 0
        %2012 = vmatmul.mubr.bf16.gmra.mrb[0].mxu0 %v1935
        %v2013 = vpop.f32.mrb[0].mxu0
        %v2014 = vadd.f32 0.0, %v2013
        %v2015 = vpop.f32.mrb[0].mxu0
        %v2016 = vpop.f32.mrb[0].mxu0
        %v2017 = vadd.f32 0.0, %v2016
        %v2018 = vpop.f32.mrb[0].mxu0
        %2019 = vmatprep.mubr.bf16.mxu0 0
        %2020 = vmatmul.mubr.bf16.gmra.mrb[0].mxu0 %v1936
        %v2021 = vpop.f32.mrb[0].mxu0
        %v2022 = vadd.f32 0.0, %v2021
        %v2023 = vpop.f32.mrb[0].mxu0
        %v2024 = vpop.f32.mrb[0].mxu0
        %v2025 = vadd.f32 0.0, %v2024
        %v2026 = vpop.f32.mrb[0].mxu0
        %2027 = vmatprep.mubr.bf16.mxu0 0
        %2028 = vmatmul.mubr.bf16.gmra.mrb[0].mxu0 %v1937
        %v2029 = vpop.f32.mrb[0].mxu0
        %v2030 = vadd.f32 0.0, %v2029
        %v2031 = vpop.f32.mrb[0].mxu0
        %v2032 = vpop.f32.mrb[0].mxu0
        %v2033 = vadd.f32 0.0, %v2032
        %v2034 = vpop.f32.mrb[0].mxu0
        %2035 = vmatprep.mubr.bf16.mxu0 0
        %2036 = vmatmul.mubr.bf16.gmra.mrb[0].mxu0 %v1938
        %v2037 = vpop.f32.mrb[0].mxu0
        %v2038 = vadd.f32 0.0, %v2037
        %v2039 = vpop.f32.mrb[0].mxu0
        %v2040 = vpop.f32.mrb[0].mxu0
        %v2041 = vadd.f32 0.0, %v2040
        %v2042 = vpop.f32.mrb[0].mxu0
        %2043 = vmatprep.mubr.bf16.mxu0 0
        %2044 = vmatmul.mubr.bf16.gmra.mrb[0].mxu0 %v1939
        %v2045 = vpop.f32.mrb[0].mxu0
        %v2046 = vadd.f32 0.0, %v2045
        %v2047 = vpop.f32.mrb[0].mxu0
        %v2048 = vpop.f32.mrb[0].mxu0
        %v2049 = vadd.f32 0.0, %v2048
        %v2050 = vpop.f32.mrb[0].mxu0
        %2051 = vmatprep.mubr.bf16.mxu0 0
        %2052 = vmatmul.mubr.bf16.gmra.mrb[0].mxu0 %v1940
        %v2053 = vpop.f32.mrb[0].mxu0
        %v2054 = vadd.f32 0.0, %v2053
        %v2055 = vpop.f32.mrb[0].mxu0
        %v2056 = vpop.f32.mrb[0].mxu0
        %v2057 = vadd.f32 0.0, %v2056
        %v2058 = vpop.f32.mrb[0].mxu0
        %2059 = vmatprep.mubr.bf16.mxu0 0
        %2060 = vmatmul.mubr.bf16.gmra.mrb[0].mxu0 %v1941
        %v2061 = vpop.f32.mrb[0].mxu0
        %v2062 = vadd.f32 0.0, %v2061
        %v2063 = vpop.f32.mrb[0].mxu0
        %v2064 = vpop.f32.mrb[0].mxu0
        %v2065 = vadd.f32 0.0, %v2064
        %v2066 = vpop.f32.mrb[0].mxu0
        %2067 = vmatprep.mubr.bf16.mxu0 0
        %2068 = vmatmul.mubr.bf16.gmra.mrb[0].mxu0 %v1942
        %v2069 = vpop.f32.mrb[0].mxu0
        %v2070 = vadd.f32 0.0, %v2069
        %v2071 = vpop.f32.mrb[0].mxu0
        %v2072 = vpop.f32.mrb[0].mxu0
        %v2073 = vadd.f32 0.0, %v2072
        %v2074 = vpop.f32.mrb[0].mxu0
        %2075 = vmatprep.mubr.bf16.mxu0 0
        %2076 = vmatmul.mubr.bf16.gmra.mrb[0].mxu0 %v1943
        %v2077 = vpop.f32.mrb[0].mxu0
        %v2078 = vadd.f32 0.0, %v2077
        %v2079 = vpop.f32.mrb[0].mxu0
        %v2080 = vpop.f32.mrb[0].mxu0
        %v2081 = vadd.f32 0.0, %v2080
        %v2082 = vpop.f32.mrb[0].mxu0
        %2083 = vmatprep.mubr.bf16.mxu0 0
        %2084 = vmatmul.mubr.bf16.gmra.mrb[0].mxu0 %v1944
        %v2085 = vpop.f32.mrb[0].mxu0
        %v2086 = vadd.f32 0.0, %v2085
        %v2087 = vpop.f32.mrb[0].mxu0
        %v2088 = vpop.f32.mrb[0].mxu0
        %v2089 = vadd.f32 0.0, %v2088
        %v2090 = vpop.f32.mrb[0].mxu0
        %2091 = vmatprep.mubr.bf16.mxu0 0
        %2092 = vmatmul.mubr.bf16.gmra.mrb[0].mxu0 %v1945
        %v2093 = vpop.f32.mrb[0].mxu0
        %v2094 = vadd.f32 0.0, %v2093
        %v2095 = vpop.f32.mrb[0].mxu0
        %v2096 = vpop.f32.mrb[0].mxu0
        %v2097 = vadd.f32 0.0, %v2096
        %v2098 = vpop.f32.mrb[0].mxu0
        %2099 = vmatprep.mubr.bf16.mxu0 0
        %2100 = vmatmul.mubr.bf16.gmra.mrb[0].mxu0 %v1946
        %v2101 = vpop.f32.mrb[0].mxu0
        %v2102 = vadd.f32 0.0, %v2101
        %v2103 = vpop.f32.mrb[0].mxu0
        %v2104 = vpop.f32.mrb[0].mxu0
        %v2105 = vadd.f32 0.0, %v2104
        %v2106 = vpop.f32.mrb[0].mxu0
        %2107 = vdwg.mxu0
        %v2108 = vld [vmem:[#allocation10] sm:$0xf]
        %v2109 = vld [vmem:[#allocation10 + $0x4] sm:$0xf]
        %v2110 = vld [vmem:[#allocation10 + $0x8] sm:$0xf]
        %v2111 = vld [vmem:[#allocation10 + $0xc] sm:$0xf]
        %v2112 = vld [vmem:[#allocation10 + $0x10] sm:$0xf]
        %v2113 = vld [vmem:[#allocation10 + $0x14] sm:$0xf]
        %v2114 = vld [vmem:[#allocation10 + $0x18] sm:$0xf]
        %v2115 = vld [vmem:[#allocation10 + $0x1c] sm:$0xf]
        %v2116 = vld [vmem:[#allocation10 + $0x20] sm:$0xf]
        %v2117 = vld [vmem:[#allocation10 + $0x24] sm:$0xf]
        %v2118 = vld [vmem:[#allocation10 + $0x28] sm:$0xf]
        %v2119 = vld [vmem:[#allocation10 + $0x2c] sm:$0xf]
        %v2120 = vld [vmem:[#allocation10 + $0x30] sm:$0xf]
        %v2121 = vld [vmem:[#allocation10 + $0x34] sm:$0xf]
        %v2122 = vld [vmem:[#allocation10 + $0x38] sm:$0xf]
        %v2123 = vld [vmem:[#allocation10 + $0x3c] sm:$0xf]
        %v2124 = vpack.c.bf16 %v1985, %v1982
        %v2125 = vpack.c.bf16 %v1993, %v1990
        %v2126 = vpack.c.bf16 %v2001, %v1998
        %v2127 = vpack.c.bf16 %v2009, %v2006
        %v2128 = vpack.c.bf16 %v2017, %v2014
        %v2129 = vpack.c.bf16 %v2025, %v2022
        %v2130 = vpack.c.bf16 %v2033, %v2030
        %v2131 = vpack.c.bf16 %v2041, %v2038
        %v2132 = vpack.c.bf16 %v2049, %v2046
        %v2133 = vpack.c.bf16 %v2057, %v2054
        %v2134 = vpack.c.bf16 %v2065, %v2062
        %v2135 = vpack.c.bf16 %v2073, %v2070
        %v2136 = vpack.c.bf16 %v2081, %v2078
        %v2137 = vpack.c.bf16 %v2089, %v2086
        %v2138 = vpack.c.bf16 %v2097, %v2094
        %v2139 = vpack.c.bf16 %v2105, %v2102
        %v2140 = vld [vmem:[%s5 + $0x3] sm:$0x1]
        %v2141 = vlaneseq
        %v2142 = vshrl.u32 %v2141, 7
        %v2143 = vsub.s32 0, %v2142
        %v2144 = vrot.slane %v2140, %v2143
        %v2161 = vunpack.c.l.b16 %v2108
        %v2162 = vunpack.c.l.b16 %v2109
        %v2163 = vunpack.c.l.b16 %v2110
        %v2164 = vunpack.c.l.b16 %v2111
        %v2165 = vunpack.c.l.b16 %v2112
        %v2166 = vunpack.c.l.b16 %v2113
        %v2167 = vunpack.c.l.b16 %v2114
        %v2168 = vunpack.c.l.b16 %v2115
        %v2169 = vunpack.c.l.b16 %v2116
        %v2170 = vunpack.c.l.b16 %v2117
        %v2171 = vunpack.c.l.b16 %v2118
        %v2172 = vunpack.c.l.b16 %v2119
        %v2173 = vunpack.c.l.b16 %v2120
        %v2174 = vunpack.c.l.b16 %v2121
        %v2175 = vunpack.c.l.b16 %v2122
        %v2176 = vunpack.c.l.b16 %v2123
        %v2177 = vpack.c.b16 %v2162, %v2161
        %v2178 = vpack.c.b16 %v2164, %v2163
        %v2179 = vpack.c.b16 %v2166, %v2165
        %v2180 = vpack.c.b16 %v2168, %v2167
        %v2181 = vpack.c.b16 %v2170, %v2169
        %v2182 = vpack.c.b16 %v2172, %v2171
        %v2183 = vpack.c.b16 %v2174, %v2173
        %v2184 = vpack.c.b16 %v2176, %v2175
        %2193 = vmatprep.subr.bf16.mxu0 0
        %2194 = vmatpush1.bf16.msra.mxu0 %v2177
        %2195 = vmatprep.subr.bf16.mxu0 0
        %2196 = vmatpush1.bf16.msra.mxu0 %v2178
        %2197 = vmatprep.subr.bf16.mxu0 0
        %2198 = vmatpush1.bf16.msra.mxu0 %v2179
        %2199 = vmatprep.subr.bf16.mxu0 0
        %2200 = vmatpush1.bf16.msra.mxu0 %v2180
        %2201 = vmatprep.subr.bf16.mxu0 0
        %2202 = vmatpush1.bf16.msra.mxu0 %v2181
        %2203 = vmatprep.subr.bf16.mxu0 0
        %2204 = vmatpush1.bf16.msra.mxu0 %v2182
        %2205 = vmatprep.subr.bf16.mxu0 0
        %2206 = vmatpush1.bf16.msra.mxu0 %v2183
        %2207 = vmatprep.subr.bf16.mxu0 0
        %2208 = vmatpush1.bf16.msra.mxu0 %v2184
        %2209 = vmatprep.subr.bf16.mxu0 0
        %2210 = vmatpush1.bf16.msra.mxu0 0
        %2211 = vmatprep.subr.bf16.mxu0 0
        %2212 = vmatpush1.bf16.msra.mxu0 0
        %2213 = vmatprep.subr.bf16.mxu0 0
        %2214 = vmatpush1.bf16.msra.mxu0 0
        %2215 = vmatprep.subr.bf16.mxu0 0
        %2216 = vmatpush1.bf16.msra.mxu0 0
        %2217 = vmatprep.subr.bf16.mxu0 0
        %2218 = vmatpush1.bf16.msra.mxu0 0
        %2219 = vmatprep.subr.bf16.mxu0 0
        %2220 = vmatpush1.bf16.msra.mxu0 0
        %2221 = vmatprep.subr.bf16.mxu0 0
        %2222 = vmatpush1.bf16.msra.mxu0 0
        %2223 = vmatprep.subr.bf16.mxu0 0
        %2224 = vmatpush1.bf16.msra.mxu0 0
        %2225 = vmatprep.mubr.bf16.mxu0 0
        %2226 = vmatmul.mubr.bf16.gmra.mrb[0].mxu0 %v2124
        %v2227 = vpop.f32.mrb[0].mxu0
        %v2228 = vadd.f32 %v2144, %v2227
        %v2229 = vpop.f32.mrb[0].mxu0
        %v2230 = vpop.f32.mrb[0].mxu0
        %v2231 = vadd.f32 %v2144, %v2230
        %v2232 = vpop.f32.mrb[0].mxu0
        %2233 = vmatprep.mubr.bf16.mxu0 0
        %2234 = vmatmul.mubr.bf16.gmra.mrb[0].mxu0 %v2125
        %v2235 = vpop.f32.mrb[0].mxu0
        %v2236 = vadd.f32 %v2144, %v2235
        %v2237 = vpop.f32.mrb[0].mxu0
        %v2238 = vpop.f32.mrb[0].mxu0
        %v2239 = vadd.f32 %v2144, %v2238
        %v2240 = vpop.f32.mrb[0].mxu0
        %2241 = vmatprep.mubr.bf16.mxu0 0
        %2242 = vmatmul.mubr.bf16.gmra.mrb[0].mxu0 %v2126
        %v2243 = vpop.f32.mrb[0].mxu0
        %v2244 = vadd.f32 %v2144, %v2243
        %v2245 = vpop.f32.mrb[0].mxu0
        %v2246 = vpop.f32.mrb[0].mxu0
        %v2247 = vadd.f32 %v2144, %v2246
        %v2248 = vpop.f32.mrb[0].mxu0
        %2249 = vmatprep.mubr.bf16.mxu0 0
        %2250 = vmatmul.mubr.bf16.gmra.mrb[0].mxu0 %v2127
        %v2251 = vpop.f32.mrb[0].mxu0
        %v2252 = vadd.f32 %v2144, %v2251
        %v2253 = vpop.f32.mrb[0].mxu0
        %v2254 = vpop.f32.mrb[0].mxu0
        %v2255 = vadd.f32 %v2144, %v2254
        %v2256 = vpop.f32.mrb[0].mxu0
        %2257 = vmatprep.mubr.bf16.mxu0 0
        %2258 = vmatmul.mubr.bf16.gmra.mrb[0].mxu0 %v2128
        %v2259 = vpop.f32.mrb[0].mxu0
        %v2260 = vadd.f32 %v2144, %v2259
        %v2261 = vpop.f32.mrb[0].mxu0
        %v2262 = vpop.f32.mrb[0].mxu0
        %v2263 = vadd.f32 %v2144, %v2262
        %v2264 = vpop.f32.mrb[0].mxu0
        %2265 = vmatprep.mubr.bf16.mxu0 0
        %2266 = vmatmul.mubr.bf16.gmra.mrb[0].mxu0 %v2129
        %v2267 = vpop.f32.mrb[0].mxu0
        %v2268 = vadd.f32 %v2144, %v2267
        %v2269 = vpop.f32.mrb[0].mxu0
        %v2270 = vpop.f32.mrb[0].mxu0
        %v2271 = vadd.f32 %v2144, %v2270
        %v2272 = vpop.f32.mrb[0].mxu0
        %2273 = vmatprep.mubr.bf16.mxu0 0
        %2274 = vmatmul.mubr.bf16.gmra.mrb[0].mxu0 %v2130
        %v2275 = vpop.f32.mrb[0].mxu0
        %v2276 = vadd.f32 %v2144, %v2275
        %v2277 = vpop.f32.mrb[0].mxu0
        %v2278 = vpop.f32.mrb[0].mxu0
        %v2279 = vadd.f32 %v2144, %v2278
        %v2280 = vpop.f32.mrb[0].mxu0
        %2281 = vmatprep.mubr.bf16.mxu0 0
        %2282 = vmatmul.mubr.bf16.gmra.mrb[0].mxu0 %v2131
        %v2283 = vpop.f32.mrb[0].mxu0
        %v2284 = vadd.f32 %v2144, %v2283
        %v2285 = vpop.f32.mrb[0].mxu0
        %v2286 = vpop.f32.mrb[0].mxu0
        %v2287 = vadd.f32 %v2144, %v2286
        %v2288 = vpop.f32.mrb[0].mxu0
        %2289 = vmatprep.mubr.bf16.mxu0 0
        %2290 = vmatmul.mubr.bf16.gmra.mrb[0].mxu0 %v2132
        %v2291 = vpop.f32.mrb[0].mxu0
        %v2292 = vadd.f32 %v2144, %v2291
        %v2293 = vpop.f32.mrb[0].mxu0
        %v2294 = vpop.f32.mrb[0].mxu0
        %v2295 = vadd.f32 %v2144, %v2294
        %v2296 = vpop.f32.mrb[0].mxu0
        %2297 = vmatprep.mubr.bf16.mxu0 0
        %2298 = vmatmul.mubr.bf16.gmra.mrb[0].mxu0 %v2133
        %v2299 = vpop.f32.mrb[0].mxu0
        %v2300 = vadd.f32 %v2144, %v2299
        %v2301 = vpop.f32.mrb[0].mxu0
        %v2302 = vpop.f32.mrb[0].mxu0
        %v2303 = vadd.f32 %v2144, %v2302
        %v2304 = vpop.f32.mrb[0].mxu0
        %2305 = vmatprep.mubr.bf16.mxu0 0
        %2306 = vmatmul.mubr.bf16.gmra.mrb[0].mxu0 %v2134
        %v2307 = vpop.f32.mrb[0].mxu0
        %v2308 = vadd.f32 %v2144, %v2307
        %v2309 = vpop.f32.mrb[0].mxu0
        %v2310 = vpop.f32.mrb[0].mxu0
        %v2311 = vadd.f32 %v2144, %v2310
        %v2312 = vpop.f32.mrb[0].mxu0
        %2313 = vmatprep.mubr.bf16.mxu0 0
        %2314 = vmatmul.mubr.bf16.gmra.mrb[0].mxu0 %v2135
        %v2315 = vpop.f32.mrb[0].mxu0
        %v2316 = vadd.f32 %v2144, %v2315
        %v2317 = vpop.f32.mrb[0].mxu0
        %v2318 = vpop.f32.mrb[0].mxu0
        %v2319 = vadd.f32 %v2144, %v2318
        %v2320 = vpop.f32.mrb[0].mxu0
        %2321 = vmatprep.mubr.bf16.mxu0 0
        %2322 = vmatmul.mubr.bf16.gmra.mrb[0].mxu0 %v2136
        %v2323 = vpop.f32.mrb[0].mxu0
        %v2324 = vadd.f32 %v2144, %v2323
        %v2325 = vpop.f32.mrb[0].mxu0
        %v2326 = vpop.f32.mrb[0].mxu0
        %v2327 = vadd.f32 %v2144, %v2326
        %v2328 = vpop.f32.mrb[0].mxu0
        %2329 = vmatprep.mubr.bf16.mxu0 0
        %2330 = vmatmul.mubr.bf16.gmra.mrb[0].mxu0 %v2137
        %v2331 = vpop.f32.mrb[0].mxu0
        %v2332 = vadd.f32 %v2144, %v2331
        %v2333 = vpop.f32.mrb[0].mxu0
        %v2334 = vpop.f32.mrb[0].mxu0
        %v2335 = vadd.f32 %v2144, %v2334
        %v2336 = vpop.f32.mrb[0].mxu0
        %2337 = vmatprep.mubr.bf16.mxu0 0
        %2338 = vmatmul.mubr.bf16.gmra.mrb[0].mxu0 %v2138
        %v2339 = vpop.f32.mrb[0].mxu0
        %v2340 = vadd.f32 %v2144, %v2339
        %v2341 = vpop.f32.mrb[0].mxu0
        %v2342 = vpop.f32.mrb[0].mxu0
        %v2343 = vadd.f32 %v2144, %v2342
        %v2344 = vpop.f32.mrb[0].mxu0
        %2345 = vmatprep.mubr.bf16.mxu0 0
        %2346 = vmatmul.mubr.bf16.gmra.mrb[0].mxu0 %v2139
        %v2347 = vpop.f32.mrb[0].mxu0
        %v2348 = vadd.f32 %v2144, %v2347
        %v2349 = vpop.f32.mrb[0].mxu0
        %v2350 = vpop.f32.mrb[0].mxu0
        %v2351 = vadd.f32 %v2144, %v2350
        %v2352 = vpop.f32.mrb[0].mxu0
        %2353 = vdwg.mxu0
        %v2354 = vadd.f32 %v2228, %v466
        %v2355 = vadd.f32 %v2231, %v467
        %v2356 = vadd.f32 %v2236, %v468
        %v2357 = vadd.f32 %v2239, %v469
        %v2358 = vadd.f32 %v2244, %v470
        %v2359 = vadd.f32 %v2247, %v471
        %v2360 = vadd.f32 %v2252, %v472
        %v2361 = vadd.f32 %v2255, %v473
        %v2362 = vadd.f32 %v2260, %v474
        %v2363 = vadd.f32 %v2263, %v475
        %v2364 = vadd.f32 %v2268, %v476
        %v2365 = vadd.f32 %v2271, %v477
        %v2366 = vadd.f32 %v2276, %v478
        %v2367 = vadd.f32 %v2279, %v479
        %v2368 = vadd.f32 %v2284, %v480
        %v2369 = vadd.f32 %v2287, %v481
        %v2370 = vadd.f32 %v2292, %v482
        %v2371 = vadd.f32 %v2295, %v483
        %v2372 = vadd.f32 %v2300, %v484
        %v2373 = vadd.f32 %v2303, %v485
        %v2374 = vadd.f32 %v2308, %v486
        %v2375 = vadd.f32 %v2311, %v487
        %v2376 = vadd.f32 %v2316, %v488
        %v2377 = vadd.f32 %v2319, %v489
        %v2378 = vadd.f32 %v2324, %v490
        %v2379 = vadd.f32 %v2327, %v491
        %v2380 = vadd.f32 %v2332, %v492
        %v2381 = vadd.f32 %v2335, %v493
        %v2382 = vadd.f32 %v2340, %v494
        %v2383 = vadd.f32 %v2343, %v495
        %v2384 = vadd.f32 %v2348, %v496
        %v2385 = vadd.f32 %v2351, %v497
        %v2386 = vld [vmem:[%s393] sm:$0xff]
        %v2387 = vld [vmem:[%s393 + $0x8] sm:$0xff]
        %v2388 = vld [vmem:[%s393 + $0x10] sm:$0xff]
        %v2389 = vld [vmem:[%s393 + $0x18] sm:$0xff]
        %v2390 = vld [vmem:[%s393 + $0x20] sm:$0xff]
        %v2391 = vld [vmem:[%s393 + $0x28] sm:$0xff]
        %v2392 = vld [vmem:[%s393 + $0x30] sm:$0xff]
        %v2393 = vld [vmem:[%s393 + $0x38] sm:$0xff]
        %v2394 = vld [vmem:[%s393 + $0x40] sm:$0xff]
        %v2395 = vld [vmem:[%s393 + $0x48] sm:$0xff]
        %v2396 = vld [vmem:[%s393 + $0x50] sm:$0xff]
        %v2397 = vld [vmem:[%s393 + $0x58] sm:$0xff]
        %v2398 = vld [vmem:[%s393 + $0x60] sm:$0xff]
        %v2399 = vld [vmem:[%s393 + $0x68] sm:$0xff]
        %v2400 = vld [vmem:[%s393 + $0x70] sm:$0xff]
        %v2401 = vld [vmem:[%s393 + $0x78] sm:$0xff]
        %v2402 = vld [vmem:[%s393 + $0x80] sm:$0xff]
        %v2403 = vld [vmem:[%s393 + $0x88] sm:$0xff]
        %v2404 = vld [vmem:[%s393 + $0x90] sm:$0xff]
        %v2405 = vld [vmem:[%s393 + $0x98] sm:$0xff]
        %v2406 = vld [vmem:[%s393 + $0xa0] sm:$0xff]
        %v2407 = vld [vmem:[%s393 + $0xa8] sm:$0xff]
        %v2408 = vld [vmem:[%s393 + $0xb0] sm:$0xff]
        %v2409 = vld [vmem:[%s393 + $0xb8] sm:$0xff]
        %v2410 = vld [vmem:[%s393 + $0xc0] sm:$0xff]
        %v2411 = vld [vmem:[%s393 + $0xc8] sm:$0xff]
        %v2412 = vld [vmem:[%s393 + $0xd0] sm:$0xff]
        %v2413 = vld [vmem:[%s393 + $0xd8] sm:$0xff]
        %v2414 = vld [vmem:[%s393 + $0xe0] sm:$0xff]
        %v2415 = vld [vmem:[%s393 + $0xe8] sm:$0xff]
        %v2416 = vld [vmem:[%s393 + $0xf0] sm:$0xff]
        %v2417 = vld [vmem:[%s393 + $0xf8] sm:$0xff]
        %s2418 = scalar_lea.vmem [#allocation8], 192
        %v2419 = vld [vmem:[%s2418] sm:$0xff]
        %v2420 = vld [vmem:[%s2418 + $0x8] sm:$0xf]
        %v2421 = vld [vmem:[%s2418 + $0xc] sm:$0xff]
        %v2422 = vld [vmem:[%s2418 + $0x14] sm:$0xf]
        %v2423 = vld [vmem:[%s2418 + $0x18] sm:$0xff]
        %v2424 = vld [vmem:[%s2418 + $0x20] sm:$0xf]
        %v2425 = vld [vmem:[%s2418 + $0x24] sm:$0xff]
        %v2426 = vld [vmem:[%s2418 + $0x2c] sm:$0xf]
        %v2427 = vld [vmem:[%s2418 + $0x30] sm:$0xff]
        %v2428 = vld [vmem:[%s2418 + $0x38] sm:$0xf]
        %v2429 = vld [vmem:[%s2418 + $0x3c] sm:$0xff]
        %v2430 = vld [vmem:[%s2418 + $0x44] sm:$0xf]
        %v2431 = vld [vmem:[%s2418 + $0x48] sm:$0xff]
        %v2432 = vld [vmem:[%s2418 + $0x50] sm:$0xf]
        %v2433 = vld [vmem:[%s2418 + $0x54] sm:$0xff]
        %v2434 = vld [vmem:[%s2418 + $0x5c] sm:$0xf]
        %v2435 = vld [vmem:[%s2418 + $0x60] sm:$0xff]
        %v2436 = vld [vmem:[%s2418 + $0x68] sm:$0xf]
        %v2437 = vld [vmem:[%s2418 + $0x6c] sm:$0xff]
        %v2438 = vld [vmem:[%s2418 + $0x74] sm:$0xf]
        %v2439 = vld [vmem:[%s2418 + $0x78] sm:$0xff]
        %v2440 = vld [vmem:[%s2418 + $0x80] sm:$0xf]
        %v2441 = vld [vmem:[%s2418 + $0x84] sm:$0xff]
        %v2442 = vld [vmem:[%s2418 + $0x8c] sm:$0xf]
        %v2443 = vld [vmem:[%s2418 + $0x90] sm:$0xff]
        %v2444 = vld [vmem:[%s2418 + $0x98] sm:$0xf]
        %v2445 = vld [vmem:[%s2418 + $0x9c] sm:$0xff]
        %v2446 = vld [vmem:[%s2418 + $0xa4] sm:$0xf]
        %v2447 = vld [vmem:[%s2418 + $0xa8] sm:$0xff]
        %v2448 = vld [vmem:[%s2418 + $0xb0] sm:$0xf]
        %v2449 = vld [vmem:[%s2418 + $0xb4] sm:$0xff]
        %v2450 = vld [vmem:[%s2418 + $0xbc] sm:$0xf]
        %v2451 = vpack.c.bf16 %v2387, %v2386
        %v2452 = vpack.c.bf16 %v2389, %v2388
        %v2453 = vpack.c.bf16 %v2391, %v2390
        %v2454 = vpack.c.bf16 %v2393, %v2392
        %v2455 = vpack.c.bf16 %v2395, %v2394
        %v2456 = vpack.c.bf16 %v2397, %v2396
        %v2457 = vpack.c.bf16 %v2399, %v2398
        %v2458 = vpack.c.bf16 %v2401, %v2400
        %v2459 = vpack.c.bf16 %v2403, %v2402
        %v2460 = vpack.c.bf16 %v2405, %v2404
        %v2461 = vpack.c.bf16 %v2407, %v2406
        %v2462 = vpack.c.bf16 %v2409, %v2408
        %v2463 = vpack.c.bf16 %v2411, %v2410
        %v2464 = vpack.c.bf16 %v2413, %v2412
        %v2465 = vpack.c.bf16 %v2415, %v2414
        %v2466 = vpack.c.bf16 %v2417, %v2416
        %v2499 = vunpack.c.l.b16 %v2419
        %v2500 = vunpack.c.h.b16 %v2419
        %v2501 = vunpack.c.l.b16 %v2420
        %v2502 = vunpack.c.l.b16 %v2421
        %v2503 = vunpack.c.h.b16 %v2421
        %v2504 = vunpack.c.l.b16 %v2422
        %v2505 = vunpack.c.l.b16 %v2423
        %v2506 = vunpack.c.h.b16 %v2423
        %v2507 = vunpack.c.l.b16 %v2424
        %v2508 = vunpack.c.l.b16 %v2425
        %v2509 = vunpack.c.h.b16 %v2425
        %v2510 = vunpack.c.l.b16 %v2426
        %v2511 = vunpack.c.l.b16 %v2427
        %v2512 = vunpack.c.h.b16 %v2427
        %v2513 = vunpack.c.l.b16 %v2428
        %v2514 = vunpack.c.l.b16 %v2429
        %v2515 = vunpack.c.h.b16 %v2429
        %v2516 = vunpack.c.l.b16 %v2430
        %v2517 = vunpack.c.l.b16 %v2431
        %v2518 = vunpack.c.h.b16 %v2431
        %v2519 = vunpack.c.l.b16 %v2432
        %v2520 = vunpack.c.l.b16 %v2433
        %v2521 = vunpack.c.h.b16 %v2433
        %v2522 = vunpack.c.l.b16 %v2434
        %v2523 = vunpack.c.l.b16 %v2435
        %v2524 = vunpack.c.h.b16 %v2435
        %v2525 = vunpack.c.l.b16 %v2436
        %v2526 = vunpack.c.l.b16 %v2437
        %v2527 = vunpack.c.h.b16 %v2437
        %v2528 = vunpack.c.l.b16 %v2438
        %v2529 = vunpack.c.l.b16 %v2439
        %v2530 = vunpack.c.h.b16 %v2439
        %v2531 = vunpack.c.l.b16 %v2440
        %v2532 = vunpack.c.l.b16 %v2441
        %v2533 = vunpack.c.h.b16 %v2441
        %v2534 = vunpack.c.l.b16 %v2442
        %v2535 = vunpack.c.l.b16 %v2443
        %v2536 = vunpack.c.h.b16 %v2443
        %v2537 = vunpack.c.l.b16 %v2444
        %v2538 = vunpack.c.l.b16 %v2445
        %v2539 = vunpack.c.h.b16 %v2445
        %v2540 = vunpack.c.l.b16 %v2446
        %v2541 = vunpack.c.l.b16 %v2447
        %v2542 = vunpack.c.h.b16 %v2447
        %v2543 = vunpack.c.l.b16 %v2448
        %v2544 = vunpack.c.l.b16 %v2449
        %v2545 = vunpack.c.h.b16 %v2449
        %v2546 = vunpack.c.l.b16 %v2450
        %v2547 = vpack.c.b16 %v2502, %v2499
        %v2548 = vpack.c.b16 %v2503, %v2500
        %v2549 = vpack.c.b16 %v2504, %v2501
        %v2550 = vpack.c.b16 %v2508, %v2505
        %v2551 = vpack.c.b16 %v2509, %v2506
        %v2552 = vpack.c.b16 %v2510, %v2507
        %v2553 = vpack.c.b16 %v2514, %v2511
        %v2554 = vpack.c.b16 %v2515, %v2512
        %v2555 = vpack.c.b16 %v2516, %v2513
        %v2556 = vpack.c.b16 %v2520, %v2517
        %v2557 = vpack.c.b16 %v2521, %v2518
        %v2558 = vpack.c.b16 %v2522, %v2519
        %v2559 = vpack.c.b16 %v2526, %v2523
        %v2560 = vpack.c.b16 %v2527, %v2524
        %v2561 = vpack.c.b16 %v2528, %v2525
        %v2562 = vpack.c.b16 %v2532, %v2529
        %v2563 = vpack.c.b16 %v2533, %v2530
        %v2564 = vpack.c.b16 %v2534, %v2531
        %v2565 = vpack.c.b16 %v2538, %v2535
        %v2566 = vpack.c.b16 %v2539, %v2536
        %v2567 = vpack.c.b16 %v2540, %v2537
        %v2568 = vpack.c.b16 %v2544, %v2541
        %v2569 = vpack.c.b16 %v2545, %v2542
        %v2570 = vpack.c.b16 %v2546, %v2543
        %2595 = vmatprep.subr.bf16.mxu0 %v2548
        %2596 = vmatpush1.bf16.msra.mxu0 %v2547
        %2597 = vmatprep.subr.bf16.mxu0 %v2551
        %2598 = vmatpush1.bf16.msra.mxu0 %v2550
        %2599 = vmatprep.subr.bf16.mxu0 %v2554
        %2600 = vmatpush1.bf16.msra.mxu0 %v2553
        %2601 = vmatprep.subr.bf16.mxu0 %v2557
        %2602 = vmatpush1.bf16.msra.mxu0 %v2556
        %2603 = vmatprep.subr.bf16.mxu0 %v2560
        %2604 = vmatpush1.bf16.msra.mxu0 %v2559
        %2605 = vmatprep.subr.bf16.mxu0 %v2563
        %2606 = vmatpush1.bf16.msra.mxu0 %v2562
        %2607 = vmatprep.subr.bf16.mxu0 %v2566
        %2608 = vmatpush1.bf16.msra.mxu0 %v2565
        %2609 = vmatprep.subr.bf16.mxu0 %v2569
        %2610 = vmatpush1.bf16.msra.mxu0 %v2568
        %2611 = vmatprep.subr.bf16.mxu0 0
        %2612 = vmatpush1.bf16.msra.mxu0 0
        %2613 = vmatprep.subr.bf16.mxu0 0
        %2614 = vmatpush1.bf16.msra.mxu0 0
        %2615 = vmatprep.subr.bf16.mxu0 0
        %2616 = vmatpush1.bf16.msra.mxu0 0
        %2617 = vmatprep.subr.bf16.mxu0 0
        %2618 = vmatpush1.bf16.msra.mxu0 0
        %2619 = vmatprep.subr.bf16.mxu0 0
        %2620 = vmatpush1.bf16.msra.mxu0 0
        %2621 = vmatprep.subr.bf16.mxu0 0
        %2622 = vmatpush1.bf16.msra.mxu0 0
        %2623 = vmatprep.subr.bf16.mxu0 0
        %2624 = vmatpush1.bf16.msra.mxu0 0
        %2625 = vmatprep.subr.bf16.mxu0 0
        %2626 = vmatpush1.bf16.msra.mxu0 0
        %2627 = vmatprep.mubr.bf16.mxu0 0
        %2628 = vmatmul.mubr.bf16.gmra.mrb[0].mxu0 %v2451
        %v2629 = vpop.f32.mrb[0].mxu0
        %v2630 = vadd.f32 0.0, %v2629
        %v2631 = vpop.f32.mrb[0].mxu0
        %v2632 = vadd.f32 0.0, %v2631
        %v2633 = vpop.f32.mrb[0].mxu0
        %v2634 = vadd.f32 0.0, %v2633
        %v2635 = vpop.f32.mrb[0].mxu0
        %v2636 = vadd.f32 0.0, %v2635
        %2637 = vmatprep.mubr.bf16.mxu0 0
        %2638 = vmatmul.mubr.bf16.gmra.mrb[0].mxu0 %v2452
        %v2639 = vpop.f32.mrb[0].mxu0
        %v2640 = vadd.f32 0.0, %v2639
        %v2641 = vpop.f32.mrb[0].mxu0
        %v2642 = vadd.f32 0.0, %v2641
        %v2643 = vpop.f32.mrb[0].mxu0
        %v2644 = vadd.f32 0.0, %v2643
        %v2645 = vpop.f32.mrb[0].mxu0
        %v2646 = vadd.f32 0.0, %v2645
        %2647 = vmatprep.mubr.bf16.mxu0 0
        %2648 = vmatmul.mubr.bf16.gmra.mrb[0].mxu0 %v2453
        %v2649 = vpop.f32.mrb[0].mxu0
        %v2650 = vadd.f32 0.0, %v2649
        %v2651 = vpop.f32.mrb[0].mxu0
        %v2652 = vadd.f32 0.0, %v2651
        %v2653 = vpop.f32.mrb[0].mxu0
        %v2654 = vadd.f32 0.0, %v2653
        %v2655 = vpop.f32.mrb[0].mxu0
        %v2656 = vadd.f32 0.0, %v2655
        %2657 = vmatprep.mubr.bf16.mxu0 0
        %2658 = vmatmul.mubr.bf16.gmra.mrb[0].mxu0 %v2454
        %v2659 = vpop.f32.mrb[0].mxu0
        %v2660 = vadd.f32 0.0, %v2659
        %v2661 = vpop.f32.mrb[0].mxu0
        %v2662 = vadd.f32 0.0, %v2661
        %v2663 = vpop.f32.mrb[0].mxu0
        %v2664 = vadd.f32 0.0, %v2663
        %v2665 = vpop.f32.mrb[0].mxu0
        %v2666 = vadd.f32 0.0, %v2665
        %2667 = vmatprep.mubr.bf16.mxu0 0
        %2668 = vmatmul.mubr.bf16.gmra.mrb[0].mxu0 %v2455
        %v2669 = vpop.f32.mrb[0].mxu0
        %v2670 = vadd.f32 0.0, %v2669
        %v2671 = vpop.f32.mrb[0].mxu0
        %v2672 = vadd.f32 0.0, %v2671
        %v2673 = vpop.f32.mrb[0].mxu0
        %v2674 = vadd.f32 0.0, %v2673
        %v2675 = vpop.f32.mrb[0].mxu0
        %v2676 = vadd.f32 0.0, %v2675
        %2677 = vmatprep.mubr.bf16.mxu0 0
        %2678 = vmatmul.mubr.bf16.gmra.mrb[0].mxu0 %v2456
        %v2679 = vpop.f32.mrb[0].mxu0
        %v2680 = vadd.f32 0.0, %v2679
        %v2681 = vpop.f32.mrb[0].mxu0
        %v2682 = vadd.f32 0.0, %v2681
        %v2683 = vpop.f32.mrb[0].mxu0
        %v2684 = vadd.f32 0.0, %v2683
        %v2685 = vpop.f32.mrb[0].mxu0
        %v2686 = vadd.f32 0.0, %v2685
        %2687 = vmatprep.mubr.bf16.mxu0 0
        %2688 = vmatmul.mubr.bf16.gmra.mrb[0].mxu0 %v2457
        %v2689 = vpop.f32.mrb[0].mxu0
        %v2690 = vadd.f32 0.0, %v2689
        %v2691 = vpop.f32.mrb[0].mxu0
        %v2692 = vadd.f32 0.0, %v2691
        %v2693 = vpop.f32.mrb[0].mxu0
        %v2694 = vadd.f32 0.0, %v2693
        %v2695 = vpop.f32.mrb[0].mxu0
        %v2696 = vadd.f32 0.0, %v2695
        %2697 = vmatprep.mubr.bf16.mxu0 0
        %2698 = vmatmul.mubr.bf16.gmra.mrb[0].mxu0 %v2458
        %v2699 = vpop.f32.mrb[0].mxu0
        %v2700 = vadd.f32 0.0, %v2699
        %v2701 = vpop.f32.mrb[0].mxu0
        %v2702 = vadd.f32 0.0, %v2701
        %v2703 = vpop.f32.mrb[0].mxu0
        %v2704 = vadd.f32 0.0, %v2703
        %v2705 = vpop.f32.mrb[0].mxu0
        %v2706 = vadd.f32 0.0, %v2705
        %2707 = vmatprep.mubr.bf16.mxu0 0
        %2708 = vmatmul.mubr.bf16.gmra.mrb[0].mxu0 %v2459
        %v2709 = vpop.f32.mrb[0].mxu0
        %v2710 = vadd.f32 0.0, %v2709
        %v2711 = vpop.f32.mrb[0].mxu0
        %v2712 = vadd.f32 0.0, %v2711
        %v2713 = vpop.f32.mrb[0].mxu0
        %v2714 = vadd.f32 0.0, %v2713
        %v2715 = vpop.f32.mrb[0].mxu0
        %v2716 = vadd.f32 0.0, %v2715
        %2717 = vmatprep.mubr.bf16.mxu0 0
        %2718 = vmatmul.mubr.bf16.gmra.mrb[0].mxu0 %v2460
        %v2719 = vpop.f32.mrb[0].mxu0
        %v2720 = vadd.f32 0.0, %v2719
        %v2721 = vpop.f32.mrb[0].mxu0
        %v2722 = vadd.f32 0.0, %v2721
        %v2723 = vpop.f32.mrb[0].mxu0
        %v2724 = vadd.f32 0.0, %v2723
        %v2725 = vpop.f32.mrb[0].mxu0
        %v2726 = vadd.f32 0.0, %v2725
        %2727 = vmatprep.mubr.bf16.mxu0 0
        %2728 = vmatmul.mubr.bf16.gmra.mrb[0].mxu0 %v2461
        %v2729 = vpop.f32.mrb[0].mxu0
        %v2730 = vadd.f32 0.0, %v2729
        %v2731 = vpop.f32.mrb[0].mxu0
        %v2732 = vadd.f32 0.0, %v2731
        %v2733 = vpop.f32.mrb[0].mxu0
        %v2734 = vadd.f32 0.0, %v2733
        %v2735 = vpop.f32.mrb[0].mxu0
        %v2736 = vadd.f32 0.0, %v2735
        %2737 = vmatprep.mubr.bf16.mxu0 0
        %2738 = vmatmul.mubr.bf16.gmra.mrb[0].mxu0 %v2462
        %v2739 = vpop.f32.mrb[0].mxu0
        %v2740 = vadd.f32 0.0, %v2739
        %v2741 = vpop.f32.mrb[0].mxu0
        %v2742 = vadd.f32 0.0, %v2741
        %v2743 = vpop.f32.mrb[0].mxu0
        %v2744 = vadd.f32 0.0, %v2743
        %v2745 = vpop.f32.mrb[0].mxu0
        %v2746 = vadd.f32 0.0, %v2745
        %2747 = vmatprep.mubr.bf16.mxu0 0
        %2748 = vmatmul.mubr.bf16.gmra.mrb[0].mxu0 %v2463
        %v2749 = vpop.f32.mrb[0].mxu0
        %v2750 = vadd.f32 0.0, %v2749
        %v2751 = vpop.f32.mrb[0].mxu0
        %v2752 = vadd.f32 0.0, %v2751
        %v2753 = vpop.f32.mrb[0].mxu0
        %v2754 = vadd.f32 0.0, %v2753
        %v2755 = vpop.f32.mrb[0].mxu0
        %v2756 = vadd.f32 0.0, %v2755
        %2757 = vmatprep.mubr.bf16.mxu0 0
        %2758 = vmatmul.mubr.bf16.gmra.mrb[0].mxu0 %v2464
        %v2759 = vpop.f32.mrb[0].mxu0
        %v2760 = vadd.f32 0.0, %v2759
        %v2761 = vpop.f32.mrb[0].mxu0
        %v2762 = vadd.f32 0.0, %v2761
        %v2763 = vpop.f32.mrb[0].mxu0
        %v2764 = vadd.f32 0.0, %v2763
        %v2765 = vpop.f32.mrb[0].mxu0
        %v2766 = vadd.f32 0.0, %v2765
        %2767 = vmatprep.mubr.bf16.mxu0 0
        %2768 = vmatmul.mubr.bf16.gmra.mrb[0].mxu0 %v2465
        %v2769 = vpop.f32.mrb[0].mxu0
        %v2770 = vadd.f32 0.0, %v2769
        %v2771 = vpop.f32.mrb[0].mxu0
        %v2772 = vadd.f32 0.0, %v2771
        %v2773 = vpop.f32.mrb[0].mxu0
        %v2774 = vadd.f32 0.0, %v2773
        %v2775 = vpop.f32.mrb[0].mxu0
        %v2776 = vadd.f32 0.0, %v2775
        %2777 = vmatprep.mubr.bf16.mxu0 0
        %2778 = vmatmul.mubr.bf16.gmra.mrb[0].mxu0 %v2466
        %v2779 = vpop.f32.mrb[0].mxu0
        %v2780 = vadd.f32 0.0, %v2779
        %v2781 = vpop.f32.mrb[0].mxu0
        %v2782 = vadd.f32 0.0, %v2781
        %v2783 = vpop.f32.mrb[0].mxu0
        %v2784 = vadd.f32 0.0, %v2783
        %v2785 = vpop.f32.mrb[0].mxu0
        %v2786 = vadd.f32 0.0, %v2785
        %2787 = vdwg.mxu0
        %2788 = vmatprep.subr.bf16.mxu0 0
        %2789 = vmatpush1.bf16.msra.mxu0 %v2549
        %2790 = vmatprep.subr.bf16.mxu0 0
        %2791 = vmatpush1.bf16.msra.mxu0 %v2552
        %2792 = vmatprep.subr.bf16.mxu0 0
        %2793 = vmatpush1.bf16.msra.mxu0 %v2555
        %2794 = vmatprep.subr.bf16.mxu0 0
        %2795 = vmatpush1.bf16.msra.mxu0 %v2558
        %2796 = vmatprep.subr.bf16.mxu0 0
        %2797 = vmatpush1.bf16.msra.mxu0 %v2561
        %2798 = vmatprep.subr.bf16.mxu0 0
        %2799 = vmatpush1.bf16.msra.mxu0 %v2564
        %2800 = vmatprep.subr.bf16.mxu0 0
        %2801 = vmatpush1.bf16.msra.mxu0 %v2567
        %2802 = vmatprep.subr.bf16.mxu0 0
        %2803 = vmatpush1.bf16.msra.mxu0 %v2570
        %2804 = vmatprep.subr.bf16.mxu0 0
        %2805 = vmatpush1.bf16.msra.mxu0 0
        %2806 = vmatprep.subr.bf16.mxu0 0
        %2807 = vmatpush1.bf16.msra.mxu0 0
        %2808 = vmatprep.subr.bf16.mxu0 0
        %2809 = vmatpush1.bf16.msra.mxu0 0
        %2810 = vmatprep.subr.bf16.mxu0 0
        %2811 = vmatpush1.bf16.msra.mxu0 0
        %2812 = vmatprep.subr.bf16.mxu0 0
        %2813 = vmatpush1.bf16.msra.mxu0 0
        %2814 = vmatprep.subr.bf16.mxu0 0
        %2815 = vmatpush1.bf16.msra.mxu0 0
        %2816 = vmatprep.subr.bf16.mxu0 0
        %2817 = vmatpush1.bf16.msra.mxu0 0
        %2818 = vmatprep.subr.bf16.mxu0 0
        %2819 = vmatpush1.bf16.msra.mxu0 0
        %2820 = vmatprep.mubr.bf16.mxu0 0
        %2821 = vmatmul.mubr.bf16.gmra.mrb[0].mxu0 %v2451
        %v2822 = vpop.f32.mrb[0].mxu0
        %v2823 = vadd.f32 0.0, %v2822
        %v2824 = vpop.f32.mrb[0].mxu0
        %v2825 = vpop.f32.mrb[0].mxu0
        %v2826 = vadd.f32 0.0, %v2825
        %v2827 = vpop.f32.mrb[0].mxu0
        %2828 = vmatprep.mubr.bf16.mxu0 0
        %2829 = vmatmul.mubr.bf16.gmra.mrb[0].mxu0 %v2452
        %v2830 = vpop.f32.mrb[0].mxu0
        %v2831 = vadd.f32 0.0, %v2830
        %v2832 = vpop.f32.mrb[0].mxu0
        %v2833 = vpop.f32.mrb[0].mxu0
        %v2834 = vadd.f32 0.0, %v2833
        %v2835 = vpop.f32.mrb[0].mxu0
        %2836 = vmatprep.mubr.bf16.mxu0 0
        %2837 = vmatmul.mubr.bf16.gmra.mrb[0].mxu0 %v2453
        %v2838 = vpop.f32.mrb[0].mxu0
        %v2839 = vadd.f32 0.0, %v2838
        %v2840 = vpop.f32.mrb[0].mxu0
        %v2841 = vpop.f32.mrb[0].mxu0
        %v2842 = vadd.f32 0.0, %v2841
        %v2843 = vpop.f32.mrb[0].mxu0
        %2844 = vmatprep.mubr.bf16.mxu0 0
        %2845 = vmatmul.mubr.bf16.gmra.mrb[0].mxu0 %v2454
        %v2846 = vpop.f32.mrb[0].mxu0
        %v2847 = vadd.f32 0.0, %v2846
        %v2848 = vpop.f32.mrb[0].mxu0
        %v2849 = vpop.f32.mrb[0].mxu0
        %v2850 = vadd.f32 0.0, %v2849
        %v2851 = vpop.f32.mrb[0].mxu0
        %2852 = vmatprep.mubr.bf16.mxu0 0
        %2853 = vmatmul.mubr.bf16.gmra.mrb[0].mxu0 %v2455
        %v2854 = vpop.f32.mrb[0].mxu0
        %v2855 = vadd.f32 0.0, %v2854
        %v2856 = vpop.f32.mrb[0].mxu0
        %v2857 = vpop.f32.mrb[0].mxu0
        %v2858 = vadd.f32 0.0, %v2857
        %v2859 = vpop.f32.mrb[0].mxu0
        %2860 = vmatprep.mubr.bf16.mxu0 0
        %2861 = vmatmul.mubr.bf16.gmra.mrb[0].mxu0 %v2456
        %v2862 = vpop.f32.mrb[0].mxu0
        %v2863 = vadd.f32 0.0, %v2862
        %v2864 = vpop.f32.mrb[0].mxu0
        %v2865 = vpop.f32.mrb[0].mxu0
        %v2866 = vadd.f32 0.0, %v2865
        %v2867 = vpop.f32.mrb[0].mxu0
        %2868 = vmatprep.mubr.bf16.mxu0 0
        %2869 = vmatmul.mubr.bf16.gmra.mrb[0].mxu0 %v2457
        %v2870 = vpop.f32.mrb[0].mxu0
        %v2871 = vadd.f32 0.0, %v2870
        %v2872 = vpop.f32.mrb[0].mxu0
        %v2873 = vpop.f32.mrb[0].mxu0
        %v2874 = vadd.f32 0.0, %v2873
        %v2875 = vpop.f32.mrb[0].mxu0
        %2876 = vmatprep.mubr.bf16.mxu0 0
        %2877 = vmatmul.mubr.bf16.gmra.mrb[0].mxu0 %v2458
        %v2878 = vpop.f32.mrb[0].mxu0
        %v2879 = vadd.f32 0.0, %v2878
        %v2880 = vpop.f32.mrb[0].mxu0
        %v2881 = vpop.f32.mrb[0].mxu0
        %v2882 = vadd.f32 0.0, %v2881
        %v2883 = vpop.f32.mrb[0].mxu0
        %2884 = vmatprep.mubr.bf16.mxu0 0
        %2885 = vmatmul.mubr.bf16.gmra.mrb[0].mxu0 %v2459
        %v2886 = vpop.f32.mrb[0].mxu0
        %v2887 = vadd.f32 0.0, %v2886
        %v2888 = vpop.f32.mrb[0].mxu0
        %v2889 = vpop.f32.mrb[0].mxu0
        %v2890 = vadd.f32 0.0, %v2889
        %v2891 = vpop.f32.mrb[0].mxu0
        %2892 = vmatprep.mubr.bf16.mxu0 0
        %2893 = vmatmul.mubr.bf16.gmra.mrb[0].mxu0 %v2460
        %v2894 = vpop.f32.mrb[0].mxu0
        %v2895 = vadd.f32 0.0, %v2894
        %v2896 = vpop.f32.mrb[0].mxu0
        %v2897 = vpop.f32.mrb[0].mxu0
        %v2898 = vadd.f32 0.0, %v2897
        %v2899 = vpop.f32.mrb[0].mxu0
        %2900 = vmatprep.mubr.bf16.mxu0 0
        %2901 = vmatmul.mubr.bf16.gmra.mrb[0].mxu0 %v2461
        %v2902 = vpop.f32.mrb[0].mxu0
        %v2903 = vadd.f32 0.0, %v2902
        %v2904 = vpop.f32.mrb[0].mxu0
        %v2905 = vpop.f32.mrb[0].mxu0
        %v2906 = vadd.f32 0.0, %v2905
        %v2907 = vpop.f32.mrb[0].mxu0
        %2908 = vmatprep.mubr.bf16.mxu0 0
        %2909 = vmatmul.mubr.bf16.gmra.mrb[0].mxu0 %v2462
        %v2910 = vpop.f32.mrb[0].mxu0
        %v2911 = vadd.f32 0.0, %v2910
        %v2912 = vpop.f32.mrb[0].mxu0
        %v2913 = vpop.f32.mrb[0].mxu0
        %v2914 = vadd.f32 0.0, %v2913
        %v2915 = vpop.f32.mrb[0].mxu0
        %2916 = vmatprep.mubr.bf16.mxu0 0
        %2917 = vmatmul.mubr.bf16.gmra.mrb[0].mxu0 %v2463
        %v2918 = vpop.f32.mrb[0].mxu0
        %v2919 = vadd.f32 0.0, %v2918
        %v2920 = vpop.f32.mrb[0].mxu0
        %v2921 = vpop.f32.mrb[0].mxu0
        %v2922 = vadd.f32 0.0, %v2921
        %v2923 = vpop.f32.mrb[0].mxu0
        %2924 = vmatprep.mubr.bf16.mxu0 0
        %2925 = vmatmul.mubr.bf16.gmra.mrb[0].mxu0 %v2464
        %v2926 = vpop.f32.mrb[0].mxu0
        %v2927 = vadd.f32 0.0, %v2926
        %v2928 = vpop.f32.mrb[0].mxu0
        %v2929 = vpop.f32.mrb[0].mxu0
        %v2930 = vadd.f32 0.0, %v2929
        %v2931 = vpop.f32.mrb[0].mxu0
        %2932 = vmatprep.mubr.bf16.mxu0 0
        %2933 = vmatmul.mubr.bf16.gmra.mrb[0].mxu0 %v2465
        %v2934 = vpop.f32.mrb[0].mxu0
        %v2935 = vadd.f32 0.0, %v2934
        %v2936 = vpop.f32.mrb[0].mxu0
        %v2937 = vpop.f32.mrb[0].mxu0
        %v2938 = vadd.f32 0.0, %v2937
        %v2939 = vpop.f32.mrb[0].mxu0
        %2940 = vmatprep.mubr.bf16.mxu0 0
        %2941 = vmatmul.mubr.bf16.gmra.mrb[0].mxu0 %v2466
        %v2942 = vpop.f32.mrb[0].mxu0
        %v2943 = vadd.f32 0.0, %v2942
        %v2944 = vpop.f32.mrb[0].mxu0
        %v2945 = vpop.f32.mrb[0].mxu0
        %v2946 = vadd.f32 0.0, %v2945
        %v2947 = vpop.f32.mrb[0].mxu0
        %2948 = vdwg.mxu0
        %s2949 = scalar_lea.vmem %s5, 4
        %v2950 = vld [vmem:[%s2949] sm:$0x1]
        %v2951 = vlaneseq
        %v2952 = vshrl.u32 %v2951, 7
        %v2953 = vsub.s32 0, %v2952
        %v2954 = vrot.slane %v2950, %v2953
        %v2955 = vadd.f32 %v2630, %v2954
        %v2956 = vadd.f32 %v2634, %v2954
        %v2957 = vadd.f32 %v2640, %v2954
        %v2958 = vadd.f32 %v2644, %v2954
        %v2959 = vadd.f32 %v2650, %v2954
        %v2960 = vadd.f32 %v2654, %v2954
        %v2961 = vadd.f32 %v2660, %v2954
        %v2962 = vadd.f32 %v2664, %v2954
        %v2963 = vadd.f32 %v2670, %v2954
        %v2964 = vadd.f32 %v2674, %v2954
        %v2965 = vadd.f32 %v2680, %v2954
        %v2966 = vadd.f32 %v2684, %v2954
        %v2967 = vadd.f32 %v2690, %v2954
        %v2968 = vadd.f32 %v2694, %v2954
        %v2969 = vadd.f32 %v2700, %v2954
        %v2970 = vadd.f32 %v2704, %v2954
        %v2971 = vadd.f32 %v2710, %v2954
        %v2972 = vadd.f32 %v2714, %v2954
        %v2973 = vadd.f32 %v2720, %v2954
        %v2974 = vadd.f32 %v2724, %v2954
        %v2975 = vadd.f32 %v2730, %v2954
        %v2976 = vadd.f32 %v2734, %v2954
        %v2977 = vadd.f32 %v2740, %v2954
        %v2978 = vadd.f32 %v2744, %v2954
        %v2979 = vadd.f32 %v2750, %v2954
        %v2980 = vadd.f32 %v2754, %v2954
        %v2981 = vadd.f32 %v2760, %v2954
        %v2982 = vadd.f32 %v2764, %v2954
        %v2983 = vadd.f32 %v2770, %v2954
        %v2984 = vadd.f32 %v2774, %v2954
        %v2985 = vadd.f32 %v2780, %v2954
        %v2986 = vadd.f32 %v2784, %v2954
        %v2987 = vld [vmem:[%s2949 + $0x2] sm:$0x1]
        %v2988 = vlaneseq
        %v2989 = vshrl.u32 %v2988, 7
        %v2990 = vsub.s32 0, %v2989
        %v2991 = vrot.slane %v2987, %v2990
        %v2992 = vadd.f32 %v2823, %v2991
        %v2993 = vadd.f32 %v2826, %v2991
        %v2994 = vadd.f32 %v2831, %v2991
        %v2995 = vadd.f32 %v2834, %v2991
        %v2996 = vadd.f32 %v2839, %v2991
        %v2997 = vadd.f32 %v2842, %v2991
        %v2998 = vadd.f32 %v2847, %v2991
        %v2999 = vadd.f32 %v2850, %v2991
        %v3000 = vadd.f32 %v2855, %v2991
        %v3001 = vadd.f32 %v2858, %v2991
        %v3002 = vadd.f32 %v2863, %v2991
        %v3003 = vadd.f32 %v2866, %v2991
        %v3004 = vadd.f32 %v2871, %v2991
        %v3005 = vadd.f32 %v2874, %v2991
        %v3006 = vadd.f32 %v2879, %v2991
        %v3007 = vadd.f32 %v2882, %v2991
        %v3008 = vadd.f32 %v2887, %v2991
        %v3009 = vadd.f32 %v2890, %v2991
        %v3010 = vadd.f32 %v2895, %v2991
        %v3011 = vadd.f32 %v2898, %v2991
        %v3012 = vadd.f32 %v2903, %v2991
        %v3013 = vadd.f32 %v2906, %v2991
        %v3014 = vadd.f32 %v2911, %v2991
        %v3015 = vadd.f32 %v2914, %v2991
        %v3016 = vadd.f32 %v2919, %v2991
        %v3017 = vadd.f32 %v2922, %v2991
        %v3018 = vadd.f32 %v2927, %v2991
        %v3019 = vadd.f32 %v2930, %v2991
        %v3020 = vadd.f32 %v2935, %v2991
        %v3021 = vadd.f32 %v2938, %v2991
        %v3022 = vadd.f32 %v2943, %v2991
        %v3023 = vadd.f32 %v2946, %v2991
        %v3024 = vmax.f32 %v2632, %v2652
        %v3025 = vmax.f32 %v2636, %v2656
        %v3026 = vmax.f32 %v2642, %v2662
        %v3027 = vmax.f32 %v2646, %v2666
        %v3028 = vmax.f32 %v3024, %v2672
        %v3029 = vmax.f32 %v3025, %v2676
        %v3030 = vmax.f32 %v3026, %v2682
        %v3031 = vmax.f32 %v3027, %v2686
        %v3032 = vmax.f32 %v3028, %v2692
        %v3033 = vmax.f32 %v3029, %v2696
        %v3034 = vmax.f32 %v3030, %v2702
        %v3035 = vmax.f32 %v3031, %v2706
        %v3036 = vmax.f32 %v3032, %v2712
        %v3037 = vmax.f32 %v3033, %v2716
        %v3038 = vmax.f32 %v3034, %v2722
        %v3039 = vmax.f32 %v3035, %v2726
        %v3040 = vmax.f32 %v3036, %v2732
        %v3041 = vmax.f32 %v3037, %v2736
        %v3042 = vmax.f32 %v3038, %v2742
        %v3043 = vmax.f32 %v3039, %v2746
        %v3044 = vmax.f32 %v3040, %v2752
        %v3045 = vmax.f32 %v3041, %v2756
        %v3046 = vmax.f32 %v3042, %v2762
        %v3047 = vmax.f32 %v3043, %v2766
        %v3048 = vmax.f32 %v3044, %v2772
        %v3049 = vmax.f32 %v3045, %v2776
        %v3050 = vmax.f32 %v3046, %v2782
        %v3051 = vmax.f32 %v3047, %v2786
        %v3052 = vmax.f32 %v3048, %v3049
        %v3053 = vmax.f32 %v3050, %v3051
        %v3054 = vmax.f32 %v3052, %v3053
        %v3055 = vrot.slane %v3054, 4
        %v3056 = vmax.f32 %v3054, %v3055
        %v3057 = vrot.slane %v3056, 2
        %v3058 = vmax.f32 %v3056, %v3057
        %v3059 = vrot.slane %v3058, 1
        %v3060 = vmax.f32 %v3058, %v3059
        %v3061 = vsub.f32 %v2632, %v3060
        %v3062 = vsub.f32 %v2636, %v3060
        %v3063 = vsub.f32 %v2642, %v3060
        %v3064 = vsub.f32 %v2646, %v3060
        %v3065 = vsub.f32 %v2652, %v3060
        %v3066 = vsub.f32 %v2656, %v3060
        %v3067 = vsub.f32 %v2662, %v3060
        %v3068 = vsub.f32 %v2666, %v3060
        %v3069 = vsub.f32 %v2672, %v3060
        %v3070 = vsub.f32 %v2676, %v3060
        %v3071 = vsub.f32 %v2682, %v3060
        %v3072 = vsub.f32 %v2686, %v3060
        %v3073 = vsub.f32 %v2692, %v3060
        %v3074 = vsub.f32 %v2696, %v3060
        %v3075 = vsub.f32 %v2702, %v3060
        %v3076 = vsub.f32 %v2706, %v3060
        %v3077 = vsub.f32 %v2712, %v3060
        %v3078 = vsub.f32 %v2716, %v3060
        %v3079 = vsub.f32 %v2722, %v3060
        %v3080 = vsub.f32 %v2726, %v3060
        %v3081 = vsub.f32 %v2732, %v3060
        %v3082 = vsub.f32 %v2736, %v3060
        %v3083 = vsub.f32 %v2742, %v3060
        %v3084 = vsub.f32 %v2746, %v3060
        %v3085 = vsub.f32 %v2752, %v3060
        %v3086 = vsub.f32 %v2756, %v3060
        %v3087 = vsub.f32 %v2762, %v3060
        %v3088 = vsub.f32 %v2766, %v3060
        %v3089 = vsub.f32 %v2772, %v3060
        %v3090 = vsub.f32 %v2776, %v3060
        %v3091 = vsub.f32 %v2782, %v3060
        %v3092 = vsub.f32 %v2786, %v3060
        %v3093 = vmul.f32 %v3061, 1.442695
        %v3094 = vpow.pop %v3093
        %v3095 = vmul.f32 %v3062, 1.442695
        %v3096 = vpow.pop %v3095
        %v3097 = vmul.f32 %v3063, 1.442695
        %v3098 = vpow.pop %v3097
        %v3099 = vmul.f32 %v3064, 1.442695
        %v3100 = vpow.pop %v3099
        %v3101 = vmul.f32 %v3065, 1.442695
        %v3102 = vpow.pop %v3101
        %v3103 = vmul.f32 %v3066, 1.442695
        %v3104 = vpow.pop %v3103
        %v3105 = vmul.f32 %v3067, 1.442695
        %v3106 = vpow.pop %v3105
        %v3107 = vmul.f32 %v3068, 1.442695
        %v3108 = vpow.pop %v3107
        %v3109 = vmul.f32 %v3069, 1.442695
        %v3110 = vpow.pop %v3109
        %v3111 = vmul.f32 %v3070, 1.442695
        %v3112 = vpow.pop %v3111
        %v3113 = vmul.f32 %v3071, 1.442695
        %v3114 = vpow.pop %v3113
        %v3115 = vmul.f32 %v3072, 1.442695
        %v3116 = vpow.pop %v3115
        %v3117 = vmul.f32 %v3073, 1.442695
        %v3118 = vpow.pop %v3117
        %v3119 = vmul.f32 %v3074, 1.442695
        %v3120 = vpow.pop %v3119
        %v3121 = vmul.f32 %v3075, 1.442695
        %v3122 = vpow.pop %v3121
        %v3123 = vmul.f32 %v3076, 1.442695
        %v3124 = vpow.pop %v3123
        %v3125 = vmul.f32 %v3077, 1.442695
        %v3126 = vpow.pop %v3125
        %v3127 = vmul.f32 %v3078, 1.442695
        %v3128 = vpow.pop %v3127
        %v3129 = vmul.f32 %v3079, 1.442695
        %v3130 = vpow.pop %v3129
        %v3131 = vmul.f32 %v3080, 1.442695
        %v3132 = vpow.pop %v3131
        %v3133 = vmul.f32 %v3081, 1.442695
        %v3134 = vpow.pop %v3133
        %v3135 = vmul.f32 %v3082, 1.442695
        %v3136 = vpow.pop %v3135
        %v3137 = vmul.f32 %v3083, 1.442695
        %v3138 = vpow.pop %v3137
        %v3139 = vmul.f32 %v3084, 1.442695
        %v3140 = vpow.pop %v3139
        %v3141 = vmul.f32 %v3085, 1.442695
        %v3142 = vpow.pop %v3141
        %v3143 = vmul.f32 %v3086, 1.442695
        %v3144 = vpow.pop %v3143
        %v3145 = vmul.f32 %v3087, 1.442695
        %v3146 = vpow.pop %v3145
        %v3147 = vmul.f32 %v3088, 1.442695
        %v3148 = vpow.pop %v3147
        %v3149 = vmul.f32 %v3089, 1.442695
        %v3150 = vpow.pop %v3149
        %v3151 = vmul.f32 %v3090, 1.442695
        %v3152 = vpow.pop %v3151
        %v3153 = vmul.f32 %v3091, 1.442695
        %v3154 = vpow.pop %v3153
        %v3155 = vmul.f32 %v3092, 1.442695
        %v3156 = vpow.pop %v3155
        %v3157 = vadd.f32 %v3094, %v3096
        %v3158 = vadd.f32 %v3157, %v3098
        %v3159 = vadd.f32 %v3158, %v3100
        %v3160 = vadd.f32 %v3159, %v3102
        %v3161 = vadd.f32 %v3160, %v3104
        %v3162 = vadd.f32 %v3161, %v3106
        %v3163 = vadd.f32 %v3162, %v3108
        %v3164 = vadd.f32 %v3163, %v3110
        %v3165 = vadd.f32 %v3164, %v3112
        %v3166 = vadd.f32 %v3165, %v3114
        %v3167 = vadd.f32 %v3166, %v3116
        %v3168 = vadd.f32 %v3167, %v3118
        %v3169 = vadd.f32 %v3168, %v3120
        %v3170 = vadd.f32 %v3169, %v3122
        %v3171 = vadd.f32 %v3170, %v3124
        %v3172 = vadd.f32 %v3171, %v3126
        %v3173 = vadd.f32 %v3172, %v3128
        %v3174 = vadd.f32 %v3173, %v3130
        %v3175 = vadd.f32 %v3174, %v3132
        %v3176 = vadd.f32 %v3175, %v3134
        %v3177 = vadd.f32 %v3176, %v3136
        %v3178 = vadd.f32 %v3177, %v3138
        %v3179 = vadd.f32 %v3178, %v3140
        %v3180 = vadd.f32 %v3179, %v3142
        %v3181 = vadd.f32 %v3180, %v3144
        %v3182 = vadd.f32 %v3181, %v3146
        %v3183 = vadd.f32 %v3182, %v3148
        %v3184 = vadd.f32 %v3183, %v3150
        %v3185 = vadd.f32 %v3184, %v3152
        %v3186 = vadd.f32 %v3185, %v3154
        %v3187 = vadd.f32 %v3186, %v3156
        %v3188 = vrot.slane %v3187, 4
        %v3189 = vadd.f32 %v3187, %v3188
        %v3190 = vrot.slane %v3189, 2
        %v3191 = vadd.f32 %v3189, %v3190
        %v3192 = vrot.slane %v3191, 1
        %v3193 = vadd.f32 %v3191, %v3192
        %v3194 = vrcp.pop %v3193
        %v3195 = vmul.f32 %v3094, %v3194
        %v3196 = vmul.f32 %v3096, %v3194
        %v3197 = vmul.f32 %v3098, %v3194
        %v3198 = vmul.f32 %v3100, %v3194
        %v3199 = vmul.f32 %v3102, %v3194
        %v3200 = vmul.f32 %v3104, %v3194
        %v3201 = vmul.f32 %v3106, %v3194
        %v3202 = vmul.f32 %v3108, %v3194
        %v3203 = vmul.f32 %v3110, %v3194
        %v3204 = vmul.f32 %v3112, %v3194
        %v3205 = vmul.f32 %v3114, %v3194
        %v3206 = vmul.f32 %v3116, %v3194
        %v3207 = vmul.f32 %v3118, %v3194
        %v3208 = vmul.f32 %v3120, %v3194
        %v3209 = vmul.f32 %v3122, %v3194
        %v3210 = vmul.f32 %v3124, %v3194
        %v3211 = vmul.f32 %v3126, %v3194
        %v3212 = vmul.f32 %v3128, %v3194
        %v3213 = vmul.f32 %v3130, %v3194
        %v3214 = vmul.f32 %v3132, %v3194
        %v3215 = vmul.f32 %v3134, %v3194
        %v3216 = vmul.f32 %v3136, %v3194
        %v3217 = vmul.f32 %v3138, %v3194
        %v3218 = vmul.f32 %v3140, %v3194
        %v3219 = vmul.f32 %v3142, %v3194
        %v3220 = vmul.f32 %v3144, %v3194
        %v3221 = vmul.f32 %v3146, %v3194
        %v3222 = vmul.f32 %v3148, %v3194
        %v3223 = vmul.f32 %v3150, %v3194
        %v3224 = vmul.f32 %v3152, %v3194
        %v3225 = vmul.f32 %v3154, %v3194
        %v3226 = vmul.f32 %v3156, %v3194
        %3227 = vmax.xlane.f32.xlu0 %v2955
        %v3228 = vpop.xlane.xlu0 %3227
        %3229 = vmax.xlane.f32.xlu0 %v2956
        %v3230 = vpop.xlane.xlu0 %3229
        %3231 = vmax.xlane.f32.xlu0 %v2957
        %v3232 = vpop.xlane.xlu0 %3231
        %3233 = vmax.xlane.f32.xlu0 %v2958
        %v3234 = vpop.xlane.xlu0 %3233
        %3235 = vmax.xlane.f32.xlu0 %v2959
        %v3236 = vpop.xlane.xlu0 %3235
        %3237 = vmax.xlane.f32.xlu0 %v2960
        %v3238 = vpop.xlane.xlu0 %3237
        %3239 = vmax.xlane.f32.xlu0 %v2961
        %v3240 = vpop.xlane.xlu0 %3239
        %3241 = vmax.xlane.f32.xlu0 %v2962
        %v3242 = vpop.xlane.xlu0 %3241
        %3243 = vmax.xlane.f32.xlu0 %v2963
        %v3244 = vpop.xlane.xlu0 %3243
        %3245 = vmax.xlane.f32.xlu0 %v2964
        %v3246 = vpop.xlane.xlu0 %3245
        %3247 = vmax.xlane.f32.xlu0 %v2965
        %v3248 = vpop.xlane.xlu0 %3247
        %3249 = vmax.xlane.f32.xlu0 %v2966
        %v3250 = vpop.xlane.xlu0 %3249
        %3251 = vmax.xlane.f32.xlu0 %v2967
        %v3252 = vpop.xlane.xlu0 %3251
        %3253 = vmax.xlane.f32.xlu0 %v2968
        %v3254 = vpop.xlane.xlu0 %3253
        %3255 = vmax.xlane.f32.xlu0 %v2969
        %v3256 = vpop.xlane.xlu0 %3255
        %3257 = vmax.xlane.f32.xlu0 %v2970
        %v3258 = vpop.xlane.xlu0 %3257
        %3259 = vmax.xlane.f32.xlu0 %v2971
        %v3260 = vpop.xlane.xlu0 %3259
        %3261 = vmax.xlane.f32.xlu0 %v2972
        %v3262 = vpop.xlane.xlu0 %3261
        %3263 = vmax.xlane.f32.xlu0 %v2973
        %v3264 = vpop.xlane.xlu0 %3263
        %3265 = vmax.xlane.f32.xlu0 %v2974
        %v3266 = vpop.xlane.xlu0 %3265
        %3267 = vmax.xlane.f32.xlu0 %v2975
        %v3268 = vpop.xlane.xlu0 %3267
        %3269 = vmax.xlane.f32.xlu0 %v2976
        %v3270 = vpop.xlane.xlu0 %3269
        %3271 = vmax.xlane.f32.xlu0 %v2977
        %v3272 = vpop.xlane.xlu0 %3271
        %3273 = vmax.xlane.f32.xlu0 %v2978
        %v3274 = vpop.xlane.xlu0 %3273
        %3275 = vmax.xlane.f32.xlu0 %v2979
        %v3276 = vpop.xlane.xlu0 %3275
        %3277 = vmax.xlane.f32.xlu0 %v2980
        %v3278 = vpop.xlane.xlu0 %3277
        %3279 = vmax.xlane.f32.xlu0 %v2981
        %v3280 = vpop.xlane.xlu0 %3279
        %3281 = vmax.xlane.f32.xlu0 %v2982
        %v3282 = vpop.xlane.xlu0 %3281
        %3283 = vmax.xlane.f32.xlu0 %v2983
        %v3284 = vpop.xlane.xlu0 %3283
        %3285 = vmax.xlane.f32.xlu0 %v2984
        %v3286 = vpop.xlane.xlu0 %3285
        %3287 = vmax.xlane.f32.xlu0 %v2985
        %v3288 = vpop.xlane.xlu0 %3287
        %3289 = vmax.xlane.f32.xlu0 %v2986
        %v3290 = vpop.xlane.xlu0 %3289
        %v3291 = vsub.f32 %v2955, %v3228
        %v3292 = vsub.f32 %v2956, %v3230
        %v3293 = vsub.f32 %v2957, %v3232
        %v3294 = vsub.f32 %v2958, %v3234
        %v3295 = vsub.f32 %v2959, %v3236
        %v3296 = vsub.f32 %v2960, %v3238
        %v3297 = vsub.f32 %v2961, %v3240
        %v3298 = vsub.f32 %v2962, %v3242
        %v3299 = vsub.f32 %v2963, %v3244
        %v3300 = vsub.f32 %v2964, %v3246
        %v3301 = vsub.f32 %v2965, %v3248
        %v3302 = vsub.f32 %v2966, %v3250
        %v3303 = vsub.f32 %v2967, %v3252
        %v3304 = vsub.f32 %v2968, %v3254
        %v3305 = vsub.f32 %v2969, %v3256
        %v3306 = vsub.f32 %v2970, %v3258
        %v3307 = vsub.f32 %v2971, %v3260
        %v3308 = vsub.f32 %v2972, %v3262
        %v3309 = vsub.f32 %v2973, %v3264
        %v3310 = vsub.f32 %v2974, %v3266
        %v3311 = vsub.f32 %v2975, %v3268
        %v3312 = vsub.f32 %v2976, %v3270
        %v3313 = vsub.f32 %v2977, %v3272
        %v3314 = vsub.f32 %v2978, %v3274
        %v3315 = vsub.f32 %v2979, %v3276
        %v3316 = vsub.f32 %v2980, %v3278
        %v3317 = vsub.f32 %v2981, %v3280
        %v3318 = vsub.f32 %v2982, %v3282
        %v3319 = vsub.f32 %v2983, %v3284
        %v3320 = vsub.f32 %v2984, %v3286
        %v3321 = vsub.f32 %v2985, %v3288
        %v3322 = vsub.f32 %v2986, %v3290
        %v3323 = vmul.f32 %v3291, 1.442695
        %v3324 = vpow.pop %v3323
        %v3325 = vmul.f32 %v3292, 1.442695
        %v3326 = vpow.pop %v3325
        %v3327 = vmul.f32 %v3293, 1.442695
        %v3328 = vpow.pop %v3327
        %v3329 = vmul.f32 %v3294, 1.442695
        %v3330 = vpow.pop %v3329
        %v3331 = vmul.f32 %v3295, 1.442695
        %v3332 = vpow.pop %v3331
        %v3333 = vmul.f32 %v3296, 1.442695
        %v3334 = vpow.pop %v3333
        %v3335 = vmul.f32 %v3297, 1.442695
        %v3336 = vpow.pop %v3335
        %v3337 = vmul.f32 %v3298, 1.442695
        %v3338 = vpow.pop %v3337
        %v3339 = vmul.f32 %v3299, 1.442695
        %v3340 = vpow.pop %v3339
        %v3341 = vmul.f32 %v3300, 1.442695
        %v3342 = vpow.pop %v3341
        %v3343 = vmul.f32 %v3301, 1.442695
        %v3344 = vpow.pop %v3343
        %v3345 = vmul.f32 %v3302, 1.442695
        %v3346 = vpow.pop %v3345
        %v3347 = vmul.f32 %v3303, 1.442695
        %v3348 = vpow.pop %v3347
        %v3349 = vmul.f32 %v3304, 1.442695
        %v3350 = vpow.pop %v3349
        %v3351 = vmul.f32 %v3305, 1.442695
        %v3352 = vpow.pop %v3351
        %v3353 = vmul.f32 %v3306, 1.442695
        %v3354 = vpow.pop %v3353
        %v3355 = vmul.f32 %v3307, 1.442695
        %v3356 = vpow.pop %v3355
        %v3357 = vmul.f32 %v3308, 1.442695
        %v3358 = vpow.pop %v3357
        %v3359 = vmul.f32 %v3309, 1.442695
        %v3360 = vpow.pop %v3359
        %v3361 = vmul.f32 %v3310, 1.442695
        %v3362 = vpow.pop %v3361
        %v3363 = vmul.f32 %v3311, 1.442695
        %v3364 = vpow.pop %v3363
        %v3365 = vmul.f32 %v3312, 1.442695
        %v3366 = vpow.pop %v3365
        %v3367 = vmul.f32 %v3313, 1.442695
        %v3368 = vpow.pop %v3367
        %v3369 = vmul.f32 %v3314, 1.442695
        %v3370 = vpow.pop %v3369
        %v3371 = vmul.f32 %v3315, 1.442695
        %v3372 = vpow.pop %v3371
        %v3373 = vmul.f32 %v3316, 1.442695
        %v3374 = vpow.pop %v3373
        %v3375 = vmul.f32 %v3317, 1.442695
        %v3376 = vpow.pop %v3375
        %v3377 = vmul.f32 %v3318, 1.442695
        %v3378 = vpow.pop %v3377
        %v3379 = vmul.f32 %v3319, 1.442695
        %v3380 = vpow.pop %v3379
        %v3381 = vmul.f32 %v3320, 1.442695
        %v3382 = vpow.pop %v3381
        %v3383 = vmul.f32 %v3321, 1.442695
        %v3384 = vpow.pop %v3383
        %v3385 = vmul.f32 %v3322, 1.442695
        %v3386 = vpow.pop %v3385
        %v3387 = vpack.c.bf16 %v3326, %v3324
        %v3388 = vpack.c.bf16 %v3330, %v3328
        %v3389 = vpack.c.bf16 %v3334, %v3332
        %v3390 = vpack.c.bf16 %v3338, %v3336
        %v3391 = vpack.c.bf16 %v3342, %v3340
        %v3392 = vpack.c.bf16 %v3346, %v3344
        %v3393 = vpack.c.bf16 %v3350, %v3348
        %v3394 = vpack.c.bf16 %v3354, %v3352
        %v3395 = vpack.c.bf16 %v3358, %v3356
        %v3396 = vpack.c.bf16 %v3362, %v3360
        %v3397 = vpack.c.bf16 %v3366, %v3364
        %v3398 = vpack.c.bf16 %v3370, %v3368
        %v3399 = vpack.c.bf16 %v3374, %v3372
        %v3400 = vpack.c.bf16 %v3378, %v3376
        %v3401 = vpack.c.bf16 %v3382, %v3380
        %v3402 = vpack.c.bf16 %v3386, %v3384
        %3403 = vmatprep.subr.bf16.mxu0 0
        %3404 = vmatpush1.bf16.msra.mxu0 %v1513
        %3405 = vmatprep.subr.bf16.mxu0 0
        %3406 = vmatpush1.bf16.msra.mxu0 %v1514
        %3407 = vmatprep.subr.bf16.mxu0 0
        %3408 = vmatpush1.bf16.msra.mxu0 %v1515
        %3409 = vmatprep.subr.bf16.mxu0 0
        %3410 = vmatpush1.bf16.msra.mxu0 %v1516
        %3411 = vmatprep.subr.bf16.mxu0 0
        %3412 = vmatpush1.bf16.msra.mxu0 %v1517
        %3413 = vmatprep.subr.bf16.mxu0 0
        %3414 = vmatpush1.bf16.msra.mxu0 %v1518
        %3415 = vmatprep.subr.bf16.mxu0 0
        %3416 = vmatpush1.bf16.msra.mxu0 %v1519
        %3417 = vmatprep.subr.bf16.mxu0 0
        %3418 = vmatpush1.bf16.msra.mxu0 %v1520
        %3419 = vmatprep.subr.bf16.mxu0 0
        %3420 = vmatpush1.bf16.msra.mxu0 0
        %3421 = vmatprep.subr.bf16.mxu0 0
        %3422 = vmatpush1.bf16.msra.mxu0 0
        %3423 = vmatprep.subr.bf16.mxu0 0
        %3424 = vmatpush1.bf16.msra.mxu0 0
        %3425 = vmatprep.subr.bf16.mxu0 0
        %3426 = vmatpush1.bf16.msra.mxu0 0
        %3427 = vmatprep.subr.bf16.mxu0 0
        %3428 = vmatpush1.bf16.msra.mxu0 0
        %3429 = vmatprep.subr.bf16.mxu0 0
        %3430 = vmatpush1.bf16.msra.mxu0 0
        %3431 = vmatprep.subr.bf16.mxu0 0
        %3432 = vmatpush1.bf16.msra.mxu0 0
        %3433 = vmatprep.subr.bf16.mxu0 0
        %3434 = vmatpush1.bf16.msra.mxu0 0
        %3435 = vmatprep.mubr.bf16.mxu0 0
        %3436 = vmatmul.mubr.bf16.gmra.mrb[0].mxu0 %v3387
        %v3437 = vpop.f32.mrb[0].mxu0
        %v3438 = vadd.f32 0.0, %v3437
        %v3439 = vpop.f32.mrb[0].mxu0
        %v3440 = vpop.f32.mrb[0].mxu0
        %v3441 = vadd.f32 0.0, %v3440
        %v3442 = vpop.f32.mrb[0].mxu0
        %3443 = vmatprep.mubr.bf16.mxu0 0
        %3444 = vmatmul.mubr.bf16.gmra.mrb[0].mxu0 %v3388
        %v3445 = vpop.f32.mrb[0].mxu0
        %v3446 = vadd.f32 0.0, %v3445
        %v3447 = vpop.f32.mrb[0].mxu0
        %v3448 = vpop.f32.mrb[0].mxu0
        %v3449 = vadd.f32 0.0, %v3448
        %v3450 = vpop.f32.mrb[0].mxu0
        %3451 = vmatprep.mubr.bf16.mxu0 0
        %3452 = vmatmul.mubr.bf16.gmra.mrb[0].mxu0 %v3389
        %v3453 = vpop.f32.mrb[0].mxu0
        %v3454 = vadd.f32 0.0, %v3453
        %v3455 = vpop.f32.mrb[0].mxu0
        %v3456 = vpop.f32.mrb[0].mxu0
        %v3457 = vadd.f32 0.0, %v3456
        %v3458 = vpop.f32.mrb[0].mxu0
        %3459 = vmatprep.mubr.bf16.mxu0 0
        %3460 = vmatmul.mubr.bf16.gmra.mrb[0].mxu0 %v3390
        %v3461 = vpop.f32.mrb[0].mxu0
        %v3462 = vadd.f32 0.0, %v3461
        %v3463 = vpop.f32.mrb[0].mxu0
        %v3464 = vpop.f32.mrb[0].mxu0
        %v3465 = vadd.f32 0.0, %v3464
        %v3466 = vpop.f32.mrb[0].mxu0
        %3467 = vmatprep.mubr.bf16.mxu0 0
        %3468 = vmatmul.mubr.bf16.gmra.mrb[0].mxu0 %v3391
        %v3469 = vpop.f32.mrb[0].mxu0
        %v3470 = vadd.f32 0.0, %v3469
        %v3471 = vpop.f32.mrb[0].mxu0
        %v3472 = vpop.f32.mrb[0].mxu0
        %v3473 = vadd.f32 0.0, %v3472
        %v3474 = vpop.f32.mrb[0].mxu0
        %3475 = vmatprep.mubr.bf16.mxu0 0
        %3476 = vmatmul.mubr.bf16.gmra.mrb[0].mxu0 %v3392
        %v3477 = vpop.f32.mrb[0].mxu0
        %v3478 = vadd.f32 0.0, %v3477
        %v3479 = vpop.f32.mrb[0].mxu0
        %v3480 = vpop.f32.mrb[0].mxu0
        %v3481 = vadd.f32 0.0, %v3480
        %v3482 = vpop.f32.mrb[0].mxu0
        %3483 = vmatprep.mubr.bf16.mxu0 0
        %3484 = vmatmul.mubr.bf16.gmra.mrb[0].mxu0 %v3393
        %v3485 = vpop.f32.mrb[0].mxu0
        %v3486 = vadd.f32 0.0, %v3485
        %v3487 = vpop.f32.mrb[0].mxu0
        %v3488 = vpop.f32.mrb[0].mxu0
        %v3489 = vadd.f32 0.0, %v3488
        %v3490 = vpop.f32.mrb[0].mxu0
        %3491 = vmatprep.mubr.bf16.mxu0 0
        %3492 = vmatmul.mubr.bf16.gmra.mrb[0].mxu0 %v3394
        %v3493 = vpop.f32.mrb[0].mxu0
        %v3494 = vadd.f32 0.0, %v3493
        %v3495 = vpop.f32.mrb[0].mxu0
        %v3496 = vpop.f32.mrb[0].mxu0
        %v3497 = vadd.f32 0.0, %v3496
        %v3498 = vpop.f32.mrb[0].mxu0
        %3499 = vmatprep.mubr.bf16.mxu0 0
        %3500 = vmatmul.mubr.bf16.gmra.mrb[0].mxu0 %v3395
        %v3501 = vpop.f32.mrb[0].mxu0
        %v3502 = vadd.f32 0.0, %v3501
        %v3503 = vpop.f32.mrb[0].mxu0
        %v3504 = vpop.f32.mrb[0].mxu0
        %v3505 = vadd.f32 0.0, %v3504
        %v3506 = vpop.f32.mrb[0].mxu0
        %3507 = vmatprep.mubr.bf16.mxu0 0
        %3508 = vmatmul.mubr.bf16.gmra.mrb[0].mxu0 %v3396
        %v3509 = vpop.f32.mrb[0].mxu0
        %v3510 = vadd.f32 0.0, %v3509
        %v3511 = vpop.f32.mrb[0].mxu0
        %v3512 = vpop.f32.mrb[0].mxu0
        %v3513 = vadd.f32 0.0, %v3512
        %v3514 = vpop.f32.mrb[0].mxu0
        %3515 = vmatprep.mubr.bf16.mxu0 0
        %3516 = vmatmul.mubr.bf16.gmra.mrb[0].mxu0 %v3397
        %v3517 = vpop.f32.mrb[0].mxu0
        %v3518 = vadd.f32 0.0, %v3517
        %v3519 = vpop.f32.mrb[0].mxu0
        %v3520 = vpop.f32.mrb[0].mxu0
        %v3521 = vadd.f32 0.0, %v3520
        %v3522 = vpop.f32.mrb[0].mxu0
        %3523 = vmatprep.mubr.bf16.mxu0 0
        %3524 = vmatmul.mubr.bf16.gmra.mrb[0].mxu0 %v3398
        %v3525 = vpop.f32.mrb[0].mxu0
        %v3526 = vadd.f32 0.0, %v3525
        %v3527 = vpop.f32.mrb[0].mxu0
        %v3528 = vpop.f32.mrb[0].mxu0
        %v3529 = vadd.f32 0.0, %v3528
        %v3530 = vpop.f32.mrb[0].mxu0
        %3531 = vmatprep.mubr.bf16.mxu0 0
        %3532 = vmatmul.mubr.bf16.gmra.mrb[0].mxu0 %v3399
        %v3533 = vpop.f32.mrb[0].mxu0
        %v3534 = vadd.f32 0.0, %v3533
        %v3535 = vpop.f32.mrb[0].mxu0
        %v3536 = vpop.f32.mrb[0].mxu0
        %v3537 = vadd.f32 0.0, %v3536
        %v3538 = vpop.f32.mrb[0].mxu0
        %3539 = vmatprep.mubr.bf16.mxu0 0
        %3540 = vmatmul.mubr.bf16.gmra.mrb[0].mxu0 %v3400
        %v3541 = vpop.f32.mrb[0].mxu0
        %v3542 = vadd.f32 0.0, %v3541
        %v3543 = vpop.f32.mrb[0].mxu0
        %v3544 = vpop.f32.mrb[0].mxu0
        %v3545 = vadd.f32 0.0, %v3544
        %v3546 = vpop.f32.mrb[0].mxu0
        %3547 = vmatprep.mubr.bf16.mxu0 0
        %3548 = vmatmul.mubr.bf16.gmra.mrb[0].mxu0 %v3401
        %v3549 = vpop.f32.mrb[0].mxu0
        %v3550 = vadd.f32 0.0, %v3549
        %v3551 = vpop.f32.mrb[0].mxu0
        %v3552 = vpop.f32.mrb[0].mxu0
        %v3553 = vadd.f32 0.0, %v3552
        %v3554 = vpop.f32.mrb[0].mxu0
        %3555 = vmatprep.mubr.bf16.mxu0 0
        %3556 = vmatmul.mubr.bf16.gmra.mrb[0].mxu0 %v3402
        %v3557 = vpop.f32.mrb[0].mxu0
        %v3558 = vadd.f32 0.0, %v3557
        %v3559 = vpop.f32.mrb[0].mxu0
        %v3560 = vpop.f32.mrb[0].mxu0
        %v3561 = vadd.f32 0.0, %v3560
        %v3562 = vpop.f32.mrb[0].mxu0
        %3563 = vdwg.mxu0
        %v3564 = vrcp.pop %v3438
        %v3565 = vrcp.pop %v3441
        %v3566 = vrcp.pop %v3446
        %v3567 = vrcp.pop %v3449
        %v3568 = vrcp.pop %v3454
        %v3569 = vrcp.pop %v3457
        %v3570 = vrcp.pop %v3462
        %v3571 = vrcp.pop %v3465
        %v3572 = vrcp.pop %v3470
        %v3573 = vrcp.pop %v3473
        %v3574 = vrcp.pop %v3478
        %v3575 = vrcp.pop %v3481
        %v3576 = vrcp.pop %v3486
        %v3577 = vrcp.pop %v3489
        %v3578 = vrcp.pop %v3494
        %v3579 = vrcp.pop %v3497
        %v3580 = vrcp.pop %v3502
        %v3581 = vrcp.pop %v3505
        %v3582 = vrcp.pop %v3510
        %v3583 = vrcp.pop %v3513
        %v3584 = vrcp.pop %v3518
        %v3585 = vrcp.pop %v3521
        %v3586 = vrcp.pop %v3526
        %v3587 = vrcp.pop %v3529
        %v3588 = vrcp.pop %v3534
        %v3589 = vrcp.pop %v3537
        %v3590 = vrcp.pop %v3542
        %v3591 = vrcp.pop %v3545
        %v3592 = vrcp.pop %v3550
        %v3593 = vrcp.pop %v3553
        %v3594 = vrcp.pop %v3558
        %v3595 = vrcp.pop %v3561
        %v3596 = vmul.f32 %v3324, %v3564
        %v3597 = vmul.f32 %v3326, %v3565
        %v3598 = vmul.f32 %v3328, %v3566
        %v3599 = vmul.f32 %v3330, %v3567
        %v3600 = vmul.f32 %v3332, %v3568
        %v3601 = vmul.f32 %v3334, %v3569
        %v3602 = vmul.f32 %v3336, %v3570
        %v3603 = vmul.f32 %v3338, %v3571
        %v3604 = vmul.f32 %v3340, %v3572
        %v3605 = vmul.f32 %v3342, %v3573
        %v3606 = vmul.f32 %v3344, %v3574
        %v3607 = vmul.f32 %v3346, %v3575
        %v3608 = vmul.f32 %v3348, %v3576
        %v3609 = vmul.f32 %v3350, %v3577
        %v3610 = vmul.f32 %v3352, %v3578
        %v3611 = vmul.f32 %v3354, %v3579
        %v3612 = vmul.f32 %v3356, %v3580
        %v3613 = vmul.f32 %v3358, %v3581
        %v3614 = vmul.f32 %v3360, %v3582
        %v3615 = vmul.f32 %v3362, %v3583
        %v3616 = vmul.f32 %v3364, %v3584
        %v3617 = vmul.f32 %v3366, %v3585
        %v3618 = vmul.f32 %v3368, %v3586
        %v3619 = vmul.f32 %v3370, %v3587
        %v3620 = vmul.f32 %v3372, %v3588
        %v3621 = vmul.f32 %v3374, %v3589
        %v3622 = vmul.f32 %v3376, %v3590
        %v3623 = vmul.f32 %v3378, %v3591
        %v3624 = vmul.f32 %v3380, %v3592
        %v3625 = vmul.f32 %v3382, %v3593
        %v3626 = vmul.f32 %v3384, %v3594
        %v3627 = vmul.f32 %v3386, %v3595
        %v3628 = vpack.c.bf16 %v3196, %v3195
        %v3629 = vpack.c.bf16 %v3198, %v3197
        %v3630 = vpack.c.bf16 %v3200, %v3199
        %v3631 = vpack.c.bf16 %v3202, %v3201
        %v3632 = vpack.c.bf16 %v3204, %v3203
        %v3633 = vpack.c.bf16 %v3206, %v3205
        %v3634 = vpack.c.bf16 %v3208, %v3207
        %v3635 = vpack.c.bf16 %v3210, %v3209
        %v3636 = vpack.c.bf16 %v3212, %v3211
        %v3637 = vpack.c.bf16 %v3214, %v3213
        %v3638 = vpack.c.bf16 %v3216, %v3215
        %v3639 = vpack.c.bf16 %v3218, %v3217
        %v3640 = vpack.c.bf16 %v3220, %v3219
        %v3641 = vpack.c.bf16 %v3222, %v3221
        %v3642 = vpack.c.bf16 %v3224, %v3223
        %v3643 = vpack.c.bf16 %v3226, %v3225
        %v3644 = vpack.c.bf16 %v2993, %v2992
        %v3645 = vpack.c.bf16 %v2995, %v2994
        %v3646 = vpack.c.bf16 %v2997, %v2996
        %v3647 = vpack.c.bf16 %v2999, %v2998
        %v3648 = vpack.c.bf16 %v3001, %v3000
        %v3649 = vpack.c.bf16 %v3003, %v3002
        %v3650 = vpack.c.bf16 %v3005, %v3004
        %v3651 = vpack.c.bf16 %v3007, %v3006
        %v3652 = vpack.c.bf16 %v3009, %v3008
        %v3653 = vpack.c.bf16 %v3011, %v3010
        %v3654 = vpack.c.bf16 %v3013, %v3012
        %v3655 = vpack.c.bf16 %v3015, %v3014
        %v3656 = vpack.c.bf16 %v3017, %v3016
        %v3657 = vpack.c.bf16 %v3019, %v3018
        %v3658 = vpack.c.bf16 %v3021, %v3020
        %v3659 = vpack.c.bf16 %v3023, %v3022
        %3660 = vxpose.xlu0.c.b16.start [1/8] %v3628, 128
        %3661 = vxpose.xlu0.c.b16.cont [2/8] %v3629, 128
        %3662 = vxpose.xlu0.c.b16.cont [3/8] %v3630, 128
        %3663 = vxpose.xlu0.c.b16.cont [4/8] %v3631, 128
        %3664 = vxpose.xlu0.c.b16.cont [5/8] %v3632, 128
        %3665 = vxpose.xlu0.c.b16.cont [6/8] %v3633, 128
        %3666 = vxpose.xlu0.c.b16.cont [7/8] %v3634, 128
        %3667 = vxpose.xlu0.c.b16.end [8/8] %v3635, 128
        %v3668 = vpop.trf.xlu0
        %v3669 = vpop.trf.xlu0
        %v3670 = vpop.trf.xlu0
        %v3671 = vpop.trf.xlu0
        %v3672 = vpop.trf.xlu0
        %v3673 = vpop.trf.xlu0
        %v3674 = vpop.trf.xlu0
        %v3675 = vpop.trf.xlu0
        %3676 = vxpose.xlu0.c.b16.start [1/8] %v3636, 128
        %3677 = vxpose.xlu0.c.b16.cont [2/8] %v3637, 128
        %3678 = vxpose.xlu0.c.b16.cont [3/8] %v3638, 128
        %3679 = vxpose.xlu0.c.b16.cont [4/8] %v3639, 128
        %3680 = vxpose.xlu0.c.b16.cont [5/8] %v3640, 128
        %3681 = vxpose.xlu0.c.b16.cont [6/8] %v3641, 128
        %3682 = vxpose.xlu0.c.b16.cont [7/8] %v3642, 128
        %3683 = vxpose.xlu0.c.b16.end [8/8] %v3643, 128
        %v3684 = vpop.trf.xlu0
        %v3685 = vpop.trf.xlu0
        %v3686 = vpop.trf.xlu0
        %v3687 = vpop.trf.xlu0
        %v3688 = vpop.trf.xlu0
        %v3689 = vpop.trf.xlu0
        %v3690 = vpop.trf.xlu0
        %v3691 = vpop.trf.xlu0
        %3692 = vmatprep.subr.bf16.mxu0 0
        %3693 = vmatpush1.bf16.msra.mxu0 %v3644
        %3694 = vmatprep.subr.bf16.mxu0 0
        %3695 = vmatpush1.bf16.msra.mxu0 %v3645
        %3696 = vmatprep.subr.bf16.mxu0 0
        %3697 = vmatpush1.bf16.msra.mxu0 %v3646
        %3698 = vmatprep.subr.bf16.mxu0 0
        %3699 = vmatpush1.bf16.msra.mxu0 %v3647
        %3700 = vmatprep.subr.bf16.mxu0 0
        %3701 = vmatpush1.bf16.msra.mxu0 %v3648
        %3702 = vmatprep.subr.bf16.mxu0 0
        %3703 = vmatpush1.bf16.msra.mxu0 %v3649
        %3704 = vmatprep.subr.bf16.mxu0 0
        %3705 = vmatpush1.bf16.msra.mxu0 %v3650
        %3706 = vmatprep.subr.bf16.mxu0 0
        %3707 = vmatpush1.bf16.msra.mxu0 %v3651
        %3708 = vmatprep.subr.bf16.mxu0 0
        %3709 = vmatpush1.bf16.msra.mxu0 %v3652
        %3710 = vmatprep.subr.bf16.mxu0 0
        %3711 = vmatpush1.bf16.msra.mxu0 %v3653
        %3712 = vmatprep.subr.bf16.mxu0 0
        %3713 = vmatpush1.bf16.msra.mxu0 %v3654
        %3714 = vmatprep.subr.bf16.mxu0 0
        %3715 = vmatpush1.bf16.msra.mxu0 %v3655
        %3716 = vmatprep.subr.bf16.mxu0 0
        %3717 = vmatpush1.bf16.msra.mxu0 %v3656
        %3718 = vmatprep.subr.bf16.mxu0 0
        %3719 = vmatpush1.bf16.msra.mxu0 %v3657
        %3720 = vmatprep.subr.bf16.mxu0 0
        %3721 = vmatpush1.bf16.msra.mxu0 %v3658
        %3722 = vmatprep.subr.bf16.mxu0 0
        %3723 = vmatpush1.bf16.msra.mxu0 %v3659
        %3724 = vmatprep.mubr.bf16.mxu0 %v3684
        %3725 = vmatmul.mubr.bf16.gmra.mrb[0].mxu0 %v3668
        %v3726 = vpop.f32.mrb[0].mxu0
        %v3727 = vadd.f32 0.0, %v3726
        %v3728 = vpop.f32.mrb[0].mxu0
        %v3729 = vpop.f32.mrb[0].mxu0
        %v3730 = vadd.f32 0.0, %v3729
        %v3731 = vpop.f32.mrb[0].mxu0
        %3732 = vmatprep.mubr.bf16.mxu0 %v3685
        %3733 = vmatmul.mubr.bf16.gmra.mrb[0].mxu0 %v3669
        %v3734 = vpop.f32.mrb[0].mxu0
        %v3735 = vadd.f32 0.0, %v3734
        %v3736 = vpop.f32.mrb[0].mxu0
        %v3737 = vpop.f32.mrb[0].mxu0
        %v3738 = vadd.f32 0.0, %v3737
        %v3739 = vpop.f32.mrb[0].mxu0
        %3740 = vmatprep.mubr.bf16.mxu0 %v3686
        %3741 = vmatmul.mubr.bf16.gmra.mrb[0].mxu0 %v3670
        %v3742 = vpop.f32.mrb[0].mxu0
        %v3743 = vadd.f32 0.0, %v3742
        %v3744 = vpop.f32.mrb[0].mxu0
        %v3745 = vpop.f32.mrb[0].mxu0
        %v3746 = vadd.f32 0.0, %v3745
        %v3747 = vpop.f32.mrb[0].mxu0
        %3748 = vmatprep.mubr.bf16.mxu0 %v3687
        %3749 = vmatmul.mubr.bf16.gmra.mrb[0].mxu0 %v3671
        %v3750 = vpop.f32.mrb[0].mxu0
        %v3751 = vadd.f32 0.0, %v3750
        %v3752 = vpop.f32.mrb[0].mxu0
        %v3753 = vpop.f32.mrb[0].mxu0
        %v3754 = vadd.f32 0.0, %v3753
        %v3755 = vpop.f32.mrb[0].mxu0
        %3756 = vmatprep.mubr.bf16.mxu0 %v3688
        %3757 = vmatmul.mubr.bf16.gmra.mrb[0].mxu0 %v3672
        %v3758 = vpop.f32.mrb[0].mxu0
        %v3759 = vadd.f32 0.0, %v3758
        %v3760 = vpop.f32.mrb[0].mxu0
        %v3761 = vpop.f32.mrb[0].mxu0
        %v3762 = vadd.f32 0.0, %v3761
        %v3763 = vpop.f32.mrb[0].mxu0
        %3764 = vmatprep.mubr.bf16.mxu0 %v3689
        %3765 = vmatmul.mubr.bf16.gmra.mrb[0].mxu0 %v3673
        %v3766 = vpop.f32.mrb[0].mxu0
        %v3767 = vadd.f32 0.0, %v3766
        %v3768 = vpop.f32.mrb[0].mxu0
        %v3769 = vpop.f32.mrb[0].mxu0
        %v3770 = vadd.f32 0.0, %v3769
        %v3771 = vpop.f32.mrb[0].mxu0
        %3772 = vmatprep.mubr.bf16.mxu0 %v3690
        %3773 = vmatmul.mubr.bf16.gmra.mrb[0].mxu0 %v3674
        %v3774 = vpop.f32.mrb[0].mxu0
        %v3775 = vadd.f32 0.0, %v3774
        %v3776 = vpop.f32.mrb[0].mxu0
        %v3777 = vpop.f32.mrb[0].mxu0
        %v3778 = vadd.f32 0.0, %v3777
        %v3779 = vpop.f32.mrb[0].mxu0
        %3780 = vmatprep.mubr.bf16.mxu0 %v3691
        %3781 = vmatmul.mubr.bf16.gmra.mrb[0].mxu0 %v3675
        %v3782 = vpop.f32.mrb[0].mxu0
        %v3783 = vadd.f32 0.0, %v3782
        %v3784 = vpop.f32.mrb[0].mxu0
        %v3785 = vpop.f32.mrb[0].mxu0
        %v3786 = vadd.f32 0.0, %v3785
        %v3787 = vpop.f32.mrb[0].mxu0
        %3788 = vdwg.mxu0
        %v3789 = vpack.c.bf16 %v3730, %v3727
        %v3790 = vpack.c.bf16 %v3738, %v3735
        %v3791 = vpack.c.bf16 %v3746, %v3743
        %v3792 = vpack.c.bf16 %v3754, %v3751
        %v3793 = vpack.c.bf16 %v3762, %v3759
        %v3794 = vpack.c.bf16 %v3770, %v3767
        %v3795 = vpack.c.bf16 %v3778, %v3775
        %v3796 = vpack.c.bf16 %v3786, %v3783
        %v3797 = vmul.bf16 %v3789, %v1513
        %v3798 = vmul.bf16 %v3790, %v1514
        %v3799 = vmul.bf16 %v3791, %v1515
        %v3800 = vmul.bf16 %v3792, %v1516
        %v3801 = vmul.bf16 %v3793, %v1517
        %v3802 = vmul.bf16 %v3794, %v1518
        %v3803 = vmul.bf16 %v3795, %v1519
        %v3804 = vmul.bf16 %v3796, %v1520
        %v3805 = vpack.c.bf16 %v3597, %v3596
        %v3806 = vpack.c.bf16 %v3599, %v3598
        %v3807 = vpack.c.bf16 %v3601, %v3600
        %v3808 = vpack.c.bf16 %v3603, %v3602
        %v3809 = vpack.c.bf16 %v3605, %v3604
        %v3810 = vpack.c.bf16 %v3607, %v3606
        %v3811 = vpack.c.bf16 %v3609, %v3608
        %v3812 = vpack.c.bf16 %v3611, %v3610
        %v3813 = vpack.c.bf16 %v3613, %v3612
        %v3814 = vpack.c.bf16 %v3615, %v3614
        %v3815 = vpack.c.bf16 %v3617, %v3616
        %v3816 = vpack.c.bf16 %v3619, %v3618
        %v3817 = vpack.c.bf16 %v3621, %v3620
        %v3818 = vpack.c.bf16 %v3623, %v3622
        %v3819 = vpack.c.bf16 %v3625, %v3624
        %v3820 = vpack.c.bf16 %v3627, %v3626
        %3821 = vmatprep.subr.bf16.mxu0 0
        %3822 = vmatpush1.bf16.msra.mxu0 %v3797
        %3823 = vmatprep.subr.bf16.mxu0 0
        %3824 = vmatpush1.bf16.msra.mxu0 %v3798
        %3825 = vmatprep.subr.bf16.mxu0 0
        %3826 = vmatpush1.bf16.msra.mxu0 %v3799
        %3827 = vmatprep.subr.bf16.mxu0 0
        %3828 = vmatpush1.bf16.msra.mxu0 %v3800
        %3829 = vmatprep.subr.bf16.mxu0 0
        %3830 = vmatpush1.bf16.msra.mxu0 %v3801
        %3831 = vmatprep.subr.bf16.mxu0 0
        %3832 = vmatpush1.bf16.msra.mxu0 %v3802
        %3833 = vmatprep.subr.bf16.mxu0 0
        %3834 = vmatpush1.bf16.msra.mxu0 %v3803
        %3835 = vmatprep.subr.bf16.mxu0 0
        %3836 = vmatpush1.bf16.msra.mxu0 %v3804
        %3837 = vmatprep.subr.bf16.mxu0 0
        %3838 = vmatpush1.bf16.msra.mxu0 0
        %3839 = vmatprep.subr.bf16.mxu0 0
        %3840 = vmatpush1.bf16.msra.mxu0 0
        %3841 = vmatprep.subr.bf16.mxu0 0
        %3842 = vmatpush1.bf16.msra.mxu0 0
        %3843 = vmatprep.subr.bf16.mxu0 0
        %3844 = vmatpush1.bf16.msra.mxu0 0
        %3845 = vmatprep.subr.bf16.mxu0 0
        %3846 = vmatpush1.bf16.msra.mxu0 0
        %3847 = vmatprep.subr.bf16.mxu0 0
        %3848 = vmatpush1.bf16.msra.mxu0 0
        %3849 = vmatprep.subr.bf16.mxu0 0
        %3850 = vmatpush1.bf16.msra.mxu0 0
        %3851 = vmatprep.subr.bf16.mxu0 0
        %3852 = vmatpush1.bf16.msra.mxu0 0
        %3853 = vmatprep.mubr.bf16.mxu0 0
        %3854 = vmatmul.mubr.bf16.gmra.mrb[0].mxu0 %v3805
        %v3855 = vpop.f32.mrb[0].mxu0
        %v3856 = vadd.f32 0.0, %v3855
        %v3857 = vpop.f32.mrb[0].mxu0
        %v3858 = vpop.f32.mrb[0].mxu0
        %v3859 = vadd.f32 0.0, %v3858
        %v3860 = vpop.f32.mrb[0].mxu0
        %3861 = vmatprep.mubr.bf16.mxu0 0
        %3862 = vmatmul.mubr.bf16.gmra.mrb[0].mxu0 %v3806
        %v3863 = vpop.f32.mrb[0].mxu0
        %v3864 = vadd.f32 0.0, %v3863
        %v3865 = vpop.f32.mrb[0].mxu0
        %v3866 = vpop.f32.mrb[0].mxu0
        %v3867 = vadd.f32 0.0, %v3866
        %v3868 = vpop.f32.mrb[0].mxu0
        %3869 = vmatprep.mubr.bf16.mxu0 0
        %3870 = vmatmul.mubr.bf16.gmra.mrb[0].mxu0 %v3807
        %v3871 = vpop.f32.mrb[0].mxu0
        %v3872 = vadd.f32 0.0, %v3871
        %v3873 = vpop.f32.mrb[0].mxu0
        %v3874 = vpop.f32.mrb[0].mxu0
        %v3875 = vadd.f32 0.0, %v3874
        %v3876 = vpop.f32.mrb[0].mxu0
        %3877 = vmatprep.mubr.bf16.mxu0 0
        %3878 = vmatmul.mubr.bf16.gmra.mrb[0].mxu0 %v3808
        %v3879 = vpop.f32.mrb[0].mxu0
        %v3880 = vadd.f32 0.0, %v3879
        %v3881 = vpop.f32.mrb[0].mxu0
        %v3882 = vpop.f32.mrb[0].mxu0
        %v3883 = vadd.f32 0.0, %v3882
        %v3884 = vpop.f32.mrb[0].mxu0
        %3885 = vmatprep.mubr.bf16.mxu0 0
        %3886 = vmatmul.mubr.bf16.gmra.mrb[0].mxu0 %v3809
        %v3887 = vpop.f32.mrb[0].mxu0
        %v3888 = vadd.f32 0.0, %v3887
        %v3889 = vpop.f32.mrb[0].mxu0
        %v3890 = vpop.f32.mrb[0].mxu0
        %v3891 = vadd.f32 0.0, %v3890
        %v3892 = vpop.f32.mrb[0].mxu0
        %3893 = vmatprep.mubr.bf16.mxu0 0
        %3894 = vmatmul.mubr.bf16.gmra.mrb[0].mxu0 %v3810
        %v3895 = vpop.f32.mrb[0].mxu0
        %v3896 = vadd.f32 0.0, %v3895
        %v3897 = vpop.f32.mrb[0].mxu0
        %v3898 = vpop.f32.mrb[0].mxu0
        %v3899 = vadd.f32 0.0, %v3898
        %v3900 = vpop.f32.mrb[0].mxu0
        %3901 = vmatprep.mubr.bf16.mxu0 0
        %3902 = vmatmul.mubr.bf16.gmra.mrb[0].mxu0 %v3811
        %v3903 = vpop.f32.mrb[0].mxu0
        %v3904 = vadd.f32 0.0, %v3903
        %v3905 = vpop.f32.mrb[0].mxu0
        %v3906 = vpop.f32.mrb[0].mxu0
        %v3907 = vadd.f32 0.0, %v3906
        %v3908 = vpop.f32.mrb[0].mxu0
        %3909 = vmatprep.mubr.bf16.mxu0 0
        %3910 = vmatmul.mubr.bf16.gmra.mrb[0].mxu0 %v3812
        %v3911 = vpop.f32.mrb[0].mxu0
        %v3912 = vadd.f32 0.0, %v3911
        %v3913 = vpop.f32.mrb[0].mxu0
        %v3914 = vpop.f32.mrb[0].mxu0
        %v3915 = vadd.f32 0.0, %v3914
        %v3916 = vpop.f32.mrb[0].mxu0
        %3917 = vmatprep.mubr.bf16.mxu0 0
        %3918 = vmatmul.mubr.bf16.gmra.mrb[0].mxu0 %v3813
        %v3919 = vpop.f32.mrb[0].mxu0
        %v3920 = vadd.f32 0.0, %v3919
        %v3921 = vpop.f32.mrb[0].mxu0
        %v3922 = vpop.f32.mrb[0].mxu0
        %v3923 = vadd.f32 0.0, %v3922
        %v3924 = vpop.f32.mrb[0].mxu0
        %3925 = vmatprep.mubr.bf16.mxu0 0
        %3926 = vmatmul.mubr.bf16.gmra.mrb[0].mxu0 %v3814
        %v3927 = vpop.f32.mrb[0].mxu0
        %v3928 = vadd.f32 0.0, %v3927
        %v3929 = vpop.f32.mrb[0].mxu0
        %v3930 = vpop.f32.mrb[0].mxu0
        %v3931 = vadd.f32 0.0, %v3930
        %v3932 = vpop.f32.mrb[0].mxu0
        %3933 = vmatprep.mubr.bf16.mxu0 0
        %3934 = vmatmul.mubr.bf16.gmra.mrb[0].mxu0 %v3815
        %v3935 = vpop.f32.mrb[0].mxu0
        %v3936 = vadd.f32 0.0, %v3935
        %v3937 = vpop.f32.mrb[0].mxu0
        %v3938 = vpop.f32.mrb[0].mxu0
        %v3939 = vadd.f32 0.0, %v3938
        %v3940 = vpop.f32.mrb[0].mxu0
        %3941 = vmatprep.mubr.bf16.mxu0 0
        %3942 = vmatmul.mubr.bf16.gmra.mrb[0].mxu0 %v3816
        %v3943 = vpop.f32.mrb[0].mxu0
        %v3944 = vadd.f32 0.0, %v3943
        %v3945 = vpop.f32.mrb[0].mxu0
        %v3946 = vpop.f32.mrb[0].mxu0
        %v3947 = vadd.f32 0.0, %v3946
        %v3948 = vpop.f32.mrb[0].mxu0
        %3949 = vmatprep.mubr.bf16.mxu0 0
        %3950 = vmatmul.mubr.bf16.gmra.mrb[0].mxu0 %v3817
        %v3951 = vpop.f32.mrb[0].mxu0
        %v3952 = vadd.f32 0.0, %v3951
        %v3953 = vpop.f32.mrb[0].mxu0
        %v3954 = vpop.f32.mrb[0].mxu0
        %v3955 = vadd.f32 0.0, %v3954
        %v3956 = vpop.f32.mrb[0].mxu0
        %3957 = vmatprep.mubr.bf16.mxu0 0
        %3958 = vmatmul.mubr.bf16.gmra.mrb[0].mxu0 %v3818
        %v3959 = vpop.f32.mrb[0].mxu0
        %v3960 = vadd.f32 0.0, %v3959
        %v3961 = vpop.f32.mrb[0].mxu0
        %v3962 = vpop.f32.mrb[0].mxu0
        %v3963 = vadd.f32 0.0, %v3962
        %v3964 = vpop.f32.mrb[0].mxu0
        %3965 = vmatprep.mubr.bf16.mxu0 0
        %3966 = vmatmul.mubr.bf16.gmra.mrb[0].mxu0 %v3819
        %v3967 = vpop.f32.mrb[0].mxu0
        %v3968 = vadd.f32 0.0, %v3967
        %v3969 = vpop.f32.mrb[0].mxu0
        %v3970 = vpop.f32.mrb[0].mxu0
        %v3971 = vadd.f32 0.0, %v3970
        %v3972 = vpop.f32.mrb[0].mxu0
        %3973 = vmatprep.mubr.bf16.mxu0 0
        %3974 = vmatmul.mubr.bf16.gmra.mrb[0].mxu0 %v3820
        %v3975 = vpop.f32.mrb[0].mxu0
        %v3976 = vadd.f32 0.0, %v3975
        %v3977 = vpop.f32.mrb[0].mxu0
        %v3978 = vpop.f32.mrb[0].mxu0
        %v3979 = vadd.f32 0.0, %v3978
        %v3980 = vpop.f32.mrb[0].mxu0
        %3981 = vdwg.mxu0
        %s3982 = scalar_lea.vmem [#allocation10], 64
        %v3983 = vld [vmem:[%s3982] sm:$0xf]
        %v3984 = vld [vmem:[%s3982 + $0x4] sm:$0xf]
        %v3985 = vld [vmem:[%s3982 + $0x8] sm:$0xf]
        %v3986 = vld [vmem:[%s3982 + $0xc] sm:$0xf]
        %v3987 = vld [vmem:[%s3982 + $0x10] sm:$0xf]
        %v3988 = vld [vmem:[%s3982 + $0x14] sm:$0xf]
        %v3989 = vld [vmem:[%s3982 + $0x18] sm:$0xf]
        %v3990 = vld [vmem:[%s3982 + $0x1c] sm:$0xf]
        %v3991 = vld [vmem:[%s3982 + $0x20] sm:$0xf]
        %v3992 = vld [vmem:[%s3982 + $0x24] sm:$0xf]
        %v3993 = vld [vmem:[%s3982 + $0x28] sm:$0xf]
        %v3994 = vld [vmem:[%s3982 + $0x2c] sm:$0xf]
        %v3995 = vld [vmem:[%s3982 + $0x30] sm:$0xf]
        %v3996 = vld [vmem:[%s3982 + $0x34] sm:$0xf]
        %v3997 = vld [vmem:[%s3982 + $0x38] sm:$0xf]
        %v3998 = vld [vmem:[%s3982 + $0x3c] sm:$0xf]
        %v3999 = vpack.c.bf16 %v3859, %v3856
        %v4000 = vpack.c.bf16 %v3867, %v3864
        %v4001 = vpack.c.bf16 %v3875, %v3872
        %v4002 = vpack.c.bf16 %v3883, %v3880
        %v4003 = vpack.c.bf16 %v3891, %v3888
        %v4004 = vpack.c.bf16 %v3899, %v3896
        %v4005 = vpack.c.bf16 %v3907, %v3904
        %v4006 = vpack.c.bf16 %v3915, %v3912
        %v4007 = vpack.c.bf16 %v3923, %v3920
        %v4008 = vpack.c.bf16 %v3931, %v3928
        %v4009 = vpack.c.bf16 %v3939, %v3936
        %v4010 = vpack.c.bf16 %v3947, %v3944
        %v4011 = vpack.c.bf16 %v3955, %v3952
        %v4012 = vpack.c.bf16 %v3963, %v3960
        %v4013 = vpack.c.bf16 %v3971, %v3968
        %v4014 = vpack.c.bf16 %v3979, %v3976
        %v4015 = vld [vmem:[%s2949 + $0x3] sm:$0x1]
        %v4016 = vlaneseq
        %v4017 = vshrl.u32 %v4016, 7
        %v4018 = vsub.s32 0, %v4017
        %v4019 = vrot.slane %v4015, %v4018
        %v4036 = vunpack.c.l.b16 %v3983
        %v4037 = vunpack.c.l.b16 %v3984
        %v4038 = vunpack.c.l.b16 %v3985
        %v4039 = vunpack.c.l.b16 %v3986
        %v4040 = vunpack.c.l.b16 %v3987
        %v4041 = vunpack.c.l.b16 %v3988
        %v4042 = vunpack.c.l.b16 %v3989
        %v4043 = vunpack.c.l.b16 %v3990
        %v4044 = vunpack.c.l.b16 %v3991
        %v4045 = vunpack.c.l.b16 %v3992
        %v4046 = vunpack.c.l.b16 %v3993
        %v4047 = vunpack.c.l.b16 %v3994
        %v4048 = vunpack.c.l.b16 %v3995
        %v4049 = vunpack.c.l.b16 %v3996
        %v4050 = vunpack.c.l.b16 %v3997
        %v4051 = vunpack.c.l.b16 %v3998
        %v4052 = vpack.c.b16 %v4037, %v4036
        %v4053 = vpack.c.b16 %v4039, %v4038
        %v4054 = vpack.c.b16 %v4041, %v4040
        %v4055 = vpack.c.b16 %v4043, %v4042
        %v4056 = vpack.c.b16 %v4045, %v4044
        %v4057 = vpack.c.b16 %v4047, %v4046
        %v4058 = vpack.c.b16 %v4049, %v4048
        %v4059 = vpack.c.b16 %v4051, %v4050
        %4068 = vmatprep.subr.bf16.mxu0 0
        %4069 = vmatpush1.bf16.msra.mxu0 %v4052
        %4070 = vmatprep.subr.bf16.mxu0 0
        %4071 = vmatpush1.bf16.msra.mxu0 %v4053
        %4072 = vmatprep.subr.bf16.mxu0 0
        %4073 = vmatpush1.bf16.msra.mxu0 %v4054
        %4074 = vmatprep.subr.bf16.mxu0 0
        %4075 = vmatpush1.bf16.msra.mxu0 %v4055
        %4076 = vmatprep.subr.bf16.mxu0 0
        %4077 = vmatpush1.bf16.msra.mxu0 %v4056
        %4078 = vmatprep.subr.bf16.mxu0 0
        %4079 = vmatpush1.bf16.msra.mxu0 %v4057
        %4080 = vmatprep.subr.bf16.mxu0 0
        %4081 = vmatpush1.bf16.msra.mxu0 %v4058
        %4082 = vmatprep.subr.bf16.mxu0 0
        %4083 = vmatpush1.bf16.msra.mxu0 %v4059
        %4084 = vmatprep.subr.bf16.mxu0 0
        %4085 = vmatpush1.bf16.msra.mxu0 0
        %4086 = vmatprep.subr.bf16.mxu0 0
        %4087 = vmatpush1.bf16.msra.mxu0 0
        %4088 = vmatprep.subr.bf16.mxu0 0
        %4089 = vmatpush1.bf16.msra.mxu0 0
        %4090 = vmatprep.subr.bf16.mxu0 0
        %4091 = vmatpush1.bf16.msra.mxu0 0
        %4092 = vmatprep.subr.bf16.mxu0 0
        %4093 = vmatpush1.bf16.msra.mxu0 0
        %4094 = vmatprep.subr.bf16.mxu0 0
        %4095 = vmatpush1.bf16.msra.mxu0 0
        %4096 = vmatprep.subr.bf16.mxu0 0
        %4097 = vmatpush1.bf16.msra.mxu0 0
        %4098 = vmatprep.subr.bf16.mxu0 0
        %4099 = vmatpush1.bf16.msra.mxu0 0
        %4100 = vmatprep.mubr.bf16.mxu0 0
        %4101 = vmatmul.mubr.bf16.gmra.mrb[0].mxu0 %v3999
        %v4102 = vpop.f32.mrb[0].mxu0
        %v4103 = vadd.f32 %v4019, %v4102
        %v4104 = vpop.f32.mrb[0].mxu0
        %v4105 = vpop.f32.mrb[0].mxu0
        %v4106 = vadd.f32 %v4019, %v4105
        %v4107 = vpop.f32.mrb[0].mxu0
        %4108 = vmatprep.mubr.bf16.mxu0 0
        %4109 = vmatmul.mubr.bf16.gmra.mrb[0].mxu0 %v4000
        %v4110 = vpop.f32.mrb[0].mxu0
        %v4111 = vadd.f32 %v4019, %v4110
        %v4112 = vpop.f32.mrb[0].mxu0
        %v4113 = vpop.f32.mrb[0].mxu0
        %v4114 = vadd.f32 %v4019, %v4113
        %v4115 = vpop.f32.mrb[0].mxu0
        %4116 = vmatprep.mubr.bf16.mxu0 0
        %4117 = vmatmul.mubr.bf16.gmra.mrb[0].mxu0 %v4001
        %v4118 = vpop.f32.mrb[0].mxu0
        %v4119 = vadd.f32 %v4019, %v4118
        %v4120 = vpop.f32.mrb[0].mxu0
        %v4121 = vpop.f32.mrb[0].mxu0
        %v4122 = vadd.f32 %v4019, %v4121
        %v4123 = vpop.f32.mrb[0].mxu0
        %4124 = vmatprep.mubr.bf16.mxu0 0
        %4125 = vmatmul.mubr.bf16.gmra.mrb[0].mxu0 %v4002
        %v4126 = vpop.f32.mrb[0].mxu0
        %v4127 = vadd.f32 %v4019, %v4126
        %v4128 = vpop.f32.mrb[0].mxu0
        %v4129 = vpop.f32.mrb[0].mxu0
        %v4130 = vadd.f32 %v4019, %v4129
        %v4131 = vpop.f32.mrb[0].mxu0
        %4132 = vmatprep.mubr.bf16.mxu0 0
        %4133 = vmatmul.mubr.bf16.gmra.mrb[0].mxu0 %v4003
        %v4134 = vpop.f32.mrb[0].mxu0
        %v4135 = vadd.f32 %v4019, %v4134
        %v4136 = vpop.f32.mrb[0].mxu0
        %v4137 = vpop.f32.mrb[0].mxu0
        %v4138 = vadd.f32 %v4019, %v4137
        %v4139 = vpop.f32.mrb[0].mxu0
        %4140 = vmatprep.mubr.bf16.mxu0 0
        %4141 = vmatmul.mubr.bf16.gmra.mrb[0].mxu0 %v4004
        %v4142 = vpop.f32.mrb[0].mxu0
        %v4143 = vadd.f32 %v4019, %v4142
        %v4144 = vpop.f32.mrb[0].mxu0
        %v4145 = vpop.f32.mrb[0].mxu0
        %v4146 = vadd.f32 %v4019, %v4145
        %v4147 = vpop.f32.mrb[0].mxu0
        %4148 = vmatprep.mubr.bf16.mxu0 0
        %4149 = vmatmul.mubr.bf16.gmra.mrb[0].mxu0 %v4005
        %v4150 = vpop.f32.mrb[0].mxu0
        %v4151 = vadd.f32 %v4019, %v4150
        %v4152 = vpop.f32.mrb[0].mxu0
        %v4153 = vpop.f32.mrb[0].mxu0
        %v4154 = vadd.f32 %v4019, %v4153
        %v4155 = vpop.f32.mrb[0].mxu0
        %4156 = vmatprep.mubr.bf16.mxu0 0
        %4157 = vmatmul.mubr.bf16.gmra.mrb[0].mxu0 %v4006
        %v4158 = vpop.f32.mrb[0].mxu0
        %v4159 = vadd.f32 %v4019, %v4158
        %v4160 = vpop.f32.mrb[0].mxu0
        %v4161 = vpop.f32.mrb[0].mxu0
        %v4162 = vadd.f32 %v4019, %v4161
        %v4163 = vpop.f32.mrb[0].mxu0
        %4164 = vmatprep.mubr.bf16.mxu0 0
        %4165 = vmatmul.mubr.bf16.gmra.mrb[0].mxu0 %v4007
        %v4166 = vpop.f32.mrb[0].mxu0
        %v4167 = vadd.f32 %v4019, %v4166
        %v4168 = vpop.f32.mrb[0].mxu0
        %v4169 = vpop.f32.mrb[0].mxu0
        %v4170 = vadd.f32 %v4019, %v4169
        %v4171 = vpop.f32.mrb[0].mxu0
        %4172 = vmatprep.mubr.bf16.mxu0 0
        %4173 = vmatmul.mubr.bf16.gmra.mrb[0].mxu0 %v4008
        %v4174 = vpop.f32.mrb[0].mxu0
        %v4175 = vadd.f32 %v4019, %v4174
        %v4176 = vpop.f32.mrb[0].mxu0
        %v4177 = vpop.f32.mrb[0].mxu0
        %v4178 = vadd.f32 %v4019, %v4177
        %v4179 = vpop.f32.mrb[0].mxu0
        %4180 = vmatprep.mubr.bf16.mxu0 0
        %4181 = vmatmul.mubr.bf16.gmra.mrb[0].mxu0 %v4009
        %v4182 = vpop.f32.mrb[0].mxu0
        %v4183 = vadd.f32 %v4019, %v4182
        %v4184 = vpop.f32.mrb[0].mxu0
        %v4185 = vpop.f32.mrb[0].mxu0
        %v4186 = vadd.f32 %v4019, %v4185
        %v4187 = vpop.f32.mrb[0].mxu0
        %4188 = vmatprep.mubr.bf16.mxu0 0
        %4189 = vmatmul.mubr.bf16.gmra.mrb[0].mxu0 %v4010
        %v4190 = vpop.f32.mrb[0].mxu0
        %v4191 = vadd.f32 %v4019, %v4190
        %v4192 = vpop.f32.mrb[0].mxu0
        %v4193 = vpop.f32.mrb[0].mxu0
        %v4194 = vadd.f32 %v4019, %v4193
        %v4195 = vpop.f32.mrb[0].mxu0
        %4196 = vmatprep.mubr.bf16.mxu0 0
        %4197 = vmatmul.mubr.bf16.gmra.mrb[0].mxu0 %v4011
        %v4198 = vpop.f32.mrb[0].mxu0
        %v4199 = vadd.f32 %v4019, %v4198
        %v4200 = vpop.f32.mrb[0].mxu0
        %v4201 = vpop.f32.mrb[0].mxu0
        %v4202 = vadd.f32 %v4019, %v4201
        %v4203 = vpop.f32.mrb[0].mxu0
        %4204 = vmatprep.mubr.bf16.mxu0 0
        %4205 = vmatmul.mubr.bf16.gmra.mrb[0].mxu0 %v4012
        %v4206 = vpop.f32.mrb[0].mxu0
        %v4207 = vadd.f32 %v4019, %v4206
        %v4208 = vpop.f32.mrb[0].mxu0
        %v4209 = vpop.f32.mrb[0].mxu0
        %v4210 = vadd.f32 %v4019, %v4209
        %v4211 = vpop.f32.mrb[0].mxu0
        %4212 = vmatprep.mubr.bf16.mxu0 0
        %4213 = vmatmul.mubr.bf16.gmra.mrb[0].mxu0 %v4013
        %v4214 = vpop.f32.mrb[0].mxu0
        %v4215 = vadd.f32 %v4019, %v4214
        %v4216 = vpop.f32.mrb[0].mxu0
        %v4217 = vpop.f32.mrb[0].mxu0
        %v4218 = vadd.f32 %v4019, %v4217
        %v4219 = vpop.f32.mrb[0].mxu0
        %4220 = vmatprep.mubr.bf16.mxu0 0
        %4221 = vmatmul.mubr.bf16.gmra.mrb[0].mxu0 %v4014
        %v4222 = vpop.f32.mrb[0].mxu0
        %v4223 = vadd.f32 %v4019, %v4222
        %v4224 = vpop.f32.mrb[0].mxu0
        %v4225 = vpop.f32.mrb[0].mxu0
        %v4226 = vadd.f32 %v4019, %v4225
        %v4227 = vpop.f32.mrb[0].mxu0
        %4228 = vdwg.mxu0
        %v4229 = vadd.f32 %v4103, %v2386
        %v4230 = vadd.f32 %v4106, %v2387
        %v4231 = vadd.f32 %v4111, %v2388
        %v4232 = vadd.f32 %v4114, %v2389
        %v4233 = vadd.f32 %v4119, %v2390
        %v4234 = vadd.f32 %v4122, %v2391
        %v4235 = vadd.f32 %v4127, %v2392
        %v4236 = vadd.f32 %v4130, %v2393
        %v4237 = vadd.f32 %v4135, %v2394
        %v4238 = vadd.f32 %v4138, %v2395
        %v4239 = vadd.f32 %v4143, %v2396
        %v4240 = vadd.f32 %v4146, %v2397
        %v4241 = vadd.f32 %v4151, %v2398
        %v4242 = vadd.f32 %v4154, %v2399
        %v4243 = vadd.f32 %v4159, %v2400
        %v4244 = vadd.f32 %v4162, %v2401
        %v4245 = vadd.f32 %v4167, %v2402
        %v4246 = vadd.f32 %v4170, %v2403
        %v4247 = vadd.f32 %v4175, %v2404
        %v4248 = vadd.f32 %v4178, %v2405
        %v4249 = vadd.f32 %v4183, %v2406
        %v4250 = vadd.f32 %v4186, %v2407
        %v4251 = vadd.f32 %v4191, %v2408
        %v4252 = vadd.f32 %v4194, %v2409
        %v4253 = vadd.f32 %v4199, %v2410
        %v4254 = vadd.f32 %v4202, %v2411
        %v4255 = vadd.f32 %v4207, %v2412
        %v4256 = vadd.f32 %v4210, %v2413
        %v4257 = vadd.f32 %v4215, %v2414
        %v4258 = vadd.f32 %v4218, %v2415
        %v4259 = vadd.f32 %v4223, %v2416
        %v4260 = vadd.f32 %v4226, %v2417
        %v4261 = vadd.f32 %v2354, %v4229
        %v4262 = vadd.f32 %v2355, %v4230
        %v4263 = vadd.f32 %v2356, %v4231
        %v4264 = vadd.f32 %v2357, %v4232
        %v4265 = vadd.f32 %v2358, %v4233
        %v4266 = vadd.f32 %v2359, %v4234
        %v4267 = vadd.f32 %v2360, %v4235
        %v4268 = vadd.f32 %v2361, %v4236
        %v4269 = vadd.f32 %v2362, %v4237
        %v4270 = vadd.f32 %v2363, %v4238
        %v4271 = vadd.f32 %v2364, %v4239
        %v4272 = vadd.f32 %v2365, %v4240
        %v4273 = vadd.f32 %v2366, %v4241
        %v4274 = vadd.f32 %v2367, %v4242
        %v4275 = vadd.f32 %v2368, %v4243
        %v4276 = vadd.f32 %v2369, %v4244
        %v4277 = vadd.f32 %v2370, %v4245
        %v4278 = vadd.f32 %v2371, %v4246
        %v4279 = vadd.f32 %v2372, %v4247
        %v4280 = vadd.f32 %v2373, %v4248
        %v4281 = vadd.f32 %v2374, %v4249
        %v4282 = vadd.f32 %v2375, %v4250
        %v4283 = vadd.f32 %v2376, %v4251
        %v4284 = vadd.f32 %v2377, %v4252
        %v4285 = vadd.f32 %v2378, %v4253
        %v4286 = vadd.f32 %v2379, %v4254
        %v4287 = vadd.f32 %v2380, %v4255
        %v4288 = vadd.f32 %v2381, %v4256
        %v4289 = vadd.f32 %v2382, %v4257
        %v4290 = vadd.f32 %v2383, %v4258
        %v4291 = vadd.f32 %v2384, %v4259
        %v4292 = vadd.f32 %v2385, %v4260
        %v4293 = vld [vmem:[#allocation11] sm:$0xf]
        %v4294 = vld [vmem:[#allocation11 + $0x4] sm:$0xf]
        %v4295 = vld [vmem:[#allocation11 + $0x8] sm:$0xf]
        %v4296 = vld [vmem:[#allocation11 + $0xc] sm:$0xf]
        %v4297 = vld [vmem:[#allocation11 + $0x10] sm:$0xf]
        %v4298 = vld [vmem:[#allocation11 + $0x14] sm:$0xf]
        %v4299 = vld [vmem:[#allocation11 + $0x18] sm:$0xf]
        %v4300 = vld [vmem:[#allocation11 + $0x1c] sm:$0xf]
        %v4301 = vld [vmem:[#allocation11 + $0x20] sm:$0xf]
        %v4302 = vld [vmem:[#allocation11 + $0x24] sm:$0xf]
        %v4303 = vld [vmem:[#allocation11 + $0x28] sm:$0xf]
        %v4304 = vld [vmem:[#allocation11 + $0x2c] sm:$0xf]
        %v4305 = vld [vmem:[#allocation11 + $0x30] sm:$0xf]
        %v4306 = vld [vmem:[#allocation11 + $0x34] sm:$0xf]
        %v4307 = vld [vmem:[#allocation11 + $0x38] sm:$0xf]
        %v4308 = vld [vmem:[#allocation11 + $0x3c] sm:$0xf]
        %v4309 = vpack.c.bf16 %v4262, %v4261
        %v4310 = vpack.c.bf16 %v4264, %v4263
        %v4311 = vpack.c.bf16 %v4266, %v4265
        %v4312 = vpack.c.bf16 %v4268, %v4267
        %v4313 = vpack.c.bf16 %v4270, %v4269
        %v4314 = vpack.c.bf16 %v4272, %v4271
        %v4315 = vpack.c.bf16 %v4274, %v4273
        %v4316 = vpack.c.bf16 %v4276, %v4275
        %v4317 = vpack.c.bf16 %v4278, %v4277
        %v4318 = vpack.c.bf16 %v4280, %v4279
        %v4319 = vpack.c.bf16 %v4282, %v4281
        %v4320 = vpack.c.bf16 %v4284, %v4283
        %v4321 = vpack.c.bf16 %v4286, %v4285
        %v4322 = vpack.c.bf16 %v4288, %v4287
        %v4323 = vpack.c.bf16 %v4290, %v4289
        %v4324 = vpack.c.bf16 %v4292, %v4291
        %v4325 = vld [vmem:[%s7] sm:$0x1]
        %v4326 = vlaneseq
        %v4327 = vshrl.u32 %v4326, 7
        %v4328 = vsub.s32 0, %v4327
        %v4329 = vrot.slane %v4325, %v4328
        %v4346 = vunpack.c.l.b16 %v4293
        %v4347 = vunpack.c.l.b16 %v4294
        %v4348 = vunpack.c.l.b16 %v4295
        %v4349 = vunpack.c.l.b16 %v4296
        %v4350 = vunpack.c.l.b16 %v4297
        %v4351 = vunpack.c.l.b16 %v4298
        %v4352 = vunpack.c.l.b16 %v4299
        %v4353 = vunpack.c.l.b16 %v4300
        %v4354 = vunpack.c.l.b16 %v4301
        %v4355 = vunpack.c.l.b16 %v4302
        %v4356 = vunpack.c.l.b16 %v4303
        %v4357 = vunpack.c.l.b16 %v4304
        %v4358 = vunpack.c.l.b16 %v4305
        %v4359 = vunpack.c.l.b16 %v4306
        %v4360 = vunpack.c.l.b16 %v4307
        %v4361 = vunpack.c.l.b16 %v4308
        %v4362 = vpack.c.b16 %v4347, %v4346
        %v4363 = vpack.c.b16 %v4349, %v4348
        %v4364 = vpack.c.b16 %v4351, %v4350
        %v4365 = vpack.c.b16 %v4353, %v4352
        %v4366 = vpack.c.b16 %v4355, %v4354
        %v4367 = vpack.c.b16 %v4357, %v4356
        %v4368 = vpack.c.b16 %v4359, %v4358
        %v4369 = vpack.c.b16 %v4361, %v4360
        %4378 = vmatprep.subr.bf16.mxu0 0
        %4379 = vmatpush1.bf16.msra.mxu0 %v4362
        %4380 = vmatprep.subr.bf16.mxu0 0
        %4381 = vmatpush1.bf16.msra.mxu0 %v4363
        %4382 = vmatprep.subr.bf16.mxu0 0
        %4383 = vmatpush1.bf16.msra.mxu0 %v4364
        %4384 = vmatprep.subr.bf16.mxu0 0
        %4385 = vmatpush1.bf16.msra.mxu0 %v4365
        %4386 = vmatprep.subr.bf16.mxu0 0
        %4387 = vmatpush1.bf16.msra.mxu0 %v4366
        %4388 = vmatprep.subr.bf16.mxu0 0
        %4389 = vmatpush1.bf16.msra.mxu0 %v4367
        %4390 = vmatprep.subr.bf16.mxu0 0
        %4391 = vmatpush1.bf16.msra.mxu0 %v4368
        %4392 = vmatprep.subr.bf16.mxu0 0
        %4393 = vmatpush1.bf16.msra.mxu0 %v4369
        %4394 = vmatprep.subr.bf16.mxu0 0
        %4395 = vmatpush1.bf16.msra.mxu0 0
        %4396 = vmatprep.subr.bf16.mxu0 0
        %4397 = vmatpush1.bf16.msra.mxu0 0
        %4398 = vmatprep.subr.bf16.mxu0 0
        %4399 = vmatpush1.bf16.msra.mxu0 0
        %4400 = vmatprep.subr.bf16.mxu0 0
        %4401 = vmatpush1.bf16.msra.mxu0 0
        %4402 = vmatprep.subr.bf16.mxu0 0
        %4403 = vmatpush1.bf16.msra.mxu0 0
        %4404 = vmatprep.subr.bf16.mxu0 0
        %4405 = vmatpush1.bf16.msra.mxu0 0
        %4406 = vmatprep.subr.bf16.mxu0 0
        %4407 = vmatpush1.bf16.msra.mxu0 0
        %4408 = vmatprep.subr.bf16.mxu0 0
        %4409 = vmatpush1.bf16.msra.mxu0 0
        %4410 = vmatprep.mubr.bf16.mxu0 0
        %4411 = vmatmul.mubr.bf16.gmra.mrb[0].mxu0 %v4309
        %v4412 = vpop.f32.mrb[0].mxu0
        %v4413 = vadd.f32 %v4329, %v4412
        %v4414 = vpop.f32.mrb[0].mxu0
        %v4415 = vpop.f32.mrb[0].mxu0
        %v4416 = vadd.f32 %v4329, %v4415
        %v4417 = vpop.f32.mrb[0].mxu0
        %4418 = vmatprep.mubr.bf16.mxu0 0
        %4419 = vmatmul.mubr.bf16.gmra.mrb[0].mxu0 %v4310
        %v4420 = vpop.f32.mrb[0].mxu0
        %v4421 = vadd.f32 %v4329, %v4420
        %v4422 = vpop.f32.mrb[0].mxu0
        %v4423 = vpop.f32.mrb[0].mxu0
        %v4424 = vadd.f32 %v4329, %v4423
        %v4425 = vpop.f32.mrb[0].mxu0
        %4426 = vmatprep.mubr.bf16.mxu0 0
        %4427 = vmatmul.mubr.bf16.gmra.mrb[0].mxu0 %v4311
        %v4428 = vpop.f32.mrb[0].mxu0
        %v4429 = vadd.f32 %v4329, %v4428
        %v4430 = vpop.f32.mrb[0].mxu0
        %v4431 = vpop.f32.mrb[0].mxu0
        %v4432 = vadd.f32 %v4329, %v4431
        %v4433 = vpop.f32.mrb[0].mxu0
        %4434 = vmatprep.mubr.bf16.mxu0 0
        %4435 = vmatmul.mubr.bf16.gmra.mrb[0].mxu0 %v4312
        %v4436 = vpop.f32.mrb[0].mxu0
        %v4437 = vadd.f32 %v4329, %v4436
        %v4438 = vpop.f32.mrb[0].mxu0
        %v4439 = vpop.f32.mrb[0].mxu0
        %v4440 = vadd.f32 %v4329, %v4439
        %v4441 = vpop.f32.mrb[0].mxu0
        %4442 = vmatprep.mubr.bf16.mxu0 0
        %4443 = vmatmul.mubr.bf16.gmra.mrb[0].mxu0 %v4313
        %v4444 = vpop.f32.mrb[0].mxu0
        %v4445 = vadd.f32 %v4329, %v4444
        %v4446 = vpop.f32.mrb[0].mxu0
        %v4447 = vpop.f32.mrb[0].mxu0
        %v4448 = vadd.f32 %v4329, %v4447
        %v4449 = vpop.f32.mrb[0].mxu0
        %4450 = vmatprep.mubr.bf16.mxu0 0
        %4451 = vmatmul.mubr.bf16.gmra.mrb[0].mxu0 %v4314
        %v4452 = vpop.f32.mrb[0].mxu0
        %v4453 = vadd.f32 %v4329, %v4452
        %v4454 = vpop.f32.mrb[0].mxu0
        %v4455 = vpop.f32.mrb[0].mxu0
        %v4456 = vadd.f32 %v4329, %v4455
        %v4457 = vpop.f32.mrb[0].mxu0
        %4458 = vmatprep.mubr.bf16.mxu0 0
        %4459 = vmatmul.mubr.bf16.gmra.mrb[0].mxu0 %v4315
        %v4460 = vpop.f32.mrb[0].mxu0
        %v4461 = vadd.f32 %v4329, %v4460
        %v4462 = vpop.f32.mrb[0].mxu0
        %v4463 = vpop.f32.mrb[0].mxu0
        %v4464 = vadd.f32 %v4329, %v4463
        %v4465 = vpop.f32.mrb[0].mxu0
        %4466 = vmatprep.mubr.bf16.mxu0 0
        %4467 = vmatmul.mubr.bf16.gmra.mrb[0].mxu0 %v4316
        %v4468 = vpop.f32.mrb[0].mxu0
        %v4469 = vadd.f32 %v4329, %v4468
        %v4470 = vpop.f32.mrb[0].mxu0
        %v4471 = vpop.f32.mrb[0].mxu0
        %v4472 = vadd.f32 %v4329, %v4471
        %v4473 = vpop.f32.mrb[0].mxu0
        %4474 = vmatprep.mubr.bf16.mxu0 0
        %4475 = vmatmul.mubr.bf16.gmra.mrb[0].mxu0 %v4317
        %v4476 = vpop.f32.mrb[0].mxu0
        %v4477 = vadd.f32 %v4329, %v4476
        %v4478 = vpop.f32.mrb[0].mxu0
        %v4479 = vpop.f32.mrb[0].mxu0
        %v4480 = vadd.f32 %v4329, %v4479
        %v4481 = vpop.f32.mrb[0].mxu0
        %4482 = vmatprep.mubr.bf16.mxu0 0
        %4483 = vmatmul.mubr.bf16.gmra.mrb[0].mxu0 %v4318
        %v4484 = vpop.f32.mrb[0].mxu0
        %v4485 = vadd.f32 %v4329, %v4484
        %v4486 = vpop.f32.mrb[0].mxu0
        %v4487 = vpop.f32.mrb[0].mxu0
        %v4488 = vadd.f32 %v4329, %v4487
        %v4489 = vpop.f32.mrb[0].mxu0
        %4490 = vmatprep.mubr.bf16.mxu0 0
        %4491 = vmatmul.mubr.bf16.gmra.mrb[0].mxu0 %v4319
        %v4492 = vpop.f32.mrb[0].mxu0
        %v4493 = vadd.f32 %v4329, %v4492
        %v4494 = vpop.f32.mrb[0].mxu0
        %v4495 = vpop.f32.mrb[0].mxu0
        %v4496 = vadd.f32 %v4329, %v4495
        %v4497 = vpop.f32.mrb[0].mxu0
        %4498 = vmatprep.mubr.bf16.mxu0 0
        %4499 = vmatmul.mubr.bf16.gmra.mrb[0].mxu0 %v4320
        %v4500 = vpop.f32.mrb[0].mxu0
        %v4501 = vadd.f32 %v4329, %v4500
        %v4502 = vpop.f32.mrb[0].mxu0
        %v4503 = vpop.f32.mrb[0].mxu0
        %v4504 = vadd.f32 %v4329, %v4503
        %v4505 = vpop.f32.mrb[0].mxu0
        %4506 = vmatprep.mubr.bf16.mxu0 0
        %4507 = vmatmul.mubr.bf16.gmra.mrb[0].mxu0 %v4321
        %v4508 = vpop.f32.mrb[0].mxu0
        %v4509 = vadd.f32 %v4329, %v4508
        %v4510 = vpop.f32.mrb[0].mxu0
        %v4511 = vpop.f32.mrb[0].mxu0
        %v4512 = vadd.f32 %v4329, %v4511
        %v4513 = vpop.f32.mrb[0].mxu0
        %4514 = vmatprep.mubr.bf16.mxu0 0
        %4515 = vmatmul.mubr.bf16.gmra.mrb[0].mxu0 %v4322
        %v4516 = vpop.f32.mrb[0].mxu0
        %v4517 = vadd.f32 %v4329, %v4516
        %v4518 = vpop.f32.mrb[0].mxu0
        %v4519 = vpop.f32.mrb[0].mxu0
        %v4520 = vadd.f32 %v4329, %v4519
        %v4521 = vpop.f32.mrb[0].mxu0
        %4522 = vmatprep.mubr.bf16.mxu0 0
        %4523 = vmatmul.mubr.bf16.gmra.mrb[0].mxu0 %v4323
        %v4524 = vpop.f32.mrb[0].mxu0
        %v4525 = vadd.f32 %v4329, %v4524
        %v4526 = vpop.f32.mrb[0].mxu0
        %v4527 = vpop.f32.mrb[0].mxu0
        %v4528 = vadd.f32 %v4329, %v4527
        %v4529 = vpop.f32.mrb[0].mxu0
        %4530 = vmatprep.mubr.bf16.mxu0 0
        %4531 = vmatmul.mubr.bf16.gmra.mrb[0].mxu0 %v4324
        %v4532 = vpop.f32.mrb[0].mxu0
        %v4533 = vadd.f32 %v4329, %v4532
        %v4534 = vpop.f32.mrb[0].mxu0
        %v4535 = vpop.f32.mrb[0].mxu0
        %v4536 = vadd.f32 %v4329, %v4535
        %v4537 = vpop.f32.mrb[0].mxu0
        %4538 = vdwg.mxu0
        %v4539 = vmax.f32 %v4413, 0.0
        %v4540 = vmax.f32 %v4416, 0.0
        %v4541 = vmax.f32 %v4421, 0.0
        %v4542 = vmax.f32 %v4424, 0.0
        %v4543 = vmax.f32 %v4429, 0.0
        %v4544 = vmax.f32 %v4432, 0.0
        %v4545 = vmax.f32 %v4437, 0.0
        %v4546 = vmax.f32 %v4440, 0.0
        %v4547 = vmax.f32 %v4445, 0.0
        %v4548 = vmax.f32 %v4448, 0.0
        %v4549 = vmax.f32 %v4453, 0.0
        %v4550 = vmax.f32 %v4456, 0.0
        %v4551 = vmax.f32 %v4461, 0.0
        %v4552 = vmax.f32 %v4464, 0.0
        %v4553 = vmax.f32 %v4469, 0.0
        %v4554 = vmax.f32 %v4472, 0.0
        %v4555 = vmax.f32 %v4477, 0.0
        %v4556 = vmax.f32 %v4480, 0.0
        %v4557 = vmax.f32 %v4485, 0.0
        %v4558 = vmax.f32 %v4488, 0.0
        %v4559 = vmax.f32 %v4493, 0.0
        %v4560 = vmax.f32 %v4496, 0.0
        %v4561 = vmax.f32 %v4501, 0.0
        %v4562 = vmax.f32 %v4504, 0.0
        %v4563 = vmax.f32 %v4509, 0.0
        %v4564 = vmax.f32 %v4512, 0.0
        %v4565 = vmax.f32 %v4517, 0.0
        %v4566 = vmax.f32 %v4520, 0.0
        %v4567 = vmax.f32 %v4525, 0.0
        %v4568 = vmax.f32 %v4528, 0.0
        %v4569 = vmax.f32 %v4533, 0.0
        %v4570 = vmax.f32 %v4536, 0.0
        %s4571 = scalar_lea.vmem [#allocation11], 64
        %v4572 = vld [vmem:[%s4571] sm:$0xf]
        %v4573 = vld [vmem:[%s4571 + $0x4] sm:$0xf]
        %v4574 = vld [vmem:[%s4571 + $0x8] sm:$0xf]
        %v4575 = vld [vmem:[%s4571 + $0xc] sm:$0xf]
        %v4576 = vld [vmem:[%s4571 + $0x10] sm:$0xf]
        %v4577 = vld [vmem:[%s4571 + $0x14] sm:$0xf]
        %v4578 = vld [vmem:[%s4571 + $0x18] sm:$0xf]
        %v4579 = vld [vmem:[%s4571 + $0x1c] sm:$0xf]
        %v4580 = vld [vmem:[%s4571 + $0x20] sm:$0xf]
        %v4581 = vld [vmem:[%s4571 + $0x24] sm:$0xf]
        %v4582 = vld [vmem:[%s4571 + $0x28] sm:$0xf]
        %v4583 = vld [vmem:[%s4571 + $0x2c] sm:$0xf]
        %v4584 = vld [vmem:[%s4571 + $0x30] sm:$0xf]
        %v4585 = vld [vmem:[%s4571 + $0x34] sm:$0xf]
        %v4586 = vld [vmem:[%s4571 + $0x38] sm:$0xf]
        %v4587 = vld [vmem:[%s4571 + $0x3c] sm:$0xf]
        %v4588 = vpack.c.bf16 %v4540, %v4539
        %v4589 = vpack.c.bf16 %v4542, %v4541
        %v4590 = vpack.c.bf16 %v4544, %v4543
        %v4591 = vpack.c.bf16 %v4546, %v4545
        %v4592 = vpack.c.bf16 %v4548, %v4547
        %v4593 = vpack.c.bf16 %v4550, %v4549
        %v4594 = vpack.c.bf16 %v4552, %v4551
        %v4595 = vpack.c.bf16 %v4554, %v4553
        %v4596 = vpack.c.bf16 %v4556, %v4555
        %v4597 = vpack.c.bf16 %v4558, %v4557
        %v4598 = vpack.c.bf16 %v4560, %v4559
        %v4599 = vpack.c.bf16 %v4562, %v4561
        %v4600 = vpack.c.bf16 %v4564, %v4563
        %v4601 = vpack.c.bf16 %v4566, %v4565
        %v4602 = vpack.c.bf16 %v4568, %v4567
        %v4603 = vpack.c.bf16 %v4570, %v4569
        %v4604 = vld [vmem:[%s7 + $0x1] sm:$0x1]
        %v4605 = vlaneseq
        %v4606 = vshrl.u32 %v4605, 7
        %v4607 = vsub.s32 0, %v4606
        %v4608 = vrot.slane %v4604, %v4607
        %v4625 = vunpack.c.l.b16 %v4572
        %v4626 = vunpack.c.l.b16 %v4573
        %v4627 = vunpack.c.l.b16 %v4574
        %v4628 = vunpack.c.l.b16 %v4575
        %v4629 = vunpack.c.l.b16 %v4576
        %v4630 = vunpack.c.l.b16 %v4577
        %v4631 = vunpack.c.l.b16 %v4578
        %v4632 = vunpack.c.l.b16 %v4579
        %v4633 = vunpack.c.l.b16 %v4580
        %v4634 = vunpack.c.l.b16 %v4581
        %v4635 = vunpack.c.l.b16 %v4582
        %v4636 = vunpack.c.l.b16 %v4583
        %v4637 = vunpack.c.l.b16 %v4584
        %v4638 = vunpack.c.l.b16 %v4585
        %v4639 = vunpack.c.l.b16 %v4586
        %v4640 = vunpack.c.l.b16 %v4587
        %v4641 = vpack.c.b16 %v4626, %v4625
        %v4642 = vpack.c.b16 %v4628, %v4627
        %v4643 = vpack.c.b16 %v4630, %v4629
        %v4644 = vpack.c.b16 %v4632, %v4631
        %v4645 = vpack.c.b16 %v4634, %v4633
        %v4646 = vpack.c.b16 %v4636, %v4635
        %v4647 = vpack.c.b16 %v4638, %v4637
        %v4648 = vpack.c.b16 %v4640, %v4639
        %4657 = vmatprep.subr.bf16.mxu0 0
        %4658 = vmatpush1.bf16.msra.mxu0 %v4641
        %4659 = vmatprep.subr.bf16.mxu0 0
        %4660 = vmatpush1.bf16.msra.mxu0 %v4642
        %4661 = vmatprep.subr.bf16.mxu0 0
        %4662 = vmatpush1.bf16.msra.mxu0 %v4643
        %4663 = vmatprep.subr.bf16.mxu0 0
        %4664 = vmatpush1.bf16.msra.mxu0 %v4644
        %4665 = vmatprep.subr.bf16.mxu0 0
        %4666 = vmatpush1.bf16.msra.mxu0 %v4645
        %4667 = vmatprep.subr.bf16.mxu0 0
        %4668 = vmatpush1.bf16.msra.mxu0 %v4646
        %4669 = vmatprep.subr.bf16.mxu0 0
        %4670 = vmatpush1.bf16.msra.mxu0 %v4647
        %4671 = vmatprep.subr.bf16.mxu0 0
        %4672 = vmatpush1.bf16.msra.mxu0 %v4648
        %4673 = vmatprep.subr.bf16.mxu0 0
        %4674 = vmatpush1.bf16.msra.mxu0 0
        %4675 = vmatprep.subr.bf16.mxu0 0
        %4676 = vmatpush1.bf16.msra.mxu0 0
        %4677 = vmatprep.subr.bf16.mxu0 0
        %4678 = vmatpush1.bf16.msra.mxu0 0
        %4679 = vmatprep.subr.bf16.mxu0 0
        %4680 = vmatpush1.bf16.msra.mxu0 0
        %4681 = vmatprep.subr.bf16.mxu0 0
        %4682 = vmatpush1.bf16.msra.mxu0 0
        %4683 = vmatprep.subr.bf16.mxu0 0
        %4684 = vmatpush1.bf16.msra.mxu0 0
        %4685 = vmatprep.subr.bf16.mxu0 0
        %4686 = vmatpush1.bf16.msra.mxu0 0
        %4687 = vmatprep.subr.bf16.mxu0 0
        %4688 = vmatpush1.bf16.msra.mxu0 0
        %4689 = vmatprep.mubr.bf16.mxu0 0
        %4690 = vmatmul.mubr.bf16.gmra.mrb[0].mxu0 %v4588
        %v4691 = vpop.f32.mrb[0].mxu0
        %v4692 = vadd.f32 %v4608, %v4691
        %v4693 = vpop.f32.mrb[0].mxu0
        %v4694 = vpop.f32.mrb[0].mxu0
        %v4695 = vadd.f32 %v4608, %v4694
        %v4696 = vpop.f32.mrb[0].mxu0
        %4697 = vmatprep.mubr.bf16.mxu0 0
        %4698 = vmatmul.mubr.bf16.gmra.mrb[0].mxu0 %v4589
        %v4699 = vpop.f32.mrb[0].mxu0
        %v4700 = vadd.f32 %v4608, %v4699
        %v4701 = vpop.f32.mrb[0].mxu0
        %v4702 = vpop.f32.mrb[0].mxu0
        %v4703 = vadd.f32 %v4608, %v4702
        %v4704 = vpop.f32.mrb[0].mxu0
        %4705 = vmatprep.mubr.bf16.mxu0 0
        %4706 = vmatmul.mubr.bf16.gmra.mrb[0].mxu0 %v4590
        %v4707 = vpop.f32.mrb[0].mxu0
        %v4708 = vadd.f32 %v4608, %v4707
        %v4709 = vpop.f32.mrb[0].mxu0
        %v4710 = vpop.f32.mrb[0].mxu0
        %v4711 = vadd.f32 %v4608, %v4710
        %v4712 = vpop.f32.mrb[0].mxu0
        %4713 = vmatprep.mubr.bf16.mxu0 0
        %4714 = vmatmul.mubr.bf16.gmra.mrb[0].mxu0 %v4591
        %v4715 = vpop.f32.mrb[0].mxu0
        %v4716 = vadd.f32 %v4608, %v4715
        %v4717 = vpop.f32.mrb[0].mxu0
        %v4718 = vpop.f32.mrb[0].mxu0
        %v4719 = vadd.f32 %v4608, %v4718
        %v4720 = vpop.f32.mrb[0].mxu0
        %4721 = vmatprep.mubr.bf16.mxu0 0
        %4722 = vmatmul.mubr.bf16.gmra.mrb[0].mxu0 %v4592
        %v4723 = vpop.f32.mrb[0].mxu0
        %v4724 = vadd.f32 %v4608, %v4723
        %v4725 = vpop.f32.mrb[0].mxu0
        %v4726 = vpop.f32.mrb[0].mxu0
        %v4727 = vadd.f32 %v4608, %v4726
        %v4728 = vpop.f32.mrb[0].mxu0
        %4729 = vmatprep.mubr.bf16.mxu0 0
        %4730 = vmatmul.mubr.bf16.gmra.mrb[0].mxu0 %v4593
        %v4731 = vpop.f32.mrb[0].mxu0
        %v4732 = vadd.f32 %v4608, %v4731
        %v4733 = vpop.f32.mrb[0].mxu0
        %v4734 = vpop.f32.mrb[0].mxu0
        %v4735 = vadd.f32 %v4608, %v4734
        %v4736 = vpop.f32.mrb[0].mxu0
        %4737 = vmatprep.mubr.bf16.mxu0 0
        %4738 = vmatmul.mubr.bf16.gmra.mrb[0].mxu0 %v4594
        %v4739 = vpop.f32.mrb[0].mxu0
        %v4740 = vadd.f32 %v4608, %v4739
        %v4741 = vpop.f32.mrb[0].mxu0
        %v4742 = vpop.f32.mrb[0].mxu0
        %v4743 = vadd.f32 %v4608, %v4742
        %v4744 = vpop.f32.mrb[0].mxu0
        %4745 = vmatprep.mubr.bf16.mxu0 0
        %4746 = vmatmul.mubr.bf16.gmra.mrb[0].mxu0 %v4595
        %v4747 = vpop.f32.mrb[0].mxu0
        %v4748 = vadd.f32 %v4608, %v4747
        %v4749 = vpop.f32.mrb[0].mxu0
        %v4750 = vpop.f32.mrb[0].mxu0
        %v4751 = vadd.f32 %v4608, %v4750
        %v4752 = vpop.f32.mrb[0].mxu0
        %4753 = vmatprep.mubr.bf16.mxu0 0
        %4754 = vmatmul.mubr.bf16.gmra.mrb[0].mxu0 %v4596
        %v4755 = vpop.f32.mrb[0].mxu0
        %v4756 = vadd.f32 %v4608, %v4755
        %v4757 = vpop.f32.mrb[0].mxu0
        %v4758 = vpop.f32.mrb[0].mxu0
        %v4759 = vadd.f32 %v4608, %v4758
        %v4760 = vpop.f32.mrb[0].mxu0
        %4761 = vmatprep.mubr.bf16.mxu0 0
        %4762 = vmatmul.mubr.bf16.gmra.mrb[0].mxu0 %v4597
        %v4763 = vpop.f32.mrb[0].mxu0
        %v4764 = vadd.f32 %v4608, %v4763
        %v4765 = vpop.f32.mrb[0].mxu0
        %v4766 = vpop.f32.mrb[0].mxu0
        %v4767 = vadd.f32 %v4608, %v4766
        %v4768 = vpop.f32.mrb[0].mxu0
        %4769 = vmatprep.mubr.bf16.mxu0 0
        %4770 = vmatmul.mubr.bf16.gmra.mrb[0].mxu0 %v4598
        %v4771 = vpop.f32.mrb[0].mxu0
        %v4772 = vadd.f32 %v4608, %v4771
        %v4773 = vpop.f32.mrb[0].mxu0
        %v4774 = vpop.f32.mrb[0].mxu0
        %v4775 = vadd.f32 %v4608, %v4774
        %v4776 = vpop.f32.mrb[0].mxu0
        %4777 = vmatprep.mubr.bf16.mxu0 0
        %4778 = vmatmul.mubr.bf16.gmra.mrb[0].mxu0 %v4599
        %v4779 = vpop.f32.mrb[0].mxu0
        %v4780 = vadd.f32 %v4608, %v4779
        %v4781 = vpop.f32.mrb[0].mxu0
        %v4782 = vpop.f32.mrb[0].mxu0
        %v4783 = vadd.f32 %v4608, %v4782
        %v4784 = vpop.f32.mrb[0].mxu0
        %4785 = vmatprep.mubr.bf16.mxu0 0
        %4786 = vmatmul.mubr.bf16.gmra.mrb[0].mxu0 %v4600
        %v4787 = vpop.f32.mrb[0].mxu0
        %v4788 = vadd.f32 %v4608, %v4787
        %v4789 = vpop.f32.mrb[0].mxu0
        %v4790 = vpop.f32.mrb[0].mxu0
        %v4791 = vadd.f32 %v4608, %v4790
        %v4792 = vpop.f32.mrb[0].mxu0
        %4793 = vmatprep.mubr.bf16.mxu0 0
        %4794 = vmatmul.mubr.bf16.gmra.mrb[0].mxu0 %v4601
        %v4795 = vpop.f32.mrb[0].mxu0
        %v4796 = vadd.f32 %v4608, %v4795
        %v4797 = vpop.f32.mrb[0].mxu0
        %v4798 = vpop.f32.mrb[0].mxu0
        %v4799 = vadd.f32 %v4608, %v4798
        %v4800 = vpop.f32.mrb[0].mxu0
        %4801 = vmatprep.mubr.bf16.mxu0 0
        %4802 = vmatmul.mubr.bf16.gmra.mrb[0].mxu0 %v4602
        %v4803 = vpop.f32.mrb[0].mxu0
        %v4804 = vadd.f32 %v4608, %v4803
        %v4805 = vpop.f32.mrb[0].mxu0
        %v4806 = vpop.f32.mrb[0].mxu0
        %v4807 = vadd.f32 %v4608, %v4806
        %v4808 = vpop.f32.mrb[0].mxu0
        %4809 = vmatprep.mubr.bf16.mxu0 0
        %4810 = vmatmul.mubr.bf16.gmra.mrb[0].mxu0 %v4603
        %v4811 = vpop.f32.mrb[0].mxu0
        %v4812 = vadd.f32 %v4608, %v4811
        %v4813 = vpop.f32.mrb[0].mxu0
        %v4814 = vpop.f32.mrb[0].mxu0
        %v4815 = vadd.f32 %v4608, %v4814
        %v4816 = vpop.f32.mrb[0].mxu0
        %4817 = vdwg.mxu0
        %v4818 = vadd.f32 %v4692, %v4261
        %v4819 = vadd.f32 %v4695, %v4262
        %v4820 = vadd.f32 %v4700, %v4263
        %v4821 = vadd.f32 %v4703, %v4264
        %v4822 = vadd.f32 %v4708, %v4265
        %v4823 = vadd.f32 %v4711, %v4266
        %v4824 = vadd.f32 %v4716, %v4267
        %v4825 = vadd.f32 %v4719, %v4268
        %v4826 = vadd.f32 %v4724, %v4269
        %v4827 = vadd.f32 %v4727, %v4270
        %v4828 = vadd.f32 %v4732, %v4271
        %v4829 = vadd.f32 %v4735, %v4272
        %v4830 = vadd.f32 %v4740, %v4273
        %v4831 = vadd.f32 %v4743, %v4274
        %v4832 = vadd.f32 %v4748, %v4275
        %v4833 = vadd.f32 %v4751, %v4276
        %v4834 = vadd.f32 %v4756, %v4277
        %v4835 = vadd.f32 %v4759, %v4278
        %v4836 = vadd.f32 %v4764, %v4279
        %v4837 = vadd.f32 %v4767, %v4280
        %v4838 = vadd.f32 %v4772, %v4281
        %v4839 = vadd.f32 %v4775, %v4282
        %v4840 = vadd.f32 %v4780, %v4283
        %v4841 = vadd.f32 %v4783, %v4284
        %v4842 = vadd.f32 %v4788, %v4285
        %v4843 = vadd.f32 %v4791, %v4286
        %v4844 = vadd.f32 %v4796, %v4287
        %v4845 = vadd.f32 %v4799, %v4288
        %v4846 = vadd.f32 %v4804, %v4289
        %v4847 = vadd.f32 %v4807, %v4290
        %v4848 = vadd.f32 %v4812, %v4291
        %v4849 = vadd.f32 %v4815, %v4292
        %4850 = vadd.xlane.f32.xlu0 %v4818
        %v4851 = vpop.xlane.xlu0 %4850
        %4852 = vadd.xlane.f32.xlu0 %v4819
        %v4853 = vpop.xlane.xlu0 %4852
        %4854 = vadd.xlane.f32.xlu0 %v4820
        %v4855 = vpop.xlane.xlu0 %4854
        %4856 = vadd.xlane.f32.xlu0 %v4821
        %v4857 = vpop.xlane.xlu0 %4856
        %4858 = vadd.xlane.f32.xlu0 %v4822
        %v4859 = vpop.xlane.xlu0 %4858
        %4860 = vadd.xlane.f32.xlu0 %v4823
        %v4861 = vpop.xlane.xlu0 %4860
        %4862 = vadd.xlane.f32.xlu0 %v4824
        %v4863 = vpop.xlane.xlu0 %4862
        %4864 = vadd.xlane.f32.xlu0 %v4825
        %v4865 = vpop.xlane.xlu0 %4864
        %4866 = vadd.xlane.f32.xlu0 %v4826
        %v4867 = vpop.xlane.xlu0 %4866
        %4868 = vadd.xlane.f32.xlu0 %v4827
        %v4869 = vpop.xlane.xlu0 %4868
        %4870 = vadd.xlane.f32.xlu0 %v4828
        %v4871 = vpop.xlane.xlu0 %4870
        %4872 = vadd.xlane.f32.xlu0 %v4829
        %v4873 = vpop.xlane.xlu0 %4872
        %4874 = vadd.xlane.f32.xlu0 %v4830
        %v4875 = vpop.xlane.xlu0 %4874
        %4876 = vadd.xlane.f32.xlu0 %v4831
        %v4877 = vpop.xlane.xlu0 %4876
        %4878 = vadd.xlane.f32.xlu0 %v4832
        %v4879 = vpop.xlane.xlu0 %4878
        %4880 = vadd.xlane.f32.xlu0 %v4833
        %v4881 = vpop.xlane.xlu0 %4880
        %4882 = vadd.xlane.f32.xlu0 %v4834
        %v4883 = vpop.xlane.xlu0 %4882
        %4884 = vadd.xlane.f32.xlu0 %v4835
        %v4885 = vpop.xlane.xlu0 %4884
        %4886 = vadd.xlane.f32.xlu0 %v4836
        %v4887 = vpop.xlane.xlu0 %4886
        %4888 = vadd.xlane.f32.xlu0 %v4837
        %v4889 = vpop.xlane.xlu0 %4888
        %4890 = vadd.xlane.f32.xlu0 %v4838
        %v4891 = vpop.xlane.xlu0 %4890
        %4892 = vadd.xlane.f32.xlu0 %v4839
        %v4893 = vpop.xlane.xlu0 %4892
        %4894 = vadd.xlane.f32.xlu0 %v4840
        %v4895 = vpop.xlane.xlu0 %4894
        %4896 = vadd.xlane.f32.xlu0 %v4841
        %v4897 = vpop.xlane.xlu0 %4896
        %4898 = vadd.xlane.f32.xlu0 %v4842
        %v4899 = vpop.xlane.xlu0 %4898
        %4900 = vadd.xlane.f32.xlu0 %v4843
        %v4901 = vpop.xlane.xlu0 %4900
        %4902 = vadd.xlane.f32.xlu0 %v4844
        %v4903 = vpop.xlane.xlu0 %4902
        %4904 = vadd.xlane.f32.xlu0 %v4845
        %v4905 = vpop.xlane.xlu0 %4904
        %4906 = vadd.xlane.f32.xlu0 %v4846
        %v4907 = vpop.xlane.xlu0 %4906
        %4908 = vadd.xlane.f32.xlu0 %v4847
        %v4909 = vpop.xlane.xlu0 %4908
        %4910 = vadd.xlane.f32.xlu0 %v4848
        %v4911 = vpop.xlane.xlu0 %4910
        %4912 = vadd.xlane.f32.xlu0 %v4849
        %v4913 = vpop.xlane.xlu0 %4912
        %v4914 = vrcp.pop 128.0
        %v4915 = vmul.f32 %v4851, %v4914
        %v4916 = vmul.f32 %v4853, %v4914
        %v4917 = vmul.f32 %v4855, %v4914
        %v4918 = vmul.f32 %v4857, %v4914
        %v4919 = vmul.f32 %v4859, %v4914
        %v4920 = vmul.f32 %v4861, %v4914
        %v4921 = vmul.f32 %v4863, %v4914
        %v4922 = vmul.f32 %v4865, %v4914
        %v4923 = vmul.f32 %v4867, %v4914
        %v4924 = vmul.f32 %v4869, %v4914
        %v4925 = vmul.f32 %v4871, %v4914
        %v4926 = vmul.f32 %v4873, %v4914
        %v4927 = vmul.f32 %v4875, %v4914
        %v4928 = vmul.f32 %v4877, %v4914
        %v4929 = vmul.f32 %v4879, %v4914
        %v4930 = vmul.f32 %v4881, %v4914
        %v4931 = vmul.f32 %v4883, %v4914
        %v4932 = vmul.f32 %v4885, %v4914
        %v4933 = vmul.f32 %v4887, %v4914
        %v4934 = vmul.f32 %v4889, %v4914
        %v4935 = vmul.f32 %v4891, %v4914
        %v4936 = vmul.f32 %v4893, %v4914
        %v4937 = vmul.f32 %v4895, %v4914
        %v4938 = vmul.f32 %v4897, %v4914
        %v4939 = vmul.f32 %v4899, %v4914
        %v4940 = vmul.f32 %v4901, %v4914
        %v4941 = vmul.f32 %v4903, %v4914
        %v4942 = vmul.f32 %v4905, %v4914
        %v4943 = vmul.f32 %v4907, %v4914
        %v4944 = vmul.f32 %v4909, %v4914
        %v4945 = vmul.f32 %v4911, %v4914
        %v4946 = vmul.f32 %v4913, %v4914
        %v4947 = vsub.f32 %v4818, %v4915
        %v4948 = vsub.f32 %v4819, %v4916
        %v4949 = vsub.f32 %v4820, %v4917
        %v4950 = vsub.f32 %v4821, %v4918
        %v4951 = vsub.f32 %v4822, %v4919
        %v4952 = vsub.f32 %v4823, %v4920
        %v4953 = vsub.f32 %v4824, %v4921
        %v4954 = vsub.f32 %v4825, %v4922
        %v4955 = vsub.f32 %v4826, %v4923
        %v4956 = vsub.f32 %v4827, %v4924
        %v4957 = vsub.f32 %v4828, %v4925
        %v4958 = vsub.f32 %v4829, %v4926
        %v4959 = vsub.f32 %v4830, %v4927
        %v4960 = vsub.f32 %v4831, %v4928
        %v4961 = vsub.f32 %v4832, %v4929
        %v4962 = vsub.f32 %v4833, %v4930
        %v4963 = vsub.f32 %v4834, %v4931
        %v4964 = vsub.f32 %v4835, %v4932
        %v4965 = vsub.f32 %v4836, %v4933
        %v4966 = vsub.f32 %v4837, %v4934
        %v4967 = vsub.f32 %v4838, %v4935
        %v4968 = vsub.f32 %v4839, %v4936
        %v4969 = vsub.f32 %v4840, %v4937
        %v4970 = vsub.f32 %v4841, %v4938
        %v4971 = vsub.f32 %v4842, %v4939
        %v4972 = vsub.f32 %v4843, %v4940
        %v4973 = vsub.f32 %v4844, %v4941
        %v4974 = vsub.f32 %v4845, %v4942
        %v4975 = vsub.f32 %v4846, %v4943
        %v4976 = vsub.f32 %v4847, %v4944
        %v4977 = vsub.f32 %v4848, %v4945
        %v4978 = vsub.f32 %v4849, %v4946
        %v4979 = vmul.f32 %v4947, %v4947
        %v4980 = vmul.f32 %v4948, %v4948
        %v4981 = vmul.f32 %v4949, %v4949
        %v4982 = vmul.f32 %v4950, %v4950
        %v4983 = vmul.f32 %v4951, %v4951
        %v4984 = vmul.f32 %v4952, %v4952
        %v4985 = vmul.f32 %v4953, %v4953
        %v4986 = vmul.f32 %v4954, %v4954
        %v4987 = vmul.f32 %v4955, %v4955
        %v4988 = vmul.f32 %v4956, %v4956
        %v4989 = vmul.f32 %v4957, %v4957
        %v4990 = vmul.f32 %v4958, %v4958
        %v4991 = vmul.f32 %v4959, %v4959
        %v4992 = vmul.f32 %v4960, %v4960
        %v4993 = vmul.f32 %v4961, %v4961
        %v4994 = vmul.f32 %v4962, %v4962
        %v4995 = vmul.f32 %v4963, %v4963
        %v4996 = vmul.f32 %v4964, %v4964
        %v4997 = vmul.f32 %v4965, %v4965
        %v4998 = vmul.f32 %v4966, %v4966
        %v4999 = vmul.f32 %v4967, %v4967
        %v5000 = vmul.f32 %v4968, %v4968
        %v5001 = vmul.f32 %v4969, %v4969
        %v5002 = vmul.f32 %v4970, %v4970
        %v5003 = vmul.f32 %v4971, %v4971
        %v5004 = vmul.f32 %v4972, %v4972
        %v5005 = vmul.f32 %v4973, %v4973
        %v5006 = vmul.f32 %v4974, %v4974
        %v5007 = vmul.f32 %v4975, %v4975
        %v5008 = vmul.f32 %v4976, %v4976
        %v5009 = vmul.f32 %v4977, %v4977
        %v5010 = vmul.f32 %v4978, %v4978
        %5011 = vadd.xlane.f32.xlu0 %v4979
        %v5012 = vpop.xlane.xlu0 %5011
        %5013 = vadd.xlane.f32.xlu0 %v4980
        %v5014 = vpop.xlane.xlu0 %5013
        %5015 = vadd.xlane.f32.xlu0 %v4981
        %v5016 = vpop.xlane.xlu0 %5015
        %5017 = vadd.xlane.f32.xlu0 %v4982
        %v5018 = vpop.xlane.xlu0 %5017
        %5019 = vadd.xlane.f32.xlu0 %v4983
        %v5020 = vpop.xlane.xlu0 %5019
        %5021 = vadd.xlane.f32.xlu0 %v4984
        %v5022 = vpop.xlane.xlu0 %5021
        %5023 = vadd.xlane.f32.xlu0 %v4985
        %v5024 = vpop.xlane.xlu0 %5023
        %5025 = vadd.xlane.f32.xlu0 %v4986
        %v5026 = vpop.xlane.xlu0 %5025
        %5027 = vadd.xlane.f32.xlu0 %v4987
        %v5028 = vpop.xlane.xlu0 %5027
        %5029 = vadd.xlane.f32.xlu0 %v4988
        %v5030 = vpop.xlane.xlu0 %5029
        %5031 = vadd.xlane.f32.xlu0 %v4989
        %v5032 = vpop.xlane.xlu0 %5031
        %5033 = vadd.xlane.f32.xlu0 %v4990
        %v5034 = vpop.xlane.xlu0 %5033
        %5035 = vadd.xlane.f32.xlu0 %v4991
        %v5036 = vpop.xlane.xlu0 %5035
        %5037 = vadd.xlane.f32.xlu0 %v4992
        %v5038 = vpop.xlane.xlu0 %5037
        %5039 = vadd.xlane.f32.xlu0 %v4993
        %v5040 = vpop.xlane.xlu0 %5039
        %5041 = vadd.xlane.f32.xlu0 %v4994
        %v5042 = vpop.xlane.xlu0 %5041
        %5043 = vadd.xlane.f32.xlu0 %v4995
        %v5044 = vpop.xlane.xlu0 %5043
        %5045 = vadd.xlane.f32.xlu0 %v4996
        %v5046 = vpop.xlane.xlu0 %5045
        %5047 = vadd.xlane.f32.xlu0 %v4997
        %v5048 = vpop.xlane.xlu0 %5047
        %5049 = vadd.xlane.f32.xlu0 %v4998
        %v5050 = vpop.xlane.xlu0 %5049
        %5051 = vadd.xlane.f32.xlu0 %v4999
        %v5052 = vpop.xlane.xlu0 %5051
        %5053 = vadd.xlane.f32.xlu0 %v5000
        %v5054 = vpop.xlane.xlu0 %5053
        %5055 = vadd.xlane.f32.xlu0 %v5001
        %v5056 = vpop.xlane.xlu0 %5055
        %5057 = vadd.xlane.f32.xlu0 %v5002
        %v5058 = vpop.xlane.xlu0 %5057
        %5059 = vadd.xlane.f32.xlu0 %v5003
        %v5060 = vpop.xlane.xlu0 %5059
        %5061 = vadd.xlane.f32.xlu0 %v5004
        %v5062 = vpop.xlane.xlu0 %5061
        %5063 = vadd.xlane.f32.xlu0 %v5005
        %v5064 = vpop.xlane.xlu0 %5063
        %5065 = vadd.xlane.f32.xlu0 %v5006
        %v5066 = vpop.xlane.xlu0 %5065
        %5067 = vadd.xlane.f32.xlu0 %v5007
        %v5068 = vpop.xlane.xlu0 %5067
        %5069 = vadd.xlane.f32.xlu0 %v5008
        %v5070 = vpop.xlane.xlu0 %5069
        %5071 = vadd.xlane.f32.xlu0 %v5009
        %v5072 = vpop.xlane.xlu0 %5071
        %5073 = vadd.xlane.f32.xlu0 %v5010
        %v5074 = vpop.xlane.xlu0 %5073
        %v5075 = vmul.f32 %v5012, %v4914
        %v5076 = vmul.f32 %v5014, %v4914
        %v5077 = vmul.f32 %v5016, %v4914
        %v5078 = vmul.f32 %v5018, %v4914
        %v5079 = vmul.f32 %v5020, %v4914
        %v5080 = vmul.f32 %v5022, %v4914
        %v5081 = vmul.f32 %v5024, %v4914
        %v5082 = vmul.f32 %v5026, %v4914
        %v5083 = vmul.f32 %v5028, %v4914
        %v5084 = vmul.f32 %v5030, %v4914
        %v5085 = vmul.f32 %v5032, %v4914
        %v5086 = vmul.f32 %v5034, %v4914
        %v5087 = vmul.f32 %v5036, %v4914
        %v5088 = vmul.f32 %v5038, %v4914
        %v5089 = vmul.f32 %v5040, %v4914
        %v5090 = vmul.f32 %v5042, %v4914
        %v5091 = vmul.f32 %v5044, %v4914
        %v5092 = vmul.f32 %v5046, %v4914
        %v5093 = vmul.f32 %v5048, %v4914
        %v5094 = vmul.f32 %v5050, %v4914
        %v5095 = vmul.f32 %v5052, %v4914
        %v5096 = vmul.f32 %v5054, %v4914
        %v5097 = vmul.f32 %v5056, %v4914
        %v5098 = vmul.f32 %v5058, %v4914
        %v5099 = vmul.f32 %v5060, %v4914
        %v5100 = vmul.f32 %v5062, %v4914
        %v5101 = vmul.f32 %v5064, %v4914
        %v5102 = vmul.f32 %v5066, %v4914
        %v5103 = vmul.f32 %v5068, %v4914
        %v5104 = vmul.f32 %v5070, %v4914
        %v5105 = vmul.f32 %v5072, %v4914
        %v5106 = vmul.f32 %v5074, %v4914
        %v5107 = vadd.f32 %v5075, 1e-05
        %v5108 = vadd.f32 %v5076, 1e-05
        %v5109 = vadd.f32 %v5077, 1e-05
        %v5110 = vadd.f32 %v5078, 1e-05
        %v5111 = vadd.f32 %v5079, 1e-05
        %v5112 = vadd.f32 %v5080, 1e-05
        %v5113 = vadd.f32 %v5081, 1e-05
        %v5114 = vadd.f32 %v5082, 1e-05
        %v5115 = vadd.f32 %v5083, 1e-05
        %v5116 = vadd.f32 %v5084, 1e-05
        %v5117 = vadd.f32 %v5085, 1e-05
        %v5118 = vadd.f32 %v5086, 1e-05
        %v5119 = vadd.f32 %v5087, 1e-05
        %v5120 = vadd.f32 %v5088, 1e-05
        %v5121 = vadd.f32 %v5089, 1e-05
        %v5122 = vadd.f32 %v5090, 1e-05
        %v5123 = vadd.f32 %v5091, 1e-05
        %v5124 = vadd.f32 %v5092, 1e-05
        %v5125 = vadd.f32 %v5093, 1e-05
        %v5126 = vadd.f32 %v5094, 1e-05
        %v5127 = vadd.f32 %v5095, 1e-05
        %v5128 = vadd.f32 %v5096, 1e-05
        %v5129 = vadd.f32 %v5097, 1e-05
        %v5130 = vadd.f32 %v5098, 1e-05
        %v5131 = vadd.f32 %v5099, 1e-05
        %v5132 = vadd.f32 %v5100, 1e-05
        %v5133 = vadd.f32 %v5101, 1e-05
        %v5134 = vadd.f32 %v5102, 1e-05
        %v5135 = vadd.f32 %v5103, 1e-05
        %v5136 = vadd.f32 %v5104, 1e-05
        %v5137 = vadd.f32 %v5105, 1e-05
        %v5138 = vadd.f32 %v5106, 1e-05
        %v5139 = vrsqrt.pop %v5107
        %v5140 = vrsqrt.pop %v5108
        %v5141 = vrsqrt.pop %v5109
        %v5142 = vrsqrt.pop %v5110
        %v5143 = vrsqrt.pop %v5111
        %v5144 = vrsqrt.pop %v5112
        %v5145 = vrsqrt.pop %v5113
        %v5146 = vrsqrt.pop %v5114
        %v5147 = vrsqrt.pop %v5115
        %v5148 = vrsqrt.pop %v5116
        %v5149 = vrsqrt.pop %v5117
        %v5150 = vrsqrt.pop %v5118
        %v5151 = vrsqrt.pop %v5119
        %v5152 = vrsqrt.pop %v5120
        %v5153 = vrsqrt.pop %v5121
        %v5154 = vrsqrt.pop %v5122
        %v5155 = vrsqrt.pop %v5123
        %v5156 = vrsqrt.pop %v5124
        %v5157 = vrsqrt.pop %v5125
        %v5158 = vrsqrt.pop %v5126
        %v5159 = vrsqrt.pop %v5127
        %v5160 = vrsqrt.pop %v5128
        %v5161 = vrsqrt.pop %v5129
        %v5162 = vrsqrt.pop %v5130
        %v5163 = vrsqrt.pop %v5131
        %v5164 = vrsqrt.pop %v5132
        %v5165 = vrsqrt.pop %v5133
        %v5166 = vrsqrt.pop %v5134
        %v5167 = vrsqrt.pop %v5135
        %v5168 = vrsqrt.pop %v5136
        %v5169 = vrsqrt.pop %v5137
        %v5170 = vrsqrt.pop %v5138
        %v5171 = vmul.f32 %v4947, %v5139
        %v5172 = vmul.f32 %v4948, %v5140
        %v5173 = vmul.f32 %v4949, %v5141
        %v5174 = vmul.f32 %v4950, %v5142
        %v5175 = vmul.f32 %v4951, %v5143
        %v5176 = vmul.f32 %v4952, %v5144
        %v5177 = vmul.f32 %v4953, %v5145
        %v5178 = vmul.f32 %v4954, %v5146
        %v5179 = vmul.f32 %v4955, %v5147
        %v5180 = vmul.f32 %v4956, %v5148
        %v5181 = vmul.f32 %v4957, %v5149
        %v5182 = vmul.f32 %v4958, %v5150
        %v5183 = vmul.f32 %v4959, %v5151
        %v5184 = vmul.f32 %v4960, %v5152
        %v5185 = vmul.f32 %v4961, %v5153
        %v5186 = vmul.f32 %v4962, %v5154
        %v5187 = vmul.f32 %v4963, %v5155
        %v5188 = vmul.f32 %v4964, %v5156
        %v5189 = vmul.f32 %v4965, %v5157
        %v5190 = vmul.f32 %v4966, %v5158
        %v5191 = vmul.f32 %v4967, %v5159
        %v5192 = vmul.f32 %v4968, %v5160
        %v5193 = vmul.f32 %v4969, %v5161
        %v5194 = vmul.f32 %v4970, %v5162
        %v5195 = vmul.f32 %v4971, %v5163
        %v5196 = vmul.f32 %v4972, %v5164
        %v5197 = vmul.f32 %v4973, %v5165
        %v5198 = vmul.f32 %v4974, %v5166
        %v5199 = vmul.f32 %v4975, %v5167
        %v5200 = vmul.f32 %v4976, %v5168
        %v5201 = vmul.f32 %v4977, %v5169
        %v5202 = vmul.f32 %v4978, %v5170
        %v5203 = vld [vmem:[%s8] sm:$0x1]
        %v5204 = vlaneseq
        %v5205 = vshrl.u32 %v5204, 7
        %v5206 = vsub.s32 0, %v5205
        %v5207 = vrot.slane %v5203, %v5206
        %v5208 = vmul.f32 %v5171, %v5207
        %v5209 = vmul.f32 %v5172, %v5207
        %v5210 = vmul.f32 %v5173, %v5207
        %v5211 = vmul.f32 %v5174, %v5207
        %v5212 = vmul.f32 %v5175, %v5207
        %v5213 = vmul.f32 %v5176, %v5207
        %v5214 = vmul.f32 %v5177, %v5207
        %v5215 = vmul.f32 %v5178, %v5207
        %v5216 = vmul.f32 %v5179, %v5207
        %v5217 = vmul.f32 %v5180, %v5207
        %v5218 = vmul.f32 %v5181, %v5207
        %v5219 = vmul.f32 %v5182, %v5207
        %v5220 = vmul.f32 %v5183, %v5207
        %v5221 = vmul.f32 %v5184, %v5207
        %v5222 = vmul.f32 %v5185, %v5207
        %v5223 = vmul.f32 %v5186, %v5207
        %v5224 = vmul.f32 %v5187, %v5207
        %v5225 = vmul.f32 %v5188, %v5207
        %v5226 = vmul.f32 %v5189, %v5207
        %v5227 = vmul.f32 %v5190, %v5207
        %v5228 = vmul.f32 %v5191, %v5207
        %v5229 = vmul.f32 %v5192, %v5207
        %v5230 = vmul.f32 %v5193, %v5207
        %v5231 = vmul.f32 %v5194, %v5207
        %v5232 = vmul.f32 %v5195, %v5207
        %v5233 = vmul.f32 %v5196, %v5207
        %v5234 = vmul.f32 %v5197, %v5207
        %v5235 = vmul.f32 %v5198, %v5207
        %v5236 = vmul.f32 %v5199, %v5207
        %v5237 = vmul.f32 %v5200, %v5207
        %v5238 = vmul.f32 %v5201, %v5207
        %v5239 = vmul.f32 %v5202, %v5207
        %v5240 = vld [vmem:[%s8 + $0x1] sm:$0x1]
        %v5241 = vlaneseq
        %v5242 = vshrl.u32 %v5241, 7
        %v5243 = vsub.s32 0, %v5242
        %v5244 = vrot.slane %v5240, %v5243
        %v5245 = vadd.f32 %v5208, %v5244
        %v5246 = vadd.f32 %v5209, %v5244
        %v5247 = vadd.f32 %v5210, %v5244
        %v5248 = vadd.f32 %v5211, %v5244
        %v5249 = vadd.f32 %v5212, %v5244
        %v5250 = vadd.f32 %v5213, %v5244
        %v5251 = vadd.f32 %v5214, %v5244
        %v5252 = vadd.f32 %v5215, %v5244
        %v5253 = vadd.f32 %v5216, %v5244
        %v5254 = vadd.f32 %v5217, %v5244
        %v5255 = vadd.f32 %v5218, %v5244
        %v5256 = vadd.f32 %v5219, %v5244
        %v5257 = vadd.f32 %v5220, %v5244
        %v5258 = vadd.f32 %v5221, %v5244
        %v5259 = vadd.f32 %v5222, %v5244
        %v5260 = vadd.f32 %v5223, %v5244
        %v5261 = vadd.f32 %v5224, %v5244
        %v5262 = vadd.f32 %v5225, %v5244
        %v5263 = vadd.f32 %v5226, %v5244
        %v5264 = vadd.f32 %v5227, %v5244
        %v5265 = vadd.f32 %v5228, %v5244
        %v5266 = vadd.f32 %v5229, %v5244
        %v5267 = vadd.f32 %v5230, %v5244
        %v5268 = vadd.f32 %v5231, %v5244
        %v5269 = vadd.f32 %v5232, %v5244
        %v5270 = vadd.f32 %v5233, %v5244
        %v5271 = vadd.f32 %v5234, %v5244
        %v5272 = vadd.f32 %v5235, %v5244
        %v5273 = vadd.f32 %v5236, %v5244
        %v5274 = vadd.f32 %v5237, %v5244
        %v5275 = vadd.f32 %v5238, %v5244
        %v5276 = vadd.f32 %v5239, %v5244
        %5277 = vst [vmem:[%s448] sm:$0xff] %v5245
        %5278 = vst [vmem:[%s448 + $0x8] sm:$0xff] %v5246
        %5279 = vst [vmem:[%s448 + $0x10] sm:$0xff] %v5247
        %5280 = vst [vmem:[%s448 + $0x18] sm:$0xff] %v5248
        %5281 = vst [vmem:[%s448 + $0x20] sm:$0xff] %v5249
        %5282 = vst [vmem:[%s448 + $0x28] sm:$0xff] %v5250
        %5283 = vst [vmem:[%s448 + $0x30] sm:$0xff] %v5251
        %5284 = vst [vmem:[%s448 + $0x38] sm:$0xff] %v5252
        %5285 = vst [vmem:[%s448 + $0x40] sm:$0xff] %v5253
        %5286 = vst [vmem:[%s448 + $0x48] sm:$0xff] %v5254
        %5287 = vst [vmem:[%s448 + $0x50] sm:$0xff] %v5255
        %5288 = vst [vmem:[%s448 + $0x58] sm:$0xff] %v5256
        %5289 = vst [vmem:[%s448 + $0x60] sm:$0xff] %v5257
        %5290 = vst [vmem:[%s448 + $0x68] sm:$0xff] %v5258
        %5291 = vst [vmem:[%s448 + $0x70] sm:$0xff] %v5259
        %5292 = vst [vmem:[%s448 + $0x78] sm:$0xff] %v5260
        %5293 = vst [vmem:[%s448 + $0x80] sm:$0xff] %v5261
        %5294 = vst [vmem:[%s448 + $0x88] sm:$0xff] %v5262
        %5295 = vst [vmem:[%s448 + $0x90] sm:$0xff] %v5263
        %5296 = vst [vmem:[%s448 + $0x98] sm:$0xff] %v5264
        %5297 = vst [vmem:[%s448 + $0xa0] sm:$0xff] %v5265
        %5298 = vst [vmem:[%s448 + $0xa8] sm:$0xff] %v5266
        %5299 = vst [vmem:[%s448 + $0xb0] sm:$0xff] %v5267
        %5300 = vst [vmem:[%s448 + $0xb8] sm:$0xff] %v5268
        %5301 = vst [vmem:[%s448 + $0xc0] sm:$0xff] %v5269
        %5302 = vst [vmem:[%s448 + $0xc8] sm:$0xff] %v5270
        %5303 = vst [vmem:[%s448 + $0xd0] sm:$0xff] %v5271
        %5304 = vst [vmem:[%s448 + $0xd8] sm:$0xff] %v5272
        %5305 = vst [vmem:[%s448 + $0xe0] sm:$0xff] %v5273
        %5306 = vst [vmem:[%s448 + $0xe8] sm:$0xff] %v5274
        %5307 = vst [vmem:[%s448 + $0xf0] sm:$0xff] %v5275
        %5308 = vst [vmem:[%s448 + $0xf8] sm:$0xff] %v5276
        %s5309 = sand.u32 %s238, 1
        %s5310 = scalar_lea.sflag [#allocation4], %s5309
        %s5311 = sand.u32 %s238, 1
        %s5312 = smul.addr %s5311, 256
        %s5313 = scalar_lea.vmem [#allocation13], %s5312
        // Predicated region
        $region81: #{tpu_custom_call.1} parent=55 // pred_check
          %p5314 = pneg %p248
        $region82: #{tpu_custom_call.1} parent=55 // pred_check_branch
          %5316 = sbr.rel (%p5314) target = $region84
        $region83: #{tpu_custom_call.1} parent=55 // pred_region
          %s5318 = ssub.s32 4096, 4096
          %5319 = vsyncadd %s5310, %s5318
          %s5320 = smul.addr %s31, 32
          %s5321 = smul.addr %s5320, 128
          %s5322 = scalar_lea.hbm %s9, %s5321
          %s5323 = sshll.u32 %s5313, 4
          %s5324 = int_to_ptr.vmem [resolvable:$true] %s5323
          %5329 = dma.vmem_to_hbm [thread:$0]  %s5324, 4096, %s5322, %s5310, 128, 128, 8
        $region84: #{tpu_custom_call.1} parent=55 // pred_fallthru
          _
      $region56: #{tpu_custom_call.1} parent=5 // pred_fallthru
        _
      %p5330 = scmp.le.s32.totalorder 2, %s26
      // Predicated region
      $region85: #{tpu_custom_call.1} parent=5 // pred_check
        %p5331 = pneg %p5330
      $region86: #{tpu_custom_call.1} parent=5 // pred_check_branch
        %5333 = sbr.rel (%p5331) target = $region88
      $region87: #{tpu_custom_call.1} parent=5 // pred_region
        %s5334 = ssub.s32 %s26, 2
        // Predicated region
        $region89: #{tpu_custom_call.1} parent=87 // pred_check
          %p5335 = pneg %p254
        $region90: #{tpu_custom_call.1} parent=87 // pred_check_branch
          %5337 = sbr.rel (%p5335) target = $region92
        $region91: #{tpu_custom_call.1} parent=87 // pred_region
          %s5338 = sand.u32 %s239, 1
          %s5339 = scalar_lea.sflag [#allocation4], %s5338
          %s5340 = sand.u32 %s239, 1
          %s5341 = smul.addr %s5340, 256
          %s5342 = scalar_lea.vmem [#allocation13], %s5341
          %5343 = dma.done %s5339, 4096
        $region92: #{tpu_custom_call.1} parent=87 // pred_fallthru
          _
      $region88: #{tpu_custom_call.1} parent=5 // pred_fallthru
        _
    $region6: #{tpu_custom_call.1} parent=1 // loop_footer
      %s30 = sadd.s32 1, %s26
    $region7: #{tpu_custom_call.1} parent=1 // loop_footer_branch
      %25 = sbr.rel target = $region3
    $region8: #{tpu_custom_call.1} parent=1 // loop_exit
      _
    %5344 = vsyncpa [#allocation3], 1
    %s5345 = scalar_lea.sflag [#allocation3], 1
    %5346 = vsyncpa %s5345, 1
    %5347 = vsyncpa [#allocation6], 1
    %s5348 = scalar_lea.sflag [#allocation6], 1
    %5349 = vsyncpa %s5348, 1
    %5350 = vsyncpa [#allocation9], 1
    %5351 = vsyncpa [#allocation12], 1
    %5352 = vsyncpa [#allocation4], 1
    %s5353 = scalar_lea.sflag [#allocation4], 1
    %5354 = vsyncpa %s5353, 1

</llo_original>
